<compile_context>
chip_gen: v7x
topology: tpu7x:2x2x1
jax: 0.10.0
libtpu: 0.0.40
codegen_flags: <defaults>
</compile_context>

<pallas_src>
import functools
import math

import jax
import jax.numpy as jnp
from jax.experimental import pallas as pl
from jax.experimental.pallas import tpu as pltpu

# ----------------------------------------------------------------------------
# Module-level globals of the reference implementation (dt, tau_*, vthr are not
# defined inside the PyTorch module; chosen here as typical LIF constants, with
# vthr small enough that the toy network actually spikes).
# TODO(synk): these constants are guesses for undefined globals in mante/model.py.
# ----------------------------------------------------------------------------
DT = 1.0
TAU_M = 10.0
TAU_D = 30.0
TAU_R = 2.0
VTHR = 0.2
TREF = 2.0          # module default tref=2

LM = math.exp(-DT / TAU_M)   # membrane leak
LD = math.exp(-DT / TAU_D)   # synaptic decay (double filter, slow)
LR = math.exp(-DT / TAU_R)   # synaptic rise  (double filter, fast)

TT = 16                      # time steps per grid iteration (amortizes ~0.35us/step)


def _round_up(x, m):
    return (x + m - 1) // m * m


def _vmem_limit_bytes(tt, bt, inp, hp, pp, outp):
    """Explicit VMEM budget: double-buffered stream blocks + resident weights + state."""
    f32 = 4
    stream = 2 * tt * bt * (inp + outp) * f32                 # x block + rout block, x2 buffers
    weights = 2 * (inp * hp + 2 * pp * hp + hp * outp) * f32  # resident tiles (counted x2)
    state = 5 * bt * hp * f32                                 # mem/s/r/h/tlast scratch
    need = stream + weights + state
    # 2x headroom for compiler temporaries; <=48 MiB keeps the same sizing valid on
    # v7x's 64 MiB VMEM while being far below v5e/v6e's 128 MiB.
    return int(min(max(2 * need, 8 * 1024 * 1024), 48 * 1024 * 1024))


# ----------------------------------------------------------------------------
# Pallas kernel: one grid step == TT RNN time steps for one batch tile.
# ----------------------------------------------------------------------------
def _mdl_rnn_kernel(x_ref, winT_ref, uT_ref, v_ref, woutT_ref, rout_ref, state_ref,
                    *, lm, ld, lr, dt, tref, vthr, tt):
    tb = pl.program_id(1)                 # time-block index (innermost, sequential)

    @pl.when(tb == 0)                     # new batch tile -> reset LIF state
    def _init():
        z = jnp.zeros(state_ref.shape[1:], jnp.float32)
        state_ref[0] = z                  # mem
        state_ref[1] = z                  # s
        state_ref[2] = z                  # r
        state_ref[3] = z                  # h
        state_ref[4] = z - 1.0            # tlast = -1

    # Resident weight tiles (a few hundred KiB total; fetched once, index_map const).
    winT = winT_ref[...]                  # (INp, Hp)   Win.T
    uT = uT_ref[...]                      # (Pp, Hp)    (l*pin).T
    v = v_ref[...]                        # (Hp, Pp)    pout
    woutT = woutT_ref[...]                # (Hp, OUTp)  Wout.T

    # LIF state stays in vregs for all TT inner steps; persisted in VMEM scratch
    # across time blocks.
    # TODO(synk): for very large Bt*Hp (> ~8*1024 elems) pass batch_tile to the
    # wrapper to keep the live state under the 64-vreg file (avoids spills).
    mem = state_ref[0]
    s = state_ref[1]
    r = state_ref[2]
    h = state_ref[3]
    tlast = state_ref[4]

    t0 = (tb * tt).astype(jnp.float32)

    # Fully unrolled TT-step loop: static indices -> zero-cost ref views; the MXU
    # matmuls of step k overlap the VPU LIF update of step k-1.
    for k in range(tt):
        ti = dt * (t0 + float(k))

        # Fused input projection + rank-P recurrent current (Wr never materialized):
        #   I = x @ Win.T + (r @ pout) @ (l*pin).T
        i_in = jax.lax.dot_general(x_ref[k], winT, (((1,), (0,)), ((), ())),
                                   preferred_element_type=jnp.float32)      # (Bt, Hp)
        rv = jax.lax.dot_general(r, v, (((1,), (0,)), ((), ())),
                                 preferred_element_type=jnp.float32)        # (Bt, Pp)
        I = i_in + jax.lax.dot_general(rv, uT, (((1,), (0,)), ((), ())),
                                       preferred_element_type=jnp.float32)  # (Bt, Hp)

        # mem = (dt*i > tlast+tref) * (lm*mem + (1-lm)*I) * (1-s); since s is exactly
        # 0/1 the refractory gate and the (1-s) mask collapse into one select.
        active = jnp.logical_and(ti > tlast + tref, s == 0.0)
        mem = jnp.where(active, lm * mem + (1.0 - lm) * I, 0.0)

        # double synaptic filter (uses the OLD spike variable s)
        h = lr * h + s
        r = ld * r + (1.0 - ld) * h

        # spike_grad forward pass is a Heaviside step on (mem - vthr).
        # TODO(synk): the surrogate gradient of spike_grad only affects backward.
        spiked = mem > vthr
        s = jnp.where(spiked, 1.0, 0.0)
        tlast = jnp.where(spiked, ti, tlast)     # tlast + (dt*i - tlast)*s with s in {0,1}

        # Fused output projection: lane-dense (Bt, OUTp) store.
        rout_ref[k] = jax.lax.dot_general(r, woutT, (((1,), (0,)), ((), ())),
                                          preferred_element_type=jnp.float32)

    # Persist state for the next time block.
    state_ref[0] = mem
    state_ref[1] = s
    state_ref[2] = r
    state_ref[3] = h
    state_ref[4] = tlast


def mdl_rnn_mate_forward(inputs, Win, pin, pout, l, Wout, *, tt=TT, batch_tile=None):
    """Forward pass equivalent to MDL_RNN_mate.forward (mdl=1, filter='double', replace=0).

    inputs: (T, B, input_dim, 1) float32
    returns: (T, B, output_dim, 1) float32
    """
    x = inputs[..., 0].astype(jnp.float32)                 # (T, B, IN)
    T, B, IN = x.shape
    H = Win.shape[0]
    OUT = Wout.shape[0]
    P = pin.shape[1]

    tt = max(1, min(int(tt), T))

    # TPU-friendly padding: B -> x8 (sublanes), H/IN/P/OUT -> x128 (lanes), T -> x tt.
    Bp = _round_up(B, 8)
    Hp = _round_up(H, 128)
    INp = _round_up(IN, 128)
    Pp = _round_up(P, 128)
    OUTp = _round_up(OUT, 128)
    Tp = _round_up(T, tt)

    # Batch tile (for megacore sharding / vreg pressure at large B*H). Default: whole batch.
    Bt = Bp if batch_tile is None else _round_up(min(int(batch_tile), Bp), 8)
    if Bp % Bt:
        Bt = Bp

    Winf = Win.astype(jnp.float32)
    Woutf = Wout.astype(jnp.float32)
    U = l.astype(jnp.float32) * pin.astype(jnp.float32)    # (H, P) = l * pin
    V = pout.astype(jnp.float32)                           # (H, P)

    # Zero-padded operands.  Padded hidden units have zero rows in Win.T / (l*pin).T,
    # hence zero input current -> they never spike; their Wout.T rows are zero anyway.
    x_p = jnp.zeros((Tp, Bp, INp), jnp.float32).at[:T, :B, :IN].set(x)
    winT_p = jnp.zeros((INp, Hp), jnp.float32).at[:IN, :H].set(Winf.T)
    uT_p = jnp.zeros((Pp, Hp), jnp.float32).at[:P, :H].set(U.T)
    v_p = jnp.zeros((Hp, Pp), jnp.float32).at[:H, :P].set(V)
    woutT_p = jnp.zeros((Hp, OUTp), jnp.float32).at[:H, :OUT].set(Woutf.T)

    kernel = functools.partial(_mdl_rnn_kernel,
                               lm=LM, ld=LD, lr=LR,
                               dt=DT, tref=TREF, vthr=VTHR, tt=tt)

    rout_p = pl.pallas_call(
        kernel,
        out_shape=jax.ShapeDtypeStruct((Tp, Bp, OUTp), jnp.float32),
        grid_spec=pltpu.PrefetchScalarGridSpec(
            num_scalar_prefetch=0,
            grid=(Bp // Bt, Tp // tt),              # (batch tiles, time blocks)
            in_specs=[
                pl.BlockSpec((tt, Bt, INp), lambda b, t: (t, b, 0)),   # raw inputs (streamed)
                pl.BlockSpec((INp, Hp), lambda b, t: (0, 0)),          # Win.T      (resident)
                pl.BlockSpec((Pp, Hp), lambda b, t: (0, 0)),           # (l*pin).T  (resident)
                pl.BlockSpec((Hp, Pp), lambda b, t: (0, 0)),           # pout       (resident)
                pl.BlockSpec((Hp, OUTp), lambda b, t: (0, 0)),         # Wout.T     (resident)
            ],
            out_specs=pl.BlockSpec((tt, Bt, OUTp), lambda b, t: (t, b, 0)),  # rout (streamed)
            scratch_shapes=[pltpu.VMEM((5, Bt, Hp), jnp.float32)],     # mem,s,r,h,tlast
        ),
        compiler_params=pltpu.CompilerParams(
            # Batch tiles are independent -> parallel (megacore on v7x); the time
            # recurrence is inherently sequential -> arbitrary.
            dimension_semantics=("parallel", "arbitrary"),
            vmem_limit_bytes=_vmem_limit_bytes(tt, Bt, INp, Hp, Pp, OUTp),
        ),
    )(x_p, winT_p, uT_p, v_p, woutT_p)

    rout = rout_p[:T, :B, :OUT]                            # strip padding
    return rout[..., None]                                 # (T, B, OUT, 1)


# ----------------------------------------------------------------------------
# Pure-JAX reference (mirrors the PyTorch loop exactly) for validation.
# ----------------------------------------------------------------------------
def reference_forward(inputs, Win, Wr, Wout):
    T, B, IN, _ = inputs.shape
    H = Win.shape[0]

    def mm_nt(a, b):
        return jax.lax.dot_general(a, b, (((1,), (1,)), ((), ())),
                                   preferred_element_type=jnp.float32,
                                   precision=jax.lax.Precision.HIGHEST)

    mem = jnp.zeros((B, H), jnp.float32)
    s = jnp.zeros((B, H), jnp.float32)
    r = jnp.zeros((B, H), jnp.float32)
    h = jnp.zeros((B, H), jnp.float32)
    tlast = jnp.full((B, H), -1.0, jnp.float32)
    outs = []
    for i in range(T):
        xi = inputs[i, :, :, 0]
        I = mm_nt(xi, Win) + mm_nt(r, Wr)
        mem = (DT * i > tlast + TREF).astype(jnp.float32) * (LM * mem + (1.0 - LM) * I) * (1.0 - s)
        h = LR * h + s
        r = LD * r + (1.0 - LD) * h
        s = (mem - VTHR > 0.0).astype(jnp.float32)
        tlast = tlast + (DT * i - tlast) * s
        outs.append(mm_nt(r, Wout))
    return jnp.stack(outs, 0)[..., None]


if __name__ == "__main__":
    import numpy as np

    T, B, IN, H, OUT, P = 8, 2, 4, 32, 3, 4

    key = jax.random.PRNGKey(0)
    k = jax.random.split(key, 6)
    # Deterministic init following MDL_RNN_mate.initialize() scales.
    Win = jax.random.normal(k[0], (H, IN), jnp.float32) * (1.0 / np.sqrt(IN))
    Wout = jax.random.normal(k[1], (OUT, H), jnp.float32) * (1.0 / np.sqrt(H))
    pin = jax.random.normal(k[2], (H, P), jnp.float32) * (1.0 / np.sqrt(P))
    pout = jax.random.normal(k[3], (H, P), jnp.float32) * (1.0 / np.sqrt(P))
    l = jax.random.normal(k[4], (P,), jnp.float32) * (np.sqrt(P) / np.sqrt(H))
    inputs = jax.random.normal(k[5], (T, B, IN, 1), jnp.float32)

    rout = mdl_rnn_mate_forward(inputs, Win, pin, pout, l, Wout)
    rout = jax.block_until_ready(rout)

    Wr = jnp.matmul(l * pin, pout.T)
    ref = reference_forward(inputs, Win, Wr, Wout)
    np.testing.assert_allclose(np.asarray(rout), np.asarray(ref), rtol=1e-3, atol=1e-3)

    print("KERNEL_OK")
</pallas_src>

<mosaic_0001>
module attributes {stable_mosaic.version = 11 : i64} {
  func.func @_mdl_rnn_kernel(%arg0: i32, %arg1: i32, %arg2: memref<8x8x128xf32, #tpu.memory_space<vmem>>, %arg3: memref<128x128xf32, #tpu.memory_space<vmem>>, %arg4: memref<128x128xf32, #tpu.memory_space<vmem>>, %arg5: memref<128x128xf32, #tpu.memory_space<vmem>>, %arg6: memref<128x128xf32, #tpu.memory_space<vmem>>, %arg7: memref<8x8x128xf32, #tpu.memory_space<vmem>>, %arg8: memref<5x8x128xf32, #tpu.memory_space<vmem>>) attributes {dimension_semantics = [#tpu.dimension_semantics<parallel>, #tpu.dimension_semantics<arbitrary>], iteration_bounds = array<i64: 1, 1>, scalar_prefetch = 0 : i64, scratch_operands = 1 : i64, tpu.core_type = #tpu.core_type<tc>, window_params = [{transform_indices = @transform_0, window_bounds = array<i64: 8, 8, 128>}, {pipeline_mode = #tpu.pipeline_mode<synchronous>, transform_indices = @transform_1, window_bounds = array<i64: 128, 128>}, {pipeline_mode = #tpu.pipeline_mode<synchronous>, transform_indices = @transform_2, window_bounds = array<i64: 128, 128>}, {pipeline_mode = #tpu.pipeline_mode<synchronous>, transform_indices = @transform_3, window_bounds = array<i64: 128, 128>}, {pipeline_mode = #tpu.pipeline_mode<synchronous>, transform_indices = @transform_4, window_bounds = array<i64: 128, 128>}, {transform_indices = @transform_5, window_bounds = array<i64: 8, 8, 128>}]} {
    %c0_i32 = arith.constant 0 : i32
    %0 = arith.cmpi eq, %arg1, %c0_i32 : i32
    %1 = arith.extui %0 : i1 to i32
    %c0_i32_0 = arith.constant 0 : i32
    %2 = arith.cmpi ne, %1, %c0_i32_0 : i32
    scf.if %2 {
      %cst_214 = arith.constant 0.000000e+00 : f32
      %362 = vector.broadcast %cst_214 : f32 to vector<8x128xf32>
      %c0_215 = arith.constant 0 : index
      %c0_216 = arith.constant 0 : index
      %c0_217 = arith.constant 0 : index
      %363 = vector.load %arg8[%c0_215, %c0_216, %c0_217] : memref<5x8x128xf32, #tpu.memory_space<vmem>>, vector<1x8x128xf32>
      %364 = vector.shape_cast %363 : vector<1x8x128xf32> to vector<8x128xf32>
      %365 = vector.shape_cast %362 : vector<8x128xf32> to vector<1x8x128xf32>
      tpu.vector_store %arg8[%c0_215, %c0_216, %c0_217], %365 {strides = array<i32>} : memref<5x8x128xf32, #tpu.memory_space<vmem>>, vector<1x8x128xf32>,
      %c1_218 = arith.constant 1 : index
      %c0_219 = arith.constant 0 : index
      %c0_220 = arith.constant 0 : index
      %366 = vector.load %arg8[%c1_218, %c0_219, %c0_220] : memref<5x8x128xf32, #tpu.memory_space<vmem>>, vector<1x8x128xf32>
      %367 = vector.shape_cast %366 : vector<1x8x128xf32> to vector<8x128xf32>
      %368 = vector.shape_cast %362 : vector<8x128xf32> to vector<1x8x128xf32>
      tpu.vector_store %arg8[%c1_218, %c0_219, %c0_220], %368 {strides = array<i32>} : memref<5x8x128xf32, #tpu.memory_space<vmem>>, vector<1x8x128xf32>,
      %c2_221 = arith.constant 2 : index
      %c0_222 = arith.constant 0 : index
      %c0_223 = arith.constant 0 : index
      %369 = vector.load %arg8[%c2_221, %c0_222, %c0_223] : memref<5x8x128xf32, #tpu.memory_space<vmem>>, vector<1x8x128xf32>
      %370 = vector.shape_cast %369 : vector<1x8x128xf32> to vector<8x128xf32>
      %371 = vector.shape_cast %362 : vector<8x128xf32> to vector<1x8x128xf32>
      tpu.vector_store %arg8[%c2_221, %c0_222, %c0_223], %371 {strides = array<i32>} : memref<5x8x128xf32, #tpu.memory_space<vmem>>, vector<1x8x128xf32>,
      %c3_224 = arith.constant 3 : index
      %c0_225 = arith.constant 0 : index
      %c0_226 = arith.constant 0 : index
      %372 = vector.load %arg8[%c3_224, %c0_225, %c0_226] : memref<5x8x128xf32, #tpu.memory_space<vmem>>, vector<1x8x128xf32>
      %373 = vector.shape_cast %372 : vector<1x8x128xf32> to vector<8x128xf32>
      %374 = vector.shape_cast %362 : vector<8x128xf32> to vector<1x8x128xf32>
      tpu.vector_store %arg8[%c3_224, %c0_225, %c0_226], %374 {strides = array<i32>} : memref<5x8x128xf32, #tpu.memory_space<vmem>>, vector<1x8x128xf32>,
      %cst_227 = arith.constant 1.000000e+00 : f32
      %375 = vector.broadcast %cst_227 : f32 to vector<8x128xf32>
      %376 = arith.subf %362, %375 : vector<8x128xf32>
      %c4_228 = arith.constant 4 : index
      %c0_229 = arith.constant 0 : index
      %c0_230 = arith.constant 0 : index
      %377 = vector.load %arg8[%c4_228, %c0_229, %c0_230] : memref<5x8x128xf32, #tpu.memory_space<vmem>>, vector<1x8x128xf32>
      %378 = vector.shape_cast %377 : vector<1x8x128xf32> to vector<8x128xf32>
      %379 = vector.shape_cast %376 : vector<8x128xf32> to vector<1x8x128xf32>
      tpu.vector_store %arg8[%c4_228, %c0_229, %c0_230], %379 {strides = array<i32>} : memref<5x8x128xf32, #tpu.memory_space<vmem>>, vector<1x8x128xf32>,
    } else {
    }
    %c0 = arith.constant 0 : index
    %c0_1 = arith.constant 0 : index
    %3 = vector.load %arg3[%c0, %c0_1] : memref<128x128xf32, #tpu.memory_space<vmem>>, vector<128x128xf32>
    %c0_2 = arith.constant 0 : index
    %c0_3 = arith.constant 0 : index
    %4 = vector.load %arg4[%c0_2, %c0_3] : memref<128x128xf32, #tpu.memory_space<vmem>>, vector<128x128xf32>
    %c0_4 = arith.constant 0 : index
    %c0_5 = arith.constant 0 : index
    %5 = vector.load %arg5[%c0_4, %c0_5] : memref<128x128xf32, #tpu.memory_space<vmem>>, vector<128x128xf32>
    %c0_6 = arith.constant 0 : index
    %c0_7 = arith.constant 0 : index
    %6 = vector.load %arg6[%c0_6, %c0_7] : memref<128x128xf32, #tpu.memory_space<vmem>>, vector<128x128xf32>
    %c0_8 = arith.constant 0 : index
    %c0_9 = arith.constant 0 : index
    %c0_10 = arith.constant 0 : index
    %7 = vector.load %arg8[%c0_8, %c0_9, %c0_10] : memref<5x8x128xf32, #tpu.memory_space<vmem>>, vector<1x8x128xf32>
    %8 = vector.shape_cast %7 : vector<1x8x128xf32> to vector<8x128xf32>
    %c1 = arith.constant 1 : index
    %c0_11 = arith.constant 0 : index
    %c0_12 = arith.constant 0 : index
    %9 = vector.load %arg8[%c1, %c0_11, %c0_12] : memref<5x8x128xf32, #tpu.memory_space<vmem>>, vector<1x8x128xf32>
    %10 = vector.shape_cast %9 : vector<1x8x128xf32> to vector<8x128xf32>
    %c2 = arith.constant 2 : index
    %c0_13 = arith.constant 0 : index
    %c0_14 = arith.constant 0 : index
    %11 = vector.load %arg8[%c2, %c0_13, %c0_14] : memref<5x8x128xf32, #tpu.memory_space<vmem>>, vector<1x8x128xf32>
    %12 = vector.shape_cast %11 : vector<1x8x128xf32> to vector<8x128xf32>
    %c3 = arith.constant 3 : index
    %c0_15 = arith.constant 0 : index
    %c0_16 = arith.constant 0 : index
    %13 = vector.load %arg8[%c3, %c0_15, %c0_16] : memref<5x8x128xf32, #tpu.memory_space<vmem>>, vector<1x8x128xf32>
    %14 = vector.shape_cast %13 : vector<1x8x128xf32> to vector<8x128xf32>
    %c4 = arith.constant 4 : index
    %c0_17 = arith.constant 0 : index
    %c0_18 = arith.constant 0 : index
    %15 = vector.load %arg8[%c4, %c0_17, %c0_18] : memref<5x8x128xf32, #tpu.memory_space<vmem>>, vector<1x8x128xf32>
    %16 = vector.shape_cast %15 : vector<1x8x128xf32> to vector<8x128xf32>
    %c8_i32 = arith.constant 8 : i32
    %17 = arith.muli %arg1, %c8_i32 : i32
    %18 = arith.sitofp %17 : i32 to f32
    %cst = arith.constant 0.000000e+00 : f32
    %19 = arith.addf %18, %cst : f32
    %cst_19 = arith.constant 1.000000e+00 : f32
    %20 = arith.mulf %cst_19, %19 : f32
    %c0_20 = arith.constant 0 : index
    %c0_21 = arith.constant 0 : index
    %c0_22 = arith.constant 0 : index
    %21 = vector.load %arg2[%c0_20, %c0_21, %c0_22] : memref<8x8x128xf32, #tpu.memory_space<vmem>>, vector<1x8x128xf32>
    %22 = vector.shape_cast %21 : vector<1x8x128xf32> to vector<8x128xf32>
    %cst_23 = arith.constant dense<0.000000e+00> : vector<8x128xf32>
    %23 = tpu.matmul %22, %3, %cst_23 {dimension_numbers = #tpu.dot_dimension_numbers<[1], [0], [0], [1], [0, 0, 1, 1], [], []>} : vector<8x128xf32>, vector<128x128xf32>, vector<8x128xf32> -> vector<8x128xf32>
    %cst_24 = arith.constant dense<0.000000e+00> : vector<8x128xf32>
    %24 = tpu.matmul %12, %5, %cst_24 {dimension_numbers = #tpu.dot_dimension_numbers<[1], [0], [0], [1], [0, 0, 1, 1], [], []>} : vector<8x128xf32>, vector<128x128xf32>, vector<8x128xf32> -> vector<8x128xf32>
    %cst_25 = arith.constant dense<0.000000e+00> : vector<8x128xf32>
    %25 = tpu.matmul %24, %4, %cst_25 {dimension_numbers = #tpu.dot_dimension_numbers<[1], [0], [0], [1], [0, 0, 1, 1], [], []>} : vector<8x128xf32>, vector<128x128xf32>, vector<8x128xf32> -> vector<8x128xf32>
    %26 = arith.addf %23, %25 : vector<8x128xf32>
    %cst_26 = arith.constant 2.000000e+00 : f32
    %27 = vector.broadcast %cst_26 : f32 to vector<8x128xf32>
    %28 = arith.addf %16, %27 : vector<8x128xf32>
    %29 = vector.broadcast %20 : f32 to vector<8x128xf32>
    %30 = arith.cmpf ogt, %29, %28 : vector<8x128xf32>
    %cst_27 = arith.constant 0.000000e+00 : f32
    %31 = vector.broadcast %cst_27 : f32 to vector<8x128xf32>
    %32 = arith.cmpf oeq, %10, %31 : vector<8x128xf32>
    %33 = arith.andi %30, %32 : vector<8x128xi1>
    %cst_28 = arith.constant 0.904837429 : f32
    %34 = vector.broadcast %cst_28 : f32 to vector<8x128xf32>
    %35 = arith.mulf %34, %8 : vector<8x128xf32>
    %cst_29 = arith.constant 0.0951625854 : f32
    %36 = vector.broadcast %cst_29 : f32 to vector<8x128xf32>
    %37 = arith.mulf %36, %26 : vector<8x128xf32>
    %38 = arith.addf %35, %37 : vector<8x128xf32>
    %cst_30 = arith.constant 0.000000e+00 : f32
    %39 = vector.broadcast %cst_30 : f32 to vector<8x128xf32>
    %40 = arith.select %33, %38, %39 : vector<8x128xi1>, vector<8x128xf32>
    %cst_31 = arith.constant 0.606530666 : f32
    %41 = vector.broadcast %cst_31 : f32 to vector<8x128xf32>
    %42 = arith.mulf %41, %14 : vector<8x128xf32>
    %43 = arith.addf %42, %10 : vector<8x128xf32>
    %cst_32 = arith.constant 0.967216074 : f32
    %44 = vector.broadcast %cst_32 : f32 to vector<8x128xf32>
    %45 = arith.mulf %44, %12 : vector<8x128xf32>
    %cst_33 = arith.constant 3.278390e-02 : f32
    %46 = vector.broadcast %cst_33 : f32 to vector<8x128xf32>
    %47 = arith.mulf %46, %43 : vector<8x128xf32>
    %48 = arith.addf %45, %47 : vector<8x128xf32>
    %cst_34 = arith.constant 2.000000e-01 : f32
    %49 = vector.broadcast %cst_34 : f32 to vector<8x128xf32>
    %50 = arith.cmpf ogt, %40, %49 : vector<8x128xf32>
    %cst_35 = arith.constant 1.000000e+00 : f32
    %cst_36 = arith.constant 0.000000e+00 : f32
    %51 = vector.broadcast %cst_35 : f32 to vector<8x128xf32>
    %52 = vector.broadcast %cst_36 : f32 to vector<8x128xf32>
    %53 = arith.select %50, %51, %52 : vector<8x128xi1>, vector<8x128xf32>
    %54 = vector.broadcast %20 : f32 to vector<8x128xf32>
    %55 = arith.select %50, %54, %16 : vector<8x128xi1>, vector<8x128xf32>
    %cst_37 = arith.constant dense<0.000000e+00> : vector<8x128xf32>
    %56 = tpu.matmul %48, %6, %cst_37 {dimension_numbers = #tpu.dot_dimension_numbers<[1], [0], [0], [1], [0, 0, 1, 1], [], []>} : vector<8x128xf32>, vector<128x128xf32>, vector<8x128xf32> -> vector<8x128xf32>
    %c0_38 = arith.constant 0 : index
    %c0_39 = arith.constant 0 : index
    %c0_40 = arith.constant 0 : index
    %57 = vector.load %arg7[%c0_38, %c0_39, %c0_40] : memref<8x8x128xf32, #tpu.memory_space<vmem>>, vector<1x8x128xf32>
    %58 = vector.shape_cast %57 : vector<1x8x128xf32> to vector<8x128xf32>
    %59 = vector.shape_cast %56 : vector<8x128xf32> to vector<1x8x128xf32>
    tpu.vector_store %arg7[%c0_38, %c0_39, %c0_40], %59 {strides = array<i32>} : memref<8x8x128xf32, #tpu.memory_space<vmem>>, vector<1x8x128xf32>,
    %cst_41 = arith.constant 1.000000e+00 : f32
    %60 = arith.addf %18, %cst_41 : f32
    %cst_42 = arith.constant 1.000000e+00 : f32
    %61 = arith.mulf %cst_42, %60 : f32
    %c1_43 = arith.constant 1 : index
    %c0_44 = arith.constant 0 : index
    %c0_45 = arith.constant 0 : index
    %62 = vector.load %arg2[%c1_43, %c0_44, %c0_45] : memref<8x8x128xf32, #tpu.memory_space<vmem>>, vector<1x8x128xf32>
    %63 = vector.shape_cast %62 : vector<1x8x128xf32> to vector<8x128xf32>
    %cst_46 = arith.constant dense<0.000000e+00> : vector<8x128xf32>
    %64 = tpu.matmul %63, %3, %cst_46 {dimension_numbers = #tpu.dot_dimension_numbers<[1], [0], [0], [1], [0, 0, 1, 1], [], []>} : vector<8x128xf32>, vector<128x128xf32>, vector<8x128xf32> -> vector<8x128xf32>
    %cst_47 = arith.constant dense<0.000000e+00> : vector<8x128xf32>
    %65 = tpu.matmul %48, %5, %cst_47 {dimension_numbers = #tpu.dot_dimension_numbers<[1], [0], [0], [1], [0, 0, 1, 1], [], []>} : vector<8x128xf32>, vector<128x128xf32>, vector<8x128xf32> -> vector<8x128xf32>
    %cst_48 = arith.constant dense<0.000000e+00> : vector<8x128xf32>
    %66 = tpu.matmul %65, %4, %cst_48 {dimension_numbers = #tpu.dot_dimension_numbers<[1], [0], [0], [1], [0, 0, 1, 1], [], []>} : vector<8x128xf32>, vector<128x128xf32>, vector<8x128xf32> -> vector<8x128xf32>
    %67 = arith.addf %64, %66 : vector<8x128xf32>
    %cst_49 = arith.constant 2.000000e+00 : f32
    %68 = vector.broadcast %cst_49 : f32 to vector<8x128xf32>
    %69 = arith.addf %55, %68 : vector<8x128xf32>
    %70 = vector.broadcast %61 : f32 to vector<8x128xf32>
    %71 = arith.cmpf ogt, %70, %69 : vector<8x128xf32>
    %cst_50 = arith.constant 0.000000e+00 : f32
    %72 = vector.broadcast %cst_50 : f32 to vector<8x128xf32>
    %73 = arith.cmpf oeq, %53, %72 : vector<8x128xf32>
    %74 = arith.andi %71, %73 : vector<8x128xi1>
    %cst_51 = arith.constant 0.904837429 : f32
    %75 = vector.broadcast %cst_51 : f32 to vector<8x128xf32>
    %76 = arith.mulf %75, %40 : vector<8x128xf32>
    %cst_52 = arith.constant 0.0951625854 : f32
    %77 = vector.broadcast %cst_52 : f32 to vector<8x128xf32>
    %78 = arith.mulf %77, %67 : vector<8x128xf32>
    %79 = arith.addf %76, %78 : vector<8x128xf32>
    %cst_53 = arith.constant 0.000000e+00 : f32
    %80 = vector.broadcast %cst_53 : f32 to vector<8x128xf32>
    %81 = arith.select %74, %79, %80 : vector<8x128xi1>, vector<8x128xf32>
    %cst_54 = arith.constant 0.606530666 : f32
    %82 = vector.broadcast %cst_54 : f32 to vector<8x128xf32>
    %83 = arith.mulf %82, %43 : vector<8x128xf32>
    %84 = arith.addf %83, %53 : vector<8x128xf32>
    %cst_55 = arith.constant 0.967216074 : f32
    %85 = vector.broadcast %cst_55 : f32 to vector<8x128xf32>
    %86 = arith.mulf %85, %48 : vector<8x128xf32>
    %cst_56 = arith.constant 3.278390e-02 : f32
    %87 = vector.broadcast %cst_56 : f32 to vector<8x128xf32>
    %88 = arith.mulf %87, %84 : vector<8x128xf32>
    %89 = arith.addf %86, %88 : vector<8x128xf32>
    %cst_57 = arith.constant 2.000000e-01 : f32
    %90 = vector.broadcast %cst_57 : f32 to vector<8x128xf32>
    %91 = arith.cmpf ogt, %81, %90 : vector<8x128xf32>
    %cst_58 = arith.constant 1.000000e+00 : f32
    %cst_59 = arith.constant 0.000000e+00 : f32
    %92 = vector.broadcast %cst_58 : f32 to vector<8x128xf32>
    %93 = vector.broadcast %cst_59 : f32 to vector<8x128xf32>
    %94 = arith.select %91, %92, %93 : vector<8x128xi1>, vector<8x128xf32>
    %95 = vector.broadcast %61 : f32 to vector<8x128xf32>
    %96 = arith.select %91, %95, %55 : vector<8x128xi1>, vector<8x128xf32>
    %cst_60 = arith.constant dense<0.000000e+00> : vector<8x128xf32>
    %97 = tpu.matmul %89, %6, %cst_60 {dimension_numbers = #tpu.dot_dimension_numbers<[1], [0], [0], [1], [0, 0, 1, 1], [], []>} : vector<8x128xf32>, vector<128x128xf32>, vector<8x128xf32> -> vector<8x128xf32>
    %c1_61 = arith.constant 1 : index
    %c0_62 = arith.constant 0 : index
    %c0_63 = arith.constant 0 : index
    %98 = vector.load %arg7[%c1_61, %c0_62, %c0_63] : memref<8x8x128xf32, #tpu.memory_space<vmem>>, vector<1x8x128xf32>
    %99 = vector.shape_cast %98 : vector<1x8x128xf32> to vector<8x128xf32>
    %100 = vector.shape_cast %97 : vector<8x128xf32> to vector<1x8x128xf32>
    tpu.vector_store %arg7[%c1_61, %c0_62, %c0_63], %100 {strides = array<i32>} : memref<8x8x128xf32, #tpu.memory_space<vmem>>, vector<1x8x128xf32>,
    %cst_64 = arith.constant 2.000000e+00 : f32
    %101 = arith.addf %18, %cst_64 : f32
    %cst_65 = arith.constant 1.000000e+00 : f32
    %102 = arith.mulf %cst_65, %101 : f32
    %c2_66 = arith.constant 2 : index
    %c0_67 = arith.constant 0 : index
    %c0_68 = arith.constant 0 : index
    %103 = vector.load %arg2[%c2_66, %c0_67, %c0_68] : memref<8x8x128xf32, #tpu.memory_space<vmem>>, vector<1x8x128xf32>
    %104 = vector.shape_cast %103 : vector<1x8x128xf32> to vector<8x128xf32>
    %cst_69 = arith.constant dense<0.000000e+00> : vector<8x128xf32>
    %105 = tpu.matmul %104, %3, %cst_69 {dimension_numbers = #tpu.dot_dimension_numbers<[1], [0], [0], [1], [0, 0, 1, 1], [], []>} : vector<8x128xf32>, vector<128x128xf32>, vector<8x128xf32> -> vector<8x128xf32>
    %cst_70 = arith.constant dense<0.000000e+00> : vector<8x128xf32>
    %106 = tpu.matmul %89, %5, %cst_70 {dimension_numbers = #tpu.dot_dimension_numbers<[1], [0], [0], [1], [0, 0, 1, 1], [], []>} : vector<8x128xf32>, vector<128x128xf32>, vector<8x128xf32> -> vector<8x128xf32>
    %cst_71 = arith.constant dense<0.000000e+00> : vector<8x128xf32>
    %107 = tpu.matmul %106, %4, %cst_71 {dimension_numbers = #tpu.dot_dimension_numbers<[1], [0], [0], [1], [0, 0, 1, 1], [], []>} : vector<8x128xf32>, vector<128x128xf32>, vector<8x128xf32> -> vector<8x128xf32>
    %108 = arith.addf %105, %107 : vector<8x128xf32>
    %cst_72 = arith.constant 2.000000e+00 : f32
    %109 = vector.broadcast %cst_72 : f32 to vector<8x128xf32>
    %110 = arith.addf %96, %109 : vector<8x128xf32>
    %111 = vector.broadcast %102 : f32 to vector<8x128xf32>
    %112 = arith.cmpf ogt, %111, %110 : vector<8x128xf32>
    %cst_73 = arith.constant 0.000000e+00 : f32
    %113 = vector.broadcast %cst_73 : f32 to vector<8x128xf32>
    %114 = arith.cmpf oeq, %94, %113 : vector<8x128xf32>
    %115 = arith.andi %112, %114 : vector<8x128xi1>
    %cst_74 = arith.constant 0.904837429 : f32
    %116 = vector.broadcast %cst_74 : f32 to vector<8x128xf32>
    %117 = arith.mulf %116, %81 : vector<8x128xf32>
    %cst_75 = arith.constant 0.0951625854 : f32
    %118 = vector.broadcast %cst_75 : f32 to vector<8x128xf32>
    %119 = arith.mulf %118, %108 : vector<8x128xf32>
    %120 = arith.addf %117, %119 : vector<8x128xf32>
    %cst_76 = arith.constant 0.000000e+00 : f32
    %121 = vector.broadcast %cst_76 : f32 to vector<8x128xf32>
    %122 = arith.select %115, %120, %121 : vector<8x128xi1>, vector<8x128xf32>
    %cst_77 = arith.constant 0.606530666 : f32
    %123 = vector.broadcast %cst_77 : f32 to vector<8x128xf32>
    %124 = arith.mulf %123, %84 : vector<8x128xf32>
    %125 = arith.addf %124, %94 : vector<8x128xf32>
    %cst_78 = arith.constant 0.967216074 : f32
    %126 = vector.broadcast %cst_78 : f32 to vector<8x128xf32>
    %127 = arith.mulf %126, %89 : vector<8x128xf32>
    %cst_79 = arith.constant 3.278390e-02 : f32
    %128 = vector.broadcast %cst_79 : f32 to vector<8x128xf32>
    %129 = arith.mulf %128, %125 : vector<8x128xf32>
    %130 = arith.addf %127, %129 : vector<8x128xf32>
    %cst_80 = arith.constant 2.000000e-01 : f32
    %131 = vector.broadcast %cst_80 : f32 to vector<8x128xf32>
    %132 = arith.cmpf ogt, %122, %131 : vector<8x128xf32>
    %cst_81 = arith.constant 1.000000e+00 : f32
    %cst_82 = arith.constant 0.000000e+00 : f32
    %133 = vector.broadcast %cst_81 : f32 to vector<8x128xf32>
    %134 = vector.broadcast %cst_82 : f32 to vector<8x128xf32>
    %135 = arith.select %132, %133, %134 : vector<8x128xi1>, vector<8x128xf32>
    %136 = vector.broadcast %102 : f32 to vector<8x128xf32>
    %137 = arith.select %132, %136, %96 : vector<8x128xi1>, vector<8x128xf32>
    %cst_83 = arith.constant dense<0.000000e+00> : vector<8x128xf32>
    %138 = tpu.matmul %130, %6, %cst_83 {dimension_numbers = #tpu.dot_dimension_numbers<[1], [0], [0], [1], [0, 0, 1, 1], [], []>} : vector<8x128xf32>, vector<128x128xf32>, vector<8x128xf32> -> vector<8x128xf32>
    %c2_84 = arith.constant 2 : index
    %c0_85 = arith.constant 0 : index
    %c0_86 = arith.constant 0 : index
    %139 = vector.load %arg7[%c2_84, %c0_85, %c0_86] : memref<8x8x128xf32, #tpu.memory_space<vmem>>, vector<1x8x128xf32>
    %140 = vector.shape_cast %139 : vector<1x8x128xf32> to vector<8x128xf32>
    %141 = vector.shape_cast %138 : vector<8x128xf32> to vector<1x8x128xf32>
    tpu.vector_store %arg7[%c2_84, %c0_85, %c0_86], %141 {strides = array<i32>} : memref<8x8x128xf32, #tpu.memory_space<vmem>>, vector<1x8x128xf32>,
    %cst_87 = arith.constant 3.000000e+00 : f32
    %142 = arith.addf %18, %cst_87 : f32
    %cst_88 = arith.constant 1.000000e+00 : f32
    %143 = arith.mulf %cst_88, %142 : f32
    %c3_89 = arith.constant 3 : index
    %c0_90 = arith.constant 0 : index
    %c0_91 = arith.constant 0 : index
    %144 = vector.load %arg2[%c3_89, %c0_90, %c0_91] : memref<8x8x128xf32, #tpu.memory_space<vmem>>, vector<1x8x128xf32>
    %145 = vector.shape_cast %144 : vector<1x8x128xf32> to vector<8x128xf32>
    %cst_92 = arith.constant dense<0.000000e+00> : vector<8x128xf32>
    %146 = tpu.matmul %145, %3, %cst_92 {dimension_numbers = #tpu.dot_dimension_numbers<[1], [0], [0], [1], [0, 0, 1, 1], [], []>} : vector<8x128xf32>, vector<128x128xf32>, vector<8x128xf32> -> vector<8x128xf32>
    %cst_93 = arith.constant dense<0.000000e+00> : vector<8x128xf32>
    %147 = tpu.matmul %130, %5, %cst_93 {dimension_numbers = #tpu.dot_dimension_numbers<[1], [0], [0], [1], [0, 0, 1, 1], [], []>} : vector<8x128xf32>, vector<128x128xf32>, vector<8x128xf32> -> vector<8x128xf32>
    %cst_94 = arith.constant dense<0.000000e+00> : vector<8x128xf32>
    %148 = tpu.matmul %147, %4, %cst_94 {dimension_numbers = #tpu.dot_dimension_numbers<[1], [0], [0], [1], [0, 0, 1, 1], [], []>} : vector<8x128xf32>, vector<128x128xf32>, vector<8x128xf32> -> vector<8x128xf32>
    %149 = arith.addf %146, %148 : vector<8x128xf32>
    %cst_95 = arith.constant 2.000000e+00 : f32
    %150 = vector.broadcast %cst_95 : f32 to vector<8x128xf32>
    %151 = arith.addf %137, %150 : vector<8x128xf32>
    %152 = vector.broadcast %143 : f32 to vector<8x128xf32>
    %153 = arith.cmpf ogt, %152, %151 : vector<8x128xf32>
    %cst_96 = arith.constant 0.000000e+00 : f32
    %154 = vector.broadcast %cst_96 : f32 to vector<8x128xf32>
    %155 = arith.cmpf oeq, %135, %154 : vector<8x128xf32>
    %156 = arith.andi %153, %155 : vector<8x128xi1>
    %cst_97 = arith.constant 0.904837429 : f32
    %157 = vector.broadcast %cst_97 : f32 to vector<8x128xf32>
    %158 = arith.mulf %157, %122 : vector<8x128xf32>
    %cst_98 = arith.constant 0.0951625854 : f32
    %159 = vector.broadcast %cst_98 : f32 to vector<8x128xf32>
    %160 = arith.mulf %159, %149 : vector<8x128xf32>
    %161 = arith.addf %158, %160 : vector<8x128xf32>
    %cst_99 = arith.constant 0.000000e+00 : f32
    %162 = vector.broadcast %cst_99 : f32 to vector<8x128xf32>
    %163 = arith.select %156, %161, %162 : vector<8x128xi1>, vector<8x128xf32>
    %cst_100 = arith.constant 0.606530666 : f32
    %164 = vector.broadcast %cst_100 : f32 to vector<8x128xf32>
    %165 = arith.mulf %164, %125 : vector<8x128xf32>
    %166 = arith.addf %165, %135 : vector<8x128xf32>
    %cst_101 = arith.constant 0.967216074 : f32
    %167 = vector.broadcast %cst_101 : f32 to vector<8x128xf32>
    %168 = arith.mulf %167, %130 : vector<8x128xf32>
    %cst_102 = arith.constant 3.278390e-02 : f32
    %169 = vector.broadcast %cst_102 : f32 to vector<8x128xf32>
    %170 = arith.mulf %169, %166 : vector<8x128xf32>
    %171 = arith.addf %168, %170 : vector<8x128xf32>
    %cst_103 = arith.constant 2.000000e-01 : f32
    %172 = vector.broadcast %cst_103 : f32 to vector<8x128xf32>
    %173 = arith.cmpf ogt, %163, %172 : vector<8x128xf32>
    %cst_104 = arith.constant 1.000000e+00 : f32
    %cst_105 = arith.constant 0.000000e+00 : f32
    %174 = vector.broadcast %cst_104 : f32 to vector<8x128xf32>
    %175 = vector.broadcast %cst_105 : f32 to vector<8x128xf32>
    %176 = arith.select %173, %174, %175 : vector<8x128xi1>, vector<8x128xf32>
    %177 = vector.broadcast %143 : f32 to vector<8x128xf32>
    %178 = arith.select %173, %177, %137 : vector<8x128xi1>, vector<8x128xf32>
    %cst_106 = arith.constant dense<0.000000e+00> : vector<8x128xf32>
    %179 = tpu.matmul %171, %6, %cst_106 {dimension_numbers = #tpu.dot_dimension_numbers<[1], [0], [0], [1], [0, 0, 1, 1], [], []>} : vector<8x128xf32>, vector<128x128xf32>, vector<8x128xf32> -> vector<8x128xf32>
    %c3_107 = arith.constant 3 : index
    %c0_108 = arith.constant 0 : index
    %c0_109 = arith.constant 0 : index
    %180 = vector.load %arg7[%c3_107, %c0_108, %c0_109] : memref<8x8x128xf32, #tpu.memory_space<vmem>>, vector<1x8x128xf32>
    %181 = vector.shape_cast %180 : vector<1x8x128xf32> to vector<8x128xf32>
    %182 = vector.shape_cast %179 : vector<8x128xf32> to vector<1x8x128xf32>
    tpu.vector_store %arg7[%c3_107, %c0_108, %c0_109], %182 {strides = array<i32>} : memref<8x8x128xf32, #tpu.memory_space<vmem>>, vector<1x8x128xf32>,
    %cst_110 = arith.constant 4.000000e+00 : f32
    %183 = arith.addf %18, %cst_110 : f32
    %cst_111 = arith.constant 1.000000e+00 : f32
    %184 = arith.mulf %cst_111, %183 : f32
    %c4_112 = arith.constant 4 : index
    %c0_113 = arith.constant 0 : index
    %c0_114 = arith.constant 0 : index
    %185 = vector.load %arg2[%c4_112, %c0_113, %c0_114] : memref<8x8x128xf32, #tpu.memory_space<vmem>>, vector<1x8x128xf32>
    %186 = vector.shape_cast %185 : vector<1x8x128xf32> to vector<8x128xf32>
    %cst_115 = arith.constant dense<0.000000e+00> : vector<8x128xf32>
    %187 = tpu.matmul %186, %3, %cst_115 {dimension_numbers = #tpu.dot_dimension_numbers<[1], [0], [0], [1], [0, 0, 1, 1], [], []>} : vector<8x128xf32>, vector<128x128xf32>, vector<8x128xf32> -> vector<8x128xf32>
    %cst_116 = arith.constant dense<0.000000e+00> : vector<8x128xf32>
    %188 = tpu.matmul %171, %5, %cst_116 {dimension_numbers = #tpu.dot_dimension_numbers<[1], [0], [0], [1], [0, 0, 1, 1], [], []>} : vector<8x128xf32>, vector<128x128xf32>, vector<8x128xf32> -> vector<8x128xf32>
    %cst_117 = arith.constant dense<0.000000e+00> : vector<8x128xf32>
    %189 = tpu.matmul %188, %4, %cst_117 {dimension_numbers = #tpu.dot_dimension_numbers<[1], [0], [0], [1], [0, 0, 1, 1], [], []>} : vector<8x128xf32>, vector<128x128xf32>, vector<8x128xf32> -> vector<8x128xf32>
    %190 = arith.addf %187, %189 : vector<8x128xf32>
    %cst_118 = arith.constant 2.000000e+00 : f32
    %191 = vector.broadcast %cst_118 : f32 to vector<8x128xf32>
    %192 = arith.addf %178, %191 : vector<8x128xf32>
    %193 = vector.broadcast %184 : f32 to vector<8x128xf32>
    %194 = arith.cmpf ogt, %193, %192 : vector<8x128xf32>
    %cst_119 = arith.constant 0.000000e+00 : f32
    %195 = vector.broadcast %cst_119 : f32 to vector<8x128xf32>
    %196 = arith.cmpf oeq, %176, %195 : vector<8x128xf32>
    %197 = arith.andi %194, %196 : vector<8x128xi1>
    %cst_120 = arith.constant 0.904837429 : f32
    %198 = vector.broadcast %cst_120 : f32 to vector<8x128xf32>
    %199 = arith.mulf %198, %163 : vector<8x128xf32>
    %cst_121 = arith.constant 0.0951625854 : f32
    %200 = vector.broadcast %cst_121 : f32 to vector<8x128xf32>
    %201 = arith.mulf %200, %190 : vector<8x128xf32>
    %202 = arith.addf %199, %201 : vector<8x128xf32>
    %cst_122 = arith.constant 0.000000e+00 : f32
    %203 = vector.broadcast %cst_122 : f32 to vector<8x128xf32>
    %204 = arith.select %197, %202, %203 : vector<8x128xi1>, vector<8x128xf32>
    %cst_123 = arith.constant 0.606530666 : f32
    %205 = vector.broadcast %cst_123 : f32 to vector<8x128xf32>
    %206 = arith.mulf %205, %166 : vector<8x128xf32>
    %207 = arith.addf %206, %176 : vector<8x128xf32>
    %cst_124 = arith.constant 0.967216074 : f32
    %208 = vector.broadcast %cst_124 : f32 to vector<8x128xf32>
    %209 = arith.mulf %208, %171 : vector<8x128xf32>
    %cst_125 = arith.constant 3.278390e-02 : f32
    %210 = vector.broadcast %cst_125 : f32 to vector<8x128xf32>
    %211 = arith.mulf %210, %207 : vector<8x128xf32>
    %212 = arith.addf %209, %211 : vector<8x128xf32>
    %cst_126 = arith.constant 2.000000e-01 : f32
    %213 = vector.broadcast %cst_126 : f32 to vector<8x128xf32>
    %214 = arith.cmpf ogt, %204, %213 : vector<8x128xf32>
    %cst_127 = arith.constant 1.000000e+00 : f32
    %cst_128 = arith.constant 0.000000e+00 : f32
    %215 = vector.broadcast %cst_127 : f32 to vector<8x128xf32>
    %216 = vector.broadcast %cst_128 : f32 to vector<8x128xf32>
    %217 = arith.select %214, %215, %216 : vector<8x128xi1>, vector<8x128xf32>
    %218 = vector.broadcast %184 : f32 to vector<8x128xf32>
    %219 = arith.select %214, %218, %178 : vector<8x128xi1>, vector<8x128xf32>
    %cst_129 = arith.constant dense<0.000000e+00> : vector<8x128xf32>
    %220 = tpu.matmul %212, %6, %cst_129 {dimension_numbers = #tpu.dot_dimension_numbers<[1], [0], [0], [1], [0, 0, 1, 1], [], []>} : vector<8x128xf32>, vector<128x128xf32>, vector<8x128xf32> -> vector<8x128xf32>
    %c4_130 = arith.constant 4 : index
    %c0_131 = arith.constant 0 : index
    %c0_132 = arith.constant 0 : index
    %221 = vector.load %arg7[%c4_130, %c0_131, %c0_132] : memref<8x8x128xf32, #tpu.memory_space<vmem>>, vector<1x8x128xf32>
    %222 = vector.shape_cast %221 : vector<1x8x128xf32> to vector<8x128xf32>
    %223 = vector.shape_cast %220 : vector<8x128xf32> to vector<1x8x128xf32>
    tpu.vector_store %arg7[%c4_130, %c0_131, %c0_132], %223 {strides = array<i32>} : memref<8x8x128xf32, #tpu.memory_space<vmem>>, vector<1x8x128xf32>,
    %cst_133 = arith.constant 5.000000e+00 : f32
    %224 = arith.addf %18, %cst_133 : f32
    %cst_134 = arith.constant 1.000000e+00 : f32
    %225 = arith.mulf %cst_134, %224 : f32
    %c5 = arith.constant 5 : index
    %c0_135 = arith.constant 0 : index
    %c0_136 = arith.constant 0 : index
    %226 = vector.load %arg2[%c5, %c0_135, %c0_136] : memref<8x8x128xf32, #tpu.memory_space<vmem>>, vector<1x8x128xf32>
    %227 = vector.shape_cast %226 : vector<1x8x128xf32> to vector<8x128xf32>
    %cst_137 = arith.constant dense<0.000000e+00> : vector<8x128xf32>
    %228 = tpu.matmul %227, %3, %cst_137 {dimension_numbers = #tpu.dot_dimension_numbers<[1], [0], [0], [1], [0, 0, 1, 1], [], []>} : vector<8x128xf32>, vector<128x128xf32>, vector<8x128xf32> -> vector<8x128xf32>
    %cst_138 = arith.constant dense<0.000000e+00> : vector<8x128xf32>
    %229 = tpu.matmul %212, %5, %cst_138 {dimension_numbers = #tpu.dot_dimension_numbers<[1], [0], [0], [1], [0, 0, 1, 1], [], []>} : vector<8x128xf32>, vector<128x128xf32>, vector<8x128xf32> -> vector<8x128xf32>
    %cst_139 = arith.constant dense<0.000000e+00> : vector<8x128xf32>
    %230 = tpu.matmul %229, %4, %cst_139 {dimension_numbers = #tpu.dot_dimension_numbers<[1], [0], [0], [1], [0, 0, 1, 1], [], []>} : vector<8x128xf32>, vector<128x128xf32>, vector<8x128xf32> -> vector<8x128xf32>
    %231 = arith.addf %228, %230 : vector<8x128xf32>
    %cst_140 = arith.constant 2.000000e+00 : f32
    %232 = vector.broadcast %cst_140 : f32 to vector<8x128xf32>
    %233 = arith.addf %219, %232 : vector<8x128xf32>
    %234 = vector.broadcast %225 : f32 to vector<8x128xf32>
    %235 = arith.cmpf ogt, %234, %233 : vector<8x128xf32>
    %cst_141 = arith.constant 0.000000e+00 : f32
    %236 = vector.broadcast %cst_141 : f32 to vector<8x128xf32>
    %237 = arith.cmpf oeq, %217, %236 : vector<8x128xf32>
    %238 = arith.andi %235, %237 : vector<8x128xi1>
    %cst_142 = arith.constant 0.904837429 : f32
    %239 = vector.broadcast %cst_142 : f32 to vector<8x128xf32>
    %240 = arith.mulf %239, %204 : vector<8x128xf32>
    %cst_143 = arith.constant 0.0951625854 : f32
    %241 = vector.broadcast %cst_143 : f32 to vector<8x128xf32>
    %242 = arith.mulf %241, %231 : vector<8x128xf32>
    %243 = arith.addf %240, %242 : vector<8x128xf32>
    %cst_144 = arith.constant 0.000000e+00 : f32
    %244 = vector.broadcast %cst_144 : f32 to vector<8x128xf32>
    %245 = arith.select %238, %243, %244 : vector<8x128xi1>, vector<8x128xf32>
    %cst_145 = arith.constant 0.606530666 : f32
    %246 = vector.broadcast %cst_145 : f32 to vector<8x128xf32>
    %247 = arith.mulf %246, %207 : vector<8x128xf32>
    %248 = arith.addf %247, %217 : vector<8x128xf32>
    %cst_146 = arith.constant 0.967216074 : f32
    %249 = vector.broadcast %cst_146 : f32 to vector<8x128xf32>
    %250 = arith.mulf %249, %212 : vector<8x128xf32>
    %cst_147 = arith.constant 3.278390e-02 : f32
    %251 = vector.broadcast %cst_147 : f32 to vector<8x128xf32>
    %252 = arith.mulf %251, %248 : vector<8x128xf32>
    %253 = arith.addf %250, %252 : vector<8x128xf32>
    %cst_148 = arith.constant 2.000000e-01 : f32
    %254 = vector.broadcast %cst_148 : f32 to vector<8x128xf32>
    %255 = arith.cmpf ogt, %245, %254 : vector<8x128xf32>
    %cst_149 = arith.constant 1.000000e+00 : f32
    %cst_150 = arith.constant 0.000000e+00 : f32
    %256 = vector.broadcast %cst_149 : f32 to vector<8x128xf32>
    %257 = vector.broadcast %cst_150 : f32 to vector<8x128xf32>
    %258 = arith.select %255, %256, %257 : vector<8x128xi1>, vector<8x128xf32>
    %259 = vector.broadcast %225 : f32 to vector<8x128xf32>
    %260 = arith.select %255, %259, %219 : vector<8x128xi1>, vector<8x128xf32>
    %cst_151 = arith.constant dense<0.000000e+00> : vector<8x128xf32>
    %261 = tpu.matmul %253, %6, %cst_151 {dimension_numbers = #tpu.dot_dimension_numbers<[1], [0], [0], [1], [0, 0, 1, 1], [], []>} : vector<8x128xf32>, vector<128x128xf32>, vector<8x128xf32> -> vector<8x128xf32>
    %c5_152 = arith.constant 5 : index
    %c0_153 = arith.constant 0 : index
    %c0_154 = arith.constant 0 : index
    %262 = vector.load %arg7[%c5_152, %c0_153, %c0_154] : memref<8x8x128xf32, #tpu.memory_space<vmem>>, vector<1x8x128xf32>
    %263 = vector.shape_cast %262 : vector<1x8x128xf32> to vector<8x128xf32>
    %264 = vector.shape_cast %261 : vector<8x128xf32> to vector<1x8x128xf32>
    tpu.vector_store %arg7[%c5_152, %c0_153, %c0_154], %264 {strides = array<i32>} : memref<8x8x128xf32, #tpu.memory_space<vmem>>, vector<1x8x128xf32>,
    %cst_155 = arith.constant 6.000000e+00 : f32
    %265 = arith.addf %18, %cst_155 : f32
    %cst_156 = arith.constant 1.000000e+00 : f32
    %266 = arith.mulf %cst_156, %265 : f32
    %c6 = arith.constant 6 : index
    %c0_157 = arith.constant 0 : index
    %c0_158 = arith.constant 0 : index
    %267 = vector.load %arg2[%c6, %c0_157, %c0_158] : memref<8x8x128xf32, #tpu.memory_space<vmem>>, vector<1x8x128xf32>
    %268 = vector.shape_cast %267 : vector<1x8x128xf32> to vector<8x128xf32>
    %cst_159 = arith.constant dense<0.000000e+00> : vector<8x128xf32>
    %269 = tpu.matmul %268, %3, %cst_159 {dimension_numbers = #tpu.dot_dimension_numbers<[1], [0], [0], [1], [0, 0, 1, 1], [], []>} : vector<8x128xf32>, vector<128x128xf32>, vector<8x128xf32> -> vector<8x128xf32>
    %cst_160 = arith.constant dense<0.000000e+00> : vector<8x128xf32>
    %270 = tpu.matmul %253, %5, %cst_160 {dimension_numbers = #tpu.dot_dimension_numbers<[1], [0], [0], [1], [0, 0, 1, 1], [], []>} : vector<8x128xf32>, vector<128x128xf32>, vector<8x128xf32> -> vector<8x128xf32>
    %cst_161 = arith.constant dense<0.000000e+00> : vector<8x128xf32>
    %271 = tpu.matmul %270, %4, %cst_161 {dimension_numbers = #tpu.dot_dimension_numbers<[1], [0], [0], [1], [0, 0, 1, 1], [], []>} : vector<8x128xf32>, vector<128x128xf32>, vector<8x128xf32> -> vector<8x128xf32>
    %272 = arith.addf %269, %271 : vector<8x128xf32>
    %cst_162 = arith.constant 2.000000e+00 : f32
    %273 = vector.broadcast %cst_162 : f32 to vector<8x128xf32>
    %274 = arith.addf %260, %273 : vector<8x128xf32>
    %275 = vector.broadcast %266 : f32 to vector<8x128xf32>
    %276 = arith.cmpf ogt, %275, %274 : vector<8x128xf32>
    %cst_163 = arith.constant 0.000000e+00 : f32
    %277 = vector.broadcast %cst_163 : f32 to vector<8x128xf32>
    %278 = arith.cmpf oeq, %258, %277 : vector<8x128xf32>
    %279 = arith.andi %276, %278 : vector<8x128xi1>
    %cst_164 = arith.constant 0.904837429 : f32
    %280 = vector.broadcast %cst_164 : f32 to vector<8x128xf32>
    %281 = arith.mulf %280, %245 : vector<8x128xf32>
    %cst_165 = arith.constant 0.0951625854 : f32
    %282 = vector.broadcast %cst_165 : f32 to vector<8x128xf32>
    %283 = arith.mulf %282, %272 : vector<8x128xf32>
    %284 = arith.addf %281, %283 : vector<8x128xf32>
    %cst_166 = arith.constant 0.000000e+00 : f32
    %285 = vector.broadcast %cst_166 : f32 to vector<8x128xf32>
    %286 = arith.select %279, %284, %285 : vector<8x128xi1>, vector<8x128xf32>
    %cst_167 = arith.constant 0.606530666 : f32
    %287 = vector.broadcast %cst_167 : f32 to vector<8x128xf32>
    %288 = arith.mulf %287, %248 : vector<8x128xf32>
    %289 = arith.addf %288, %258 : vector<8x128xf32>
    %cst_168 = arith.constant 0.967216074 : f32
    %290 = vector.broadcast %cst_168 : f32 to vector<8x128xf32>
    %291 = arith.mulf %290, %253 : vector<8x128xf32>
    %cst_169 = arith.constant 3.278390e-02 : f32
    %292 = vector.broadcast %cst_169 : f32 to vector<8x128xf32>
    %293 = arith.mulf %292, %289 : vector<8x128xf32>
    %294 = arith.addf %291, %293 : vector<8x128xf32>
    %cst_170 = arith.constant 2.000000e-01 : f32
    %295 = vector.broadcast %cst_170 : f32 to vector<8x128xf32>
    %296 = arith.cmpf ogt, %286, %295 : vector<8x128xf32>
    %cst_171 = arith.constant 1.000000e+00 : f32
    %cst_172 = arith.constant 0.000000e+00 : f32
    %297 = vector.broadcast %cst_171 : f32 to vector<8x128xf32>
    %298 = vector.broadcast %cst_172 : f32 to vector<8x128xf32>
    %299 = arith.select %296, %297, %298 : vector<8x128xi1>, vector<8x128xf32>
    %300 = vector.broadcast %266 : f32 to vector<8x128xf32>
    %301 = arith.select %296, %300, %260 : vector<8x128xi1>, vector<8x128xf32>
    %cst_173 = arith.constant dense<0.000000e+00> : vector<8x128xf32>
    %302 = tpu.matmul %294, %6, %cst_173 {dimension_numbers = #tpu.dot_dimension_numbers<[1], [0], [0], [1], [0, 0, 1, 1], [], []>} : vector<8x128xf32>, vector<128x128xf32>, vector<8x128xf32> -> vector<8x128xf32>
    %c6_174 = arith.constant 6 : index
    %c0_175 = arith.constant 0 : index
    %c0_176 = arith.constant 0 : index
    %303 = vector.load %arg7[%c6_174, %c0_175, %c0_176] : memref<8x8x128xf32, #tpu.memory_space<vmem>>, vector<1x8x128xf32>
    %304 = vector.shape_cast %303 : vector<1x8x128xf32> to vector<8x128xf32>
    %305 = vector.shape_cast %302 : vector<8x128xf32> to vector<1x8x128xf32>
    tpu.vector_store %arg7[%c6_174, %c0_175, %c0_176], %305 {strides = array<i32>} : memref<8x8x128xf32, #tpu.memory_space<vmem>>, vector<1x8x128xf32>,
    %cst_177 = arith.constant 7.000000e+00 : f32
    %306 = arith.addf %18, %cst_177 : f32
    %cst_178 = arith.constant 1.000000e+00 : f32
    %307 = arith.mulf %cst_178, %306 : f32
    %c7 = arith.constant 7 : index
    %c0_179 = arith.constant 0 : index
    %c0_180 = arith.constant 0 : index
    %308 = vector.load %arg2[%c7, %c0_179, %c0_180] : memref<8x8x128xf32, #tpu.memory_space<vmem>>, vector<1x8x128xf32>
    %309 = vector.shape_cast %308 : vector<1x8x128xf32> to vector<8x128xf32>
    %cst_181 = arith.constant dense<0.000000e+00> : vector<8x128xf32>
    %310 = tpu.matmul %309, %3, %cst_181 {dimension_numbers = #tpu.dot_dimension_numbers<[1], [0], [0], [1], [0, 0, 1, 1], [], []>} : vector<8x128xf32>, vector<128x128xf32>, vector<8x128xf32> -> vector<8x128xf32>
    %cst_182 = arith.constant dense<0.000000e+00> : vector<8x128xf32>
    %311 = tpu.matmul %294, %5, %cst_182 {dimension_numbers = #tpu.dot_dimension_numbers<[1], [0], [0], [1], [0, 0, 1, 1], [], []>} : vector<8x128xf32>, vector<128x128xf32>, vector<8x128xf32> -> vector<8x128xf32>
    %cst_183 = arith.constant dense<0.000000e+00> : vector<8x128xf32>
    %312 = tpu.matmul %311, %4, %cst_183 {dimension_numbers = #tpu.dot_dimension_numbers<[1], [0], [0], [1], [0, 0, 1, 1], [], []>} : vector<8x128xf32>, vector<128x128xf32>, vector<8x128xf32> -> vector<8x128xf32>
    %313 = arith.addf %310, %312 : vector<8x128xf32>
    %cst_184 = arith.constant 2.000000e+00 : f32
    %314 = vector.broadcast %cst_184 : f32 to vector<8x128xf32>
    %315 = arith.addf %301, %314 : vector<8x128xf32>
    %316 = vector.broadcast %307 : f32 to vector<8x128xf32>
    %317 = arith.cmpf ogt, %316, %315 : vector<8x128xf32>
    %cst_185 = arith.constant 0.000000e+00 : f32
    %318 = vector.broadcast %cst_185 : f32 to vector<8x128xf32>
    %319 = arith.cmpf oeq, %299, %318 : vector<8x128xf32>
    %320 = arith.andi %317, %319 : vector<8x128xi1>
    %cst_186 = arith.constant 0.904837429 : f32
    %321 = vector.broadcast %cst_186 : f32 to vector<8x128xf32>
    %322 = arith.mulf %321, %286 : vector<8x128xf32>
    %cst_187 = arith.constant 0.0951625854 : f32
    %323 = vector.broadcast %cst_187 : f32 to vector<8x128xf32>
    %324 = arith.mulf %323, %313 : vector<8x128xf32>
    %325 = arith.addf %322, %324 : vector<8x128xf32>
    %cst_188 = arith.constant 0.000000e+00 : f32
    %326 = vector.broadcast %cst_188 : f32 to vector<8x128xf32>
    %327 = arith.select %320, %325, %326 : vector<8x128xi1>, vector<8x128xf32>
    %cst_189 = arith.constant 0.606530666 : f32
    %328 = vector.broadcast %cst_189 : f32 to vector<8x128xf32>
    %329 = arith.mulf %328, %289 : vector<8x128xf32>
    %330 = arith.addf %329, %299 : vector<8x128xf32>
    %cst_190 = arith.constant 0.967216074 : f32
    %331 = vector.broadcast %cst_190 : f32 to vector<8x128xf32>
    %332 = arith.mulf %331, %294 : vector<8x128xf32>
    %cst_191 = arith.constant 3.278390e-02 : f32
    %333 = vector.broadcast %cst_191 : f32 to vector<8x128xf32>
    %334 = arith.mulf %333, %330 : vector<8x128xf32>
    %335 = arith.addf %332, %334 : vector<8x128xf32>
    %cst_192 = arith.constant 2.000000e-01 : f32
    %336 = vector.broadcast %cst_192 : f32 to vector<8x128xf32>
    %337 = arith.cmpf ogt, %327, %336 : vector<8x128xf32>
    %cst_193 = arith.constant 1.000000e+00 : f32
    %cst_194 = arith.constant 0.000000e+00 : f32
    %338 = vector.broadcast %cst_193 : f32 to vector<8x128xf32>
    %339 = vector.broadcast %cst_194 : f32 to vector<8x128xf32>
    %340 = arith.select %337, %338, %339 : vector<8x128xi1>, vector<8x128xf32>
    %341 = vector.broadcast %307 : f32 to vector<8x128xf32>
    %342 = arith.select %337, %341, %301 : vector<8x128xi1>, vector<8x128xf32>
    %cst_195 = arith.constant dense<0.000000e+00> : vector<8x128xf32>
    %343 = tpu.matmul %335, %6, %cst_195 {dimension_numbers = #tpu.dot_dimension_numbers<[1], [0], [0], [1], [0, 0, 1, 1], [], []>} : vector<8x128xf32>, vector<128x128xf32>, vector<8x128xf32> -> vector<8x128xf32>
    %c7_196 = arith.constant 7 : index
    %c0_197 = arith.constant 0 : index
    %c0_198 = arith.constant 0 : index
    %344 = vector.load %arg7[%c7_196, %c0_197, %c0_198] : memref<8x8x128xf32, #tpu.memory_space<vmem>>, vector<1x8x128xf32>
    %345 = vector.shape_cast %344 : vector<1x8x128xf32> to vector<8x128xf32>
    %346 = vector.shape_cast %343 : vector<8x128xf32> to vector<1x8x128xf32>
    tpu.vector_store %arg7[%c7_196, %c0_197, %c0_198], %346 {strides = array<i32>} : memref<8x8x128xf32, #tpu.memory_space<vmem>>, vector<1x8x128xf32>,
    %c0_199 = arith.constant 0 : index
    %c0_200 = arith.constant 0 : index
    %c0_201 = arith.constant 0 : index
    %347 = vector.load %arg8[%c0_199, %c0_200, %c0_201] : memref<5x8x128xf32, #tpu.memory_space<vmem>>, vector<1x8x128xf32>
    %348 = vector.shape_cast %347 : vector<1x8x128xf32> to vector<8x128xf32>
    %349 = vector.shape_cast %327 : vector<8x128xf32> to vector<1x8x128xf32>
    tpu.vector_store %arg8[%c0_199, %c0_200, %c0_201], %349 {strides = array<i32>} : memref<5x8x128xf32, #tpu.memory_space<vmem>>, vector<1x8x128xf32>,
    %c1_202 = arith.constant 1 : index
    %c0_203 = arith.constant 0 : index
    %c0_204 = arith.constant 0 : index
    %350 = vector.load %arg8[%c1_202, %c0_203, %c0_204] : memref<5x8x128xf32, #tpu.memory_space<vmem>>, vector<1x8x128xf32>
    %351 = vector.shape_cast %350 : vector<1x8x128xf32> to vector<8x128xf32>
    %352 = vector.shape_cast %340 : vector<8x128xf32> to vector<1x8x128xf32>
    tpu.vector_store %arg8[%c1_202, %c0_203, %c0_204], %352 {strides = array<i32>} : memref<5x8x128xf32, #tpu.memory_space<vmem>>, vector<1x8x128xf32>,
    %c2_205 = arith.constant 2 : index
    %c0_206 = arith.constant 0 : index
    %c0_207 = arith.constant 0 : index
    %353 = vector.load %arg8[%c2_205, %c0_206, %c0_207] : memref<5x8x128xf32, #tpu.memory_space<vmem>>, vector<1x8x128xf32>
    %354 = vector.shape_cast %353 : vector<1x8x128xf32> to vector<8x128xf32>
    %355 = vector.shape_cast %335 : vector<8x128xf32> to vector<1x8x128xf32>
    tpu.vector_store %arg8[%c2_205, %c0_206, %c0_207], %355 {strides = array<i32>} : memref<5x8x128xf32, #tpu.memory_space<vmem>>, vector<1x8x128xf32>,
    %c3_208 = arith.constant 3 : index
    %c0_209 = arith.constant 0 : index
    %c0_210 = arith.constant 0 : index
    %356 = vector.load %arg8[%c3_208, %c0_209, %c0_210] : memref<5x8x128xf32, #tpu.memory_space<vmem>>, vector<1x8x128xf32>
    %357 = vector.shape_cast %356 : vector<1x8x128xf32> to vector<8x128xf32>
    %358 = vector.shape_cast %330 : vector<8x128xf32> to vector<1x8x128xf32>
    tpu.vector_store %arg8[%c3_208, %c0_209, %c0_210], %358 {strides = array<i32>} : memref<5x8x128xf32, #tpu.memory_space<vmem>>, vector<1x8x128xf32>,
    %c4_211 = arith.constant 4 : index
    %c0_212 = arith.constant 0 : index
    %c0_213 = arith.constant 0 : index
    %359 = vector.load %arg8[%c4_211, %c0_212, %c0_213] : memref<5x8x128xf32, #tpu.memory_space<vmem>>, vector<1x8x128xf32>
    %360 = vector.shape_cast %359 : vector<1x8x128xf32> to vector<8x128xf32>
    %361 = vector.shape_cast %342 : vector<8x128xf32> to vector<1x8x128xf32>
    tpu.vector_store %arg8[%c4_211, %c0_212, %c0_213], %361 {strides = array<i32>} : memref<5x8x128xf32, #tpu.memory_space<vmem>>, vector<1x8x128xf32>,
    return
  }
  func.func @transform_0(%arg0: i32, %arg1: i32) -> (i32, i32, i32) {
    %c0_i32 = arith.constant 0 : i32
    %c0_i32_0 = arith.constant 0 : i32
    return %arg1, %arg0, %c0_i32 : i32, i32, i32
  }
  func.func @transform_1(%arg0: i32, %arg1: i32) -> (i32, i32) {
    %c0_i32 = arith.constant 0 : i32
    %c0_i32_0 = arith.constant 0 : i32
    %c0_i32_1 = arith.constant 0 : i32
    return %c0_i32, %c0_i32_0 : i32, i32
  }
  func.func @transform_2(%arg0: i32, %arg1: i32) -> (i32, i32) {
    %c0_i32 = arith.constant 0 : i32
    %c0_i32_0 = arith.constant 0 : i32
    %c0_i32_1 = arith.constant 0 : i32
    return %c0_i32, %c0_i32_0 : i32, i32
  }
  func.func @transform_3(%arg0: i32, %arg1: i32) -> (i32, i32) {
    %c0_i32 = arith.constant 0 : i32
    %c0_i32_0 = arith.constant 0 : i32
    %c0_i32_1 = arith.constant 0 : i32
    return %c0_i32, %c0_i32_0 : i32, i32
  }
  func.func @transform_4(%arg0: i32, %arg1: i32) -> (i32, i32) {
    %c0_i32 = arith.constant 0 : i32
    %c0_i32_0 = arith.constant 0 : i32
    %c0_i32_1 = arith.constant 0 : i32
    return %c0_i32, %c0_i32_0 : i32, i32
  }
  func.func @transform_5(%arg0: i32, %arg1: i32) -> (i32, i32, i32) {
    %c0_i32 = arith.constant 0 : i32
    %c0_i32_0 = arith.constant 0 : i32
    return %arg1, %arg0, %c0_i32 : i32, i32, i32
  }
}

</mosaic_0001>

<llo_original>
// kernel: tpu_custom_call.1
$region0: #{tpu_custom_call.1}
  #allocation0 [shape = 'u32[]', space=smem, size = 0x4, offset = 0x4, fixed_abs, tag = 'smem constant byte address 0x4 - core index']
  #allocation1 [shape = 'u32[144,128]{1,0:T(1,128)}', space=vmem, size = 0x12000, scoped, tag = 'internal scratch']
  #allocation2 [shape = 'f32[5,8,128]{2,1,0:T(8,128)}', space=vmem, size = 0x5000, scoped, tag = 'scratch operand']
  %s0 = inlined_call_operand.hbm [shape: f32[8,8,128], index: 0, kind: input, shape index: {}]
  %s1 = inlined_call_operand.hbm [shape: f32[128,128], index: 1, kind: input, shape index: {}]
  %s2 = inlined_call_operand.hbm [shape: f32[128,128], index: 2, kind: input, shape index: {}]
  %s3 = inlined_call_operand.hbm [shape: f32[128,128], index: 3, kind: input, shape index: {}]
  %s4 = inlined_call_operand.hbm [shape: f32[128,128], index: 4, kind: input, shape index: {}]
  %s5 = inlined_call_operand.hbm [shape: f32[8,8,128], index: 5, kind: output, shape index: {}]
  %s6 = sld [smem:[#allocation0]]
  $region54: #{tpu_custom_call.1} parent=0
    _
  %s8 = ssub.s32 1, %s6
  %s9 = scalar_select 0, %s8, %s6
  $region1: #{tpu_custom_call.1} parent=0
    #allocation3 [shape = 'u8[32768]{0}', space=vmem, size = 0x8000, scoped, tag = 'input window, operand 0, single buffered']
    #allocation4 [shape = 's32[1]{0}', space=sflag, size = 0x4, scoped, tag = 'scoped memory for tpu_custom_call.1']
    #allocation5 [shape = 's32[1]{0}', space=sflag, size = 0x4, scoped, tag = 'scoped memory for tpu_custom_call.1']
    #allocation6 [shape = 'u8[65536]{0}', space=vmem, size = 0x10000, scoped, tag = 'input window, operand 1, single buffered']
    #allocation7 [shape = 's32[1]{0}', space=sflag, size = 0x4, scoped, tag = 'scoped memory for tpu_custom_call.1']
    #allocation8 [shape = 'u8[65536]{0}', space=vmem, size = 0x10000, scoped, tag = 'input window, operand 2, single buffered']
    #allocation9 [shape = 'u8[65536]{0}', space=vmem, size = 0x10000, scoped, tag = 'input window, operand 3, single buffered']
    #allocation10 [shape = 's32[1]{0}', space=sflag, size = 0x4, scoped, tag = 'scoped memory for tpu_custom_call.1']
    #allocation11 [shape = 'u8[65536]{0}', space=vmem, size = 0x10000, scoped, tag = 'input window, operand 4, single buffered']
    #allocation12 [shape = 'u8[32768]{0}', space=vmem, size = 0x8000, scoped, tag = 'output window, operand 0, single buffered']
    %10 = vsyncpa [#allocation4], 0
    %11 = vsyncpa [#allocation7], 0
    %12 = vsyncpa [#allocation10], 0
    %13 = vsyncpa [#allocation5], 0
    // Predicated region
    $region2: #{tpu_custom_call.1} parent=1 // pred_check
      _
    $region3: #{tpu_custom_call.1} parent=1 // pred_check_branch
      %15 = sbr.rel (0) target = $region5
    $region4: #{tpu_custom_call.1} parent=1 // pred_region
      %s17 = ssub.s32 1024, 1024
      %18 = vsyncadd [#allocation4], %s17
      %s19 = sshll.u32 [#allocation3], 4
      %s20 = int_to_ptr.vmem [resolvable:$true] %s19
      %25 = dma.hbm_to_vmem [thread:$0]  %s0, 1024, %s20, [#allocation4], 128, 128, 8
    $region5: #{tpu_custom_call.1} parent=1 // pred_fallthru
      _
    // Predicated region
    $region6: #{tpu_custom_call.1} parent=1 // pred_check
      _
    $region7: #{tpu_custom_call.1} parent=1 // pred_check_branch
      %27 = sbr.rel (0) target = $region9
    $region8: #{tpu_custom_call.1} parent=1 // pred_region
      %s29 = ssub.s32 2048, 2048
      %30 = vsyncadd [#allocation7], %s29
      %s31 = sshll.u32 [#allocation6], 4
      %s32 = int_to_ptr.vmem [resolvable:$true] %s31
      %37 = dma.hbm_to_vmem [thread:$0]  %s1, 2048, %s32, [#allocation7], 128, 128, 8
    $region9: #{tpu_custom_call.1} parent=1 // pred_fallthru
      _
    // Predicated region
    $region10: #{tpu_custom_call.1} parent=1 // pred_check
      _
    $region11: #{tpu_custom_call.1} parent=1 // pred_check_branch
      %39 = sbr.rel (0) target = $region13
    $region12: #{tpu_custom_call.1} parent=1 // pred_region
      %s41 = ssub.s32 2048, 2048
      %42 = vsyncadd [#allocation7], %s41
      %s43 = sshll.u32 [#allocation8], 4
      %s44 = int_to_ptr.vmem [resolvable:$true] %s43
      %49 = dma.hbm_to_vmem [thread:$0]  %s2, 2048, %s44, [#allocation7], 128, 128, 8
    $region13: #{tpu_custom_call.1} parent=1 // pred_fallthru
      _
    // Predicated region
    $region14: #{tpu_custom_call.1} parent=1 // pred_check
      _
    $region15: #{tpu_custom_call.1} parent=1 // pred_check_branch
      %51 = sbr.rel (0) target = $region17
    $region16: #{tpu_custom_call.1} parent=1 // pred_region
      %s53 = ssub.s32 2048, 2048
      %54 = vsyncadd [#allocation10], %s53
      %s55 = sshll.u32 [#allocation9], 4
      %s56 = int_to_ptr.vmem [resolvable:$true] %s55
      %61 = dma.hbm_to_vmem [thread:$0]  %s3, 2048, %s56, [#allocation10], 128, 128, 8
    $region17: #{tpu_custom_call.1} parent=1 // pred_fallthru
      _
    // Predicated region
    $region18: #{tpu_custom_call.1} parent=1 // pred_check
      _
    $region19: #{tpu_custom_call.1} parent=1 // pred_check_branch
      %63 = sbr.rel (0) target = $region21
    $region20: #{tpu_custom_call.1} parent=1 // pred_region
      %s65 = ssub.s32 2048, 2048
      %66 = vsyncadd [#allocation10], %s65
      %s67 = sshll.u32 [#allocation11], 4
      %s68 = int_to_ptr.vmem [resolvable:$true] %s67
      %73 = dma.hbm_to_vmem [thread:$0]  %s4, 2048, %s68, [#allocation10], 128, 128, 8
    $region21: #{tpu_custom_call.1} parent=1 // pred_fallthru
      _
    // Predicated region
    $region22: #{tpu_custom_call.1} parent=1 // pred_check
      _
    $region23: #{tpu_custom_call.1} parent=1 // pred_check_branch
      %75 = sbr.rel (0) target = $region25
    $region24: #{tpu_custom_call.1} parent=1 // pred_region
      %76 = dma.done [#allocation4], 1024
    $region25: #{tpu_custom_call.1} parent=1 // pred_fallthru
      _
    // Predicated region
    $region26: #{tpu_custom_call.1} parent=1 // pred_check
      _
    $region27: #{tpu_custom_call.1} parent=1 // pred_check_branch
      %78 = sbr.rel (0) target = $region29
    $region28: #{tpu_custom_call.1} parent=1 // pred_region
      %79 = dma.done [#allocation7], 2048
    $region29: #{tpu_custom_call.1} parent=1 // pred_fallthru
      _
    // Predicated region
    $region30: #{tpu_custom_call.1} parent=1 // pred_check
      _
    $region31: #{tpu_custom_call.1} parent=1 // pred_check_branch
      %81 = sbr.rel (0) target = $region33
    $region32: #{tpu_custom_call.1} parent=1 // pred_region
      %82 = dma.done [#allocation7], 2048
    $region33: #{tpu_custom_call.1} parent=1 // pred_fallthru
      _
    // Predicated region
    $region34: #{tpu_custom_call.1} parent=1 // pred_check
      _
    $region35: #{tpu_custom_call.1} parent=1 // pred_check_branch
      %84 = sbr.rel (0) target = $region37
    $region36: #{tpu_custom_call.1} parent=1 // pred_region
      %85 = dma.done [#allocation10], 2048
    $region37: #{tpu_custom_call.1} parent=1 // pred_fallthru
      _
    // Predicated region
    $region38: #{tpu_custom_call.1} parent=1 // pred_check
      _
    $region39: #{tpu_custom_call.1} parent=1 // pred_check_branch
      %87 = sbr.rel (0) target = $region41
    $region40: #{tpu_custom_call.1} parent=1 // pred_region
      %88 = dma.done [#allocation10], 2048
    $region41: #{tpu_custom_call.1} parent=1 // pred_fallthru
      _
    %p89 = scmp.eq.s32.totalorder 0, 0
    // Predicated region
    $region42: #{tpu_custom_call.1} parent=1 // pred_check
      %p90 = pneg %p89
    $region43: #{tpu_custom_call.1} parent=1 // pred_check_branch
      %92 = sbr.rel (%p90) target = $region45
    $region44: #{tpu_custom_call.1} parent=1 // pred_region
      %93 = vst [vmem:[#allocation2] sm:$0xff] 0.0
      %s94 = scalar_lea.vmem [#allocation2], 8
      %95 = vst [vmem:[%s94] sm:$0xff] 0.0
      %s96 = scalar_lea.vmem [#allocation2], 16
      %97 = vst [vmem:[%s96] sm:$0xff] 0.0
      %s98 = scalar_lea.vmem [#allocation2], 24
      %99 = vst [vmem:[%s98] sm:$0xff] 0.0
      %s100 = scalar_lea.vmem [#allocation2], 32
      %101 = vst [vmem:[%s100] sm:$0xff] -1.0
    $region45: #{tpu_custom_call.1} parent=1 // pred_fallthru
      _
    %v102 = vld [vmem:[#allocation6] sm:$0xff]
    %v103 = vld [vmem:[#allocation6 + $0x8] sm:$0xff]
    %v104 = vld [vmem:[#allocation6 + $0x10] sm:$0xff]
    %v105 = vld [vmem:[#allocation6 + $0x18] sm:$0xff]
    %v106 = vld [vmem:[#allocation6 + $0x20] sm:$0xff]
    %v107 = vld [vmem:[#allocation6 + $0x28] sm:$0xff]
    %v108 = vld [vmem:[#allocation6 + $0x30] sm:$0xff]
    %v109 = vld [vmem:[#allocation6 + $0x38] sm:$0xff]
    %v110 = vld [vmem:[#allocation6 + $0x40] sm:$0xff]
    %v111 = vld [vmem:[#allocation6 + $0x48] sm:$0xff]
    %v112 = vld [vmem:[#allocation6 + $0x50] sm:$0xff]
    %v113 = vld [vmem:[#allocation6 + $0x58] sm:$0xff]
    %v114 = vld [vmem:[#allocation6 + $0x60] sm:$0xff]
    %v115 = vld [vmem:[#allocation6 + $0x68] sm:$0xff]
    %v116 = vld [vmem:[#allocation6 + $0x70] sm:$0xff]
    %v117 = vld [vmem:[#allocation6 + $0x78] sm:$0xff]
    %v118 = vld [vmem:[#allocation8] sm:$0xff]
    %v119 = vld [vmem:[#allocation8 + $0x8] sm:$0xff]
    %v120 = vld [vmem:[#allocation8 + $0x10] sm:$0xff]
    %v121 = vld [vmem:[#allocation8 + $0x18] sm:$0xff]
    %v122 = vld [vmem:[#allocation8 + $0x20] sm:$0xff]
    %v123 = vld [vmem:[#allocation8 + $0x28] sm:$0xff]
    %v124 = vld [vmem:[#allocation8 + $0x30] sm:$0xff]
    %v125 = vld [vmem:[#allocation8 + $0x38] sm:$0xff]
    %v126 = vld [vmem:[#allocation8 + $0x40] sm:$0xff]
    %v127 = vld [vmem:[#allocation8 + $0x48] sm:$0xff]
    %v128 = vld [vmem:[#allocation8 + $0x50] sm:$0xff]
    %v129 = vld [vmem:[#allocation8 + $0x58] sm:$0xff]
    %v130 = vld [vmem:[#allocation8 + $0x60] sm:$0xff]
    %v131 = vld [vmem:[#allocation8 + $0x68] sm:$0xff]
    %v132 = vld [vmem:[#allocation8 + $0x70] sm:$0xff]
    %v133 = vld [vmem:[#allocation8 + $0x78] sm:$0xff]
    %v134 = vld [vmem:[#allocation9] sm:$0xff]
    %v135 = vld [vmem:[#allocation9 + $0x8] sm:$0xff]
    %v136 = vld [vmem:[#allocation9 + $0x10] sm:$0xff]
    %v137 = vld [vmem:[#allocation9 + $0x18] sm:$0xff]
    %v138 = vld [vmem:[#allocation9 + $0x20] sm:$0xff]
    %v139 = vld [vmem:[#allocation9 + $0x28] sm:$0xff]
    %v140 = vld [vmem:[#allocation9 + $0x30] sm:$0xff]
    %v141 = vld [vmem:[#allocation9 + $0x38] sm:$0xff]
    %v142 = vld [vmem:[#allocation9 + $0x40] sm:$0xff]
    %v143 = vld [vmem:[#allocation9 + $0x48] sm:$0xff]
    %v144 = vld [vmem:[#allocation9 + $0x50] sm:$0xff]
    %v145 = vld [vmem:[#allocation9 + $0x58] sm:$0xff]
    %v146 = vld [vmem:[#allocation9 + $0x60] sm:$0xff]
    %v147 = vld [vmem:[#allocation9 + $0x68] sm:$0xff]
    %v148 = vld [vmem:[#allocation9 + $0x70] sm:$0xff]
    %v149 = vld [vmem:[#allocation9 + $0x78] sm:$0xff]
    %v150 = vld [vmem:[#allocation11] sm:$0xff]
    %v151 = vld [vmem:[#allocation11 + $0x8] sm:$0xff]
    %v152 = vld [vmem:[#allocation11 + $0x10] sm:$0xff]
    %v153 = vld [vmem:[#allocation11 + $0x18] sm:$0xff]
    %v154 = vld [vmem:[#allocation11 + $0x20] sm:$0xff]
    %v155 = vld [vmem:[#allocation11 + $0x28] sm:$0xff]
    %v156 = vld [vmem:[#allocation11 + $0x30] sm:$0xff]
    %v157 = vld [vmem:[#allocation11 + $0x38] sm:$0xff]
    %v158 = vld [vmem:[#allocation11 + $0x40] sm:$0xff]
    %v159 = vld [vmem:[#allocation11 + $0x48] sm:$0xff]
    %v160 = vld [vmem:[#allocation11 + $0x50] sm:$0xff]
    %v161 = vld [vmem:[#allocation11 + $0x58] sm:$0xff]
    %v162 = vld [vmem:[#allocation11 + $0x60] sm:$0xff]
    %v163 = vld [vmem:[#allocation11 + $0x68] sm:$0xff]
    %v164 = vld [vmem:[#allocation11 + $0x70] sm:$0xff]
    %v165 = vld [vmem:[#allocation11 + $0x78] sm:$0xff]
    %v166 = vld [vmem:[#allocation2] sm:$0xff]
    %s167 = scalar_lea.vmem [#allocation2], 8
    %v168 = vld [vmem:[%s167] sm:$0xff]
    %s169 = scalar_lea.vmem [#allocation2], 16
    %v170 = vld [vmem:[%s169] sm:$0xff]
    %s171 = scalar_lea.vmem [#allocation2], 24
    %v172 = vld [vmem:[%s171] sm:$0xff]
    %s173 = scalar_lea.vmem [#allocation2], 32
    %v174 = vld [vmem:[%s173] sm:$0xff]
    %s175 = smul.u32 0, 8
    %s176 = scvt.s32.f32 %s175
    %s177 = sadd.f32 %s176, 0.0
    %v178 = vld [vmem:[#allocation3] sm:$0xff]
    %179 = vmatprep.subr.mxu0 0.0
    %180 = vmatpush1.msra.mxu0 %v134
    %181 = vmatprep.subr.mxu0 0.0
    %182 = vmatpush1.msra.mxu0 %v135
    %183 = vmatprep.subr.mxu0 0.0
    %184 = vmatpush1.msra.mxu0 %v136
    %185 = vmatprep.subr.mxu0 0.0
    %186 = vmatpush1.msra.mxu0 %v137
    %187 = vmatprep.subr.mxu0 0.0
    %188 = vmatpush1.msra.mxu0 %v138
    %189 = vmatprep.subr.mxu0 0.0
    %190 = vmatpush1.msra.mxu0 %v139
    %191 = vmatprep.subr.mxu0 0.0
    %192 = vmatpush1.msra.mxu0 %v140
    %193 = vmatprep.subr.mxu0 0.0
    %194 = vmatpush1.msra.mxu0 %v141
    %195 = vmatprep.subr.mxu0 0.0
    %196 = vmatpush1.msra.mxu0 %v142
    %197 = vmatprep.subr.mxu0 0.0
    %198 = vmatpush1.msra.mxu0 %v143
    %199 = vmatprep.subr.mxu0 0.0
    %200 = vmatpush1.msra.mxu0 %v144
    %201 = vmatprep.subr.mxu0 0.0
    %202 = vmatpush1.msra.mxu0 %v145
    %203 = vmatprep.subr.mxu0 0.0
    %204 = vmatpush1.msra.mxu0 %v146
    %205 = vmatprep.subr.mxu0 0.0
    %206 = vmatpush1.msra.mxu0 %v147
    %207 = vmatprep.subr.mxu0 0.0
    %208 = vmatpush1.msra.mxu0 %v148
    %209 = vmatprep.subr.mxu0 0.0
    %210 = vmatpush1.msra.mxu0 %v149
    %211 = vmatprep.subr.mxu0 0.0
    %212 = vmatpush1.msra.mxu0 0.0
    %213 = vmatprep.subr.mxu0 0.0
    %214 = vmatpush1.msra.mxu0 0.0
    %215 = vmatprep.subr.mxu0 0.0
    %216 = vmatpush1.msra.mxu0 0.0
    %217 = vmatprep.subr.mxu0 0.0
    %218 = vmatpush1.msra.mxu0 0.0
    %219 = vmatprep.subr.mxu0 0.0
    %220 = vmatpush1.msra.mxu0 0.0
    %221 = vmatprep.subr.mxu0 0.0
    %222 = vmatpush1.msra.mxu0 0.0
    %223 = vmatprep.subr.mxu0 0.0
    %224 = vmatpush1.msra.mxu0 0.0
    %225 = vmatprep.subr.mxu0 0.0
    %226 = vmatpush1.msra.mxu0 0.0
    %227 = vmatprep.subr.mxu0 0.0
    %228 = vmatpush1.msra.mxu0 0.0
    %229 = vmatprep.subr.mxu0 0.0
    %230 = vmatpush1.msra.mxu0 0.0
    %231 = vmatprep.subr.mxu0 0.0
    %232 = vmatpush1.msra.mxu0 0.0
    %233 = vmatprep.subr.mxu0 0.0
    %234 = vmatpush1.msra.mxu0 0.0
    %235 = vmatprep.subr.mxu0 0.0
    %236 = vmatpush1.msra.mxu0 0.0
    %237 = vmatprep.subr.mxu0 0.0
    %238 = vmatpush1.msra.mxu0 0.0
    %239 = vmatprep.subr.mxu0 0.0
    %240 = vmatpush1.msra.mxu0 0.0
    %241 = vmatprep.subr.mxu0 0.0
    %242 = vmatpush1.msra.mxu0 0.0
    %243 = vmatprep.mubr.f32.mxu0 0.0
    %244 = vmatmul.mubr.f32.gmra.mrb[0].mxu0 %v170
    %v245 = vpop.f32.mrb[0].mxu0
    %v246 = vadd.f32 0.0, %v245
    %v247 = vpop.f32.mrb[0].mxu0
    %248 = vdwg.mxu0
    %249 = vmatprep.subr.mxu0 0.0
    %250 = vmatpush1.msra.mxu0 %v118
    %251 = vmatprep.subr.mxu0 0.0
    %252 = vmatpush1.msra.mxu0 %v119
    %253 = vmatprep.subr.mxu0 0.0
    %254 = vmatpush1.msra.mxu0 %v120
    %255 = vmatprep.subr.mxu0 0.0
    %256 = vmatpush1.msra.mxu0 %v121
    %257 = vmatprep.subr.mxu0 0.0
    %258 = vmatpush1.msra.mxu0 %v122
    %259 = vmatprep.subr.mxu0 0.0
    %260 = vmatpush1.msra.mxu0 %v123
    %261 = vmatprep.subr.mxu0 0.0
    %262 = vmatpush1.msra.mxu0 %v124
    %263 = vmatprep.subr.mxu0 0.0
    %264 = vmatpush1.msra.mxu0 %v125
    %265 = vmatprep.subr.mxu0 0.0
    %266 = vmatpush1.msra.mxu0 %v126
    %267 = vmatprep.subr.mxu0 0.0
    %268 = vmatpush1.msra.mxu0 %v127
    %269 = vmatprep.subr.mxu0 0.0
    %270 = vmatpush1.msra.mxu0 %v128
    %271 = vmatprep.subr.mxu0 0.0
    %272 = vmatpush1.msra.mxu0 %v129
    %273 = vmatprep.subr.mxu0 0.0
    %274 = vmatpush1.msra.mxu0 %v130
    %275 = vmatprep.subr.mxu0 0.0
    %276 = vmatpush1.msra.mxu0 %v131
    %277 = vmatprep.subr.mxu0 0.0
    %278 = vmatpush1.msra.mxu0 %v132
    %279 = vmatprep.subr.mxu0 0.0
    %280 = vmatpush1.msra.mxu0 %v133
    %281 = vmatprep.subr.mxu0 0.0
    %282 = vmatpush1.msra.mxu0 0.0
    %283 = vmatprep.subr.mxu0 0.0
    %284 = vmatpush1.msra.mxu0 0.0
    %285 = vmatprep.subr.mxu0 0.0
    %286 = vmatpush1.msra.mxu0 0.0
    %287 = vmatprep.subr.mxu0 0.0
    %288 = vmatpush1.msra.mxu0 0.0
    %289 = vmatprep.subr.mxu0 0.0
    %290 = vmatpush1.msra.mxu0 0.0
    %291 = vmatprep.subr.mxu0 0.0
    %292 = vmatpush1.msra.mxu0 0.0
    %293 = vmatprep.subr.mxu0 0.0
    %294 = vmatpush1.msra.mxu0 0.0
    %295 = vmatprep.subr.mxu0 0.0
    %296 = vmatpush1.msra.mxu0 0.0
    %297 = vmatprep.subr.mxu0 0.0
    %298 = vmatpush1.msra.mxu0 0.0
    %299 = vmatprep.subr.mxu0 0.0
    %300 = vmatpush1.msra.mxu0 0.0
    %301 = vmatprep.subr.mxu0 0.0
    %302 = vmatpush1.msra.mxu0 0.0
    %303 = vmatprep.subr.mxu0 0.0
    %304 = vmatpush1.msra.mxu0 0.0
    %305 = vmatprep.subr.mxu0 0.0
    %306 = vmatpush1.msra.mxu0 0.0
    %307 = vmatprep.subr.mxu0 0.0
    %308 = vmatpush1.msra.mxu0 0.0
    %309 = vmatprep.subr.mxu0 0.0
    %310 = vmatpush1.msra.mxu0 0.0
    %311 = vmatprep.subr.mxu0 0.0
    %312 = vmatpush1.msra.mxu0 0.0
    %313 = vmatprep.mubr.f32.mxu0 0.0
    %314 = vmatmul.mubr.f32.gmra.mrb[0].mxu0 %v246
    %v315 = vpop.f32.mrb[0].mxu0
    %v316 = vadd.f32 0.0, %v315
    %v317 = vpop.f32.mrb[0].mxu0
    %318 = vdwg.mxu0
    %319 = vmatprep.subr.mxu0 0.0
    %320 = vmatpush1.msra.mxu0 %v102
    %321 = vmatprep.subr.mxu0 0.0
    %322 = vmatpush1.msra.mxu0 %v103
    %323 = vmatprep.subr.mxu0 0.0
    %324 = vmatpush1.msra.mxu0 %v104
    %325 = vmatprep.subr.mxu0 0.0
    %326 = vmatpush1.msra.mxu0 %v105
    %327 = vmatprep.subr.mxu0 0.0
    %328 = vmatpush1.msra.mxu0 %v106
    %329 = vmatprep.subr.mxu0 0.0
    %330 = vmatpush1.msra.mxu0 %v107
    %331 = vmatprep.subr.mxu0 0.0
    %332 = vmatpush1.msra.mxu0 %v108
    %333 = vmatprep.subr.mxu0 0.0
    %334 = vmatpush1.msra.mxu0 %v109
    %335 = vmatprep.subr.mxu0 0.0
    %336 = vmatpush1.msra.mxu0 %v110
    %337 = vmatprep.subr.mxu0 0.0
    %338 = vmatpush1.msra.mxu0 %v111
    %339 = vmatprep.subr.mxu0 0.0
    %340 = vmatpush1.msra.mxu0 %v112
    %341 = vmatprep.subr.mxu0 0.0
    %342 = vmatpush1.msra.mxu0 %v113
    %343 = vmatprep.subr.mxu0 0.0
    %344 = vmatpush1.msra.mxu0 %v114
    %345 = vmatprep.subr.mxu0 0.0
    %346 = vmatpush1.msra.mxu0 %v115
    %347 = vmatprep.subr.mxu0 0.0
    %348 = vmatpush1.msra.mxu0 %v116
    %349 = vmatprep.subr.mxu0 0.0
    %350 = vmatpush1.msra.mxu0 %v117
    %351 = vmatprep.subr.mxu0 0.0
    %352 = vmatpush1.msra.mxu0 0.0
    %353 = vmatprep.subr.mxu0 0.0
    %354 = vmatpush1.msra.mxu0 0.0
    %355 = vmatprep.subr.mxu0 0.0
    %356 = vmatpush1.msra.mxu0 0.0
    %357 = vmatprep.subr.mxu0 0.0
    %358 = vmatpush1.msra.mxu0 0.0
    %359 = vmatprep.subr.mxu0 0.0
    %360 = vmatpush1.msra.mxu0 0.0
    %361 = vmatprep.subr.mxu0 0.0
    %362 = vmatpush1.msra.mxu0 0.0
    %363 = vmatprep.subr.mxu0 0.0
    %364 = vmatpush1.msra.mxu0 0.0
    %365 = vmatprep.subr.mxu0 0.0
    %366 = vmatpush1.msra.mxu0 0.0
    %367 = vmatprep.subr.mxu0 0.0
    %368 = vmatpush1.msra.mxu0 0.0
    %369 = vmatprep.subr.mxu0 0.0
    %370 = vmatpush1.msra.mxu0 0.0
    %371 = vmatprep.subr.mxu0 0.0
    %372 = vmatpush1.msra.mxu0 0.0
    %373 = vmatprep.subr.mxu0 0.0
    %374 = vmatpush1.msra.mxu0 0.0
    %375 = vmatprep.subr.mxu0 0.0
    %376 = vmatpush1.msra.mxu0 0.0
    %377 = vmatprep.subr.mxu0 0.0
    %378 = vmatpush1.msra.mxu0 0.0
    %379 = vmatprep.subr.mxu0 0.0
    %380 = vmatpush1.msra.mxu0 0.0
    %381 = vmatprep.subr.mxu0 0.0
    %382 = vmatpush1.msra.mxu0 0.0
    %383 = vmatprep.mubr.f32.mxu0 0.0
    %384 = vmatmul.mubr.f32.gmra.mrb[0].mxu0 %v178
    %v385 = vpop.f32.mrb[0].mxu0
    %v386 = vadd.f32 %v316, %v385
    %v387 = vpop.f32.mrb[0].mxu0
    %388 = vdwg.mxu0
    %v389 = vadd.f32 %v174, 2.0
    %v390 = vstv %s177
    %vm391 = vcmp.gt.f32.partialorder %v390, %v389
    %vm392 = vcmp.eq.f32.partialorder %v168, 0.0
    %vm393 = vmand %vm391, %vm392
    %v394 = vmul.f32 %v166, 0.9048374
    %v395 = vmul.f32 %v386, 0.095162585
    %v396 = vadd.f32 %v394, %v395
    %v397 = vsel %vm393, %v396, 0.0
    %v398 = vmul.f32 %v172, 0.60653067
    %v399 = vadd.f32 %v398, %v168
    %v400 = vmul.f32 %v170, 0.9672161
    %v401 = vmul.f32 %v399, 0.0327839
    %v402 = vadd.f32 %v400, %v401
    %vm403 = vcmp.gt.f32.partialorder %v397, 0.2
    %v404 = vsel %vm403, 1.0, 0.0
    %v405 = vsel %vm403, %v390, %v174
    %406 = vmatprep.subr.mxu0 0.0
    %407 = vmatpush1.msra.mxu0 %v150
    %408 = vmatprep.subr.mxu0 0.0
    %409 = vmatpush1.msra.mxu0 %v151
    %410 = vmatprep.subr.mxu0 0.0
    %411 = vmatpush1.msra.mxu0 %v152
    %412 = vmatprep.subr.mxu0 0.0
    %413 = vmatpush1.msra.mxu0 %v153
    %414 = vmatprep.subr.mxu0 0.0
    %415 = vmatpush1.msra.mxu0 %v154
    %416 = vmatprep.subr.mxu0 0.0
    %417 = vmatpush1.msra.mxu0 %v155
    %418 = vmatprep.subr.mxu0 0.0
    %419 = vmatpush1.msra.mxu0 %v156
    %420 = vmatprep.subr.mxu0 0.0
    %421 = vmatpush1.msra.mxu0 %v157
    %422 = vmatprep.subr.mxu0 0.0
    %423 = vmatpush1.msra.mxu0 %v158
    %424 = vmatprep.subr.mxu0 0.0
    %425 = vmatpush1.msra.mxu0 %v159
    %426 = vmatprep.subr.mxu0 0.0
    %427 = vmatpush1.msra.mxu0 %v160
    %428 = vmatprep.subr.mxu0 0.0
    %429 = vmatpush1.msra.mxu0 %v161
    %430 = vmatprep.subr.mxu0 0.0
    %431 = vmatpush1.msra.mxu0 %v162
    %432 = vmatprep.subr.mxu0 0.0
    %433 = vmatpush1.msra.mxu0 %v163
    %434 = vmatprep.subr.mxu0 0.0
    %435 = vmatpush1.msra.mxu0 %v164
    %436 = vmatprep.subr.mxu0 0.0
    %437 = vmatpush1.msra.mxu0 %v165
    %438 = vmatprep.subr.mxu0 0.0
    %439 = vmatpush1.msra.mxu0 0.0
    %440 = vmatprep.subr.mxu0 0.0
    %441 = vmatpush1.msra.mxu0 0.0
    %442 = vmatprep.subr.mxu0 0.0
    %443 = vmatpush1.msra.mxu0 0.0
    %444 = vmatprep.subr.mxu0 0.0
    %445 = vmatpush1.msra.mxu0 0.0
    %446 = vmatprep.subr.mxu0 0.0
    %447 = vmatpush1.msra.mxu0 0.0
    %448 = vmatprep.subr.mxu0 0.0
    %449 = vmatpush1.msra.mxu0 0.0
    %450 = vmatprep.subr.mxu0 0.0
    %451 = vmatpush1.msra.mxu0 0.0
    %452 = vmatprep.subr.mxu0 0.0
    %453 = vmatpush1.msra.mxu0 0.0
    %454 = vmatprep.subr.mxu0 0.0
    %455 = vmatpush1.msra.mxu0 0.0
    %456 = vmatprep.subr.mxu0 0.0
    %457 = vmatpush1.msra.mxu0 0.0
    %458 = vmatprep.subr.mxu0 0.0
    %459 = vmatpush1.msra.mxu0 0.0
    %460 = vmatprep.subr.mxu0 0.0
    %461 = vmatpush1.msra.mxu0 0.0
    %462 = vmatprep.subr.mxu0 0.0
    %463 = vmatpush1.msra.mxu0 0.0
    %464 = vmatprep.subr.mxu0 0.0
    %465 = vmatpush1.msra.mxu0 0.0
    %466 = vmatprep.subr.mxu0 0.0
    %467 = vmatpush1.msra.mxu0 0.0
    %468 = vmatprep.subr.mxu0 0.0
    %469 = vmatpush1.msra.mxu0 0.0
    %470 = vmatprep.mubr.f32.mxu0 0.0
    %471 = vmatmul.mubr.f32.gmra.mrb[0].mxu0 %v402
    %v472 = vpop.f32.mrb[0].mxu0
    %v473 = vadd.f32 0.0, %v472
    %v474 = vpop.f32.mrb[0].mxu0
    %475 = vdwg.mxu0
    %476 = vst [vmem:[#allocation12] sm:$0xff] %v473
    %s477 = sadd.f32 %s176, 1.0
    %s478 = scalar_lea.vmem [#allocation3], 8
    %v479 = vld [vmem:[%s478] sm:$0xff]
    %480 = vmatprep.subr.mxu0 0.0
    %481 = vmatpush1.msra.mxu0 %v134
    %482 = vmatprep.subr.mxu0 0.0
    %483 = vmatpush1.msra.mxu0 %v135
    %484 = vmatprep.subr.mxu0 0.0
    %485 = vmatpush1.msra.mxu0 %v136
    %486 = vmatprep.subr.mxu0 0.0
    %487 = vmatpush1.msra.mxu0 %v137
    %488 = vmatprep.subr.mxu0 0.0
    %489 = vmatpush1.msra.mxu0 %v138
    %490 = vmatprep.subr.mxu0 0.0
    %491 = vmatpush1.msra.mxu0 %v139
    %492 = vmatprep.subr.mxu0 0.0
    %493 = vmatpush1.msra.mxu0 %v140
    %494 = vmatprep.subr.mxu0 0.0
    %495 = vmatpush1.msra.mxu0 %v141
    %496 = vmatprep.subr.mxu0 0.0
    %497 = vmatpush1.msra.mxu0 %v142
    %498 = vmatprep.subr.mxu0 0.0
    %499 = vmatpush1.msra.mxu0 %v143
    %500 = vmatprep.subr.mxu0 0.0
    %501 = vmatpush1.msra.mxu0 %v144
    %502 = vmatprep.subr.mxu0 0.0
    %503 = vmatpush1.msra.mxu0 %v145
    %504 = vmatprep.subr.mxu0 0.0
    %505 = vmatpush1.msra.mxu0 %v146
    %506 = vmatprep.subr.mxu0 0.0
    %507 = vmatpush1.msra.mxu0 %v147
    %508 = vmatprep.subr.mxu0 0.0
    %509 = vmatpush1.msra.mxu0 %v148
    %510 = vmatprep.subr.mxu0 0.0
    %511 = vmatpush1.msra.mxu0 %v149
    %512 = vmatprep.subr.mxu0 0.0
    %513 = vmatpush1.msra.mxu0 0.0
    %514 = vmatprep.subr.mxu0 0.0
    %515 = vmatpush1.msra.mxu0 0.0
    %516 = vmatprep.subr.mxu0 0.0
    %517 = vmatpush1.msra.mxu0 0.0
    %518 = vmatprep.subr.mxu0 0.0
    %519 = vmatpush1.msra.mxu0 0.0
    %520 = vmatprep.subr.mxu0 0.0
    %521 = vmatpush1.msra.mxu0 0.0
    %522 = vmatprep.subr.mxu0 0.0
    %523 = vmatpush1.msra.mxu0 0.0
    %524 = vmatprep.subr.mxu0 0.0
    %525 = vmatpush1.msra.mxu0 0.0
    %526 = vmatprep.subr.mxu0 0.0
    %527 = vmatpush1.msra.mxu0 0.0
    %528 = vmatprep.subr.mxu0 0.0
    %529 = vmatpush1.msra.mxu0 0.0
    %530 = vmatprep.subr.mxu0 0.0
    %531 = vmatpush1.msra.mxu0 0.0
    %532 = vmatprep.subr.mxu0 0.0
    %533 = vmatpush1.msra.mxu0 0.0
    %534 = vmatprep.subr.mxu0 0.0
    %535 = vmatpush1.msra.mxu0 0.0
    %536 = vmatprep.subr.mxu0 0.0
    %537 = vmatpush1.msra.mxu0 0.0
    %538 = vmatprep.subr.mxu0 0.0
    %539 = vmatpush1.msra.mxu0 0.0
    %540 = vmatprep.subr.mxu0 0.0
    %541 = vmatpush1.msra.mxu0 0.0
    %542 = vmatprep.subr.mxu0 0.0
    %543 = vmatpush1.msra.mxu0 0.0
    %544 = vmatprep.mubr.f32.mxu0 0.0
    %545 = vmatmul.mubr.f32.gmra.mrb[0].mxu0 %v402
    %v546 = vpop.f32.mrb[0].mxu0
    %v547 = vadd.f32 0.0, %v546
    %v548 = vpop.f32.mrb[0].mxu0
    %549 = vdwg.mxu0
    %550 = vmatprep.subr.mxu0 0.0
    %551 = vmatpush1.msra.mxu0 %v118
    %552 = vmatprep.subr.mxu0 0.0
    %553 = vmatpush1.msra.mxu0 %v119
    %554 = vmatprep.subr.mxu0 0.0
    %555 = vmatpush1.msra.mxu0 %v120
    %556 = vmatprep.subr.mxu0 0.0
    %557 = vmatpush1.msra.mxu0 %v121
    %558 = vmatprep.subr.mxu0 0.0
    %559 = vmatpush1.msra.mxu0 %v122
    %560 = vmatprep.subr.mxu0 0.0
    %561 = vmatpush1.msra.mxu0 %v123
    %562 = vmatprep.subr.mxu0 0.0
    %563 = vmatpush1.msra.mxu0 %v124
    %564 = vmatprep.subr.mxu0 0.0
    %565 = vmatpush1.msra.mxu0 %v125
    %566 = vmatprep.subr.mxu0 0.0
    %567 = vmatpush1.msra.mxu0 %v126
    %568 = vmatprep.subr.mxu0 0.0
    %569 = vmatpush1.msra.mxu0 %v127
    %570 = vmatprep.subr.mxu0 0.0
    %571 = vmatpush1.msra.mxu0 %v128
    %572 = vmatprep.subr.mxu0 0.0
    %573 = vmatpush1.msra.mxu0 %v129
    %574 = vmatprep.subr.mxu0 0.0
    %575 = vmatpush1.msra.mxu0 %v130
    %576 = vmatprep.subr.mxu0 0.0
    %577 = vmatpush1.msra.mxu0 %v131
    %578 = vmatprep.subr.mxu0 0.0
    %579 = vmatpush1.msra.mxu0 %v132
    %580 = vmatprep.subr.mxu0 0.0
    %581 = vmatpush1.msra.mxu0 %v133
    %582 = vmatprep.subr.mxu0 0.0
    %583 = vmatpush1.msra.mxu0 0.0
    %584 = vmatprep.subr.mxu0 0.0
    %585 = vmatpush1.msra.mxu0 0.0
    %586 = vmatprep.subr.mxu0 0.0
    %587 = vmatpush1.msra.mxu0 0.0
    %588 = vmatprep.subr.mxu0 0.0
    %589 = vmatpush1.msra.mxu0 0.0
    %590 = vmatprep.subr.mxu0 0.0
    %591 = vmatpush1.msra.mxu0 0.0
    %592 = vmatprep.subr.mxu0 0.0
    %593 = vmatpush1.msra.mxu0 0.0
    %594 = vmatprep.subr.mxu0 0.0
    %595 = vmatpush1.msra.mxu0 0.0
    %596 = vmatprep.subr.mxu0 0.0
    %597 = vmatpush1.msra.mxu0 0.0
    %598 = vmatprep.subr.mxu0 0.0
    %599 = vmatpush1.msra.mxu0 0.0
    %600 = vmatprep.subr.mxu0 0.0
    %601 = vmatpush1.msra.mxu0 0.0
    %602 = vmatprep.subr.mxu0 0.0
    %603 = vmatpush1.msra.mxu0 0.0
    %604 = vmatprep.subr.mxu0 0.0
    %605 = vmatpush1.msra.mxu0 0.0
    %606 = vmatprep.subr.mxu0 0.0
    %607 = vmatpush1.msra.mxu0 0.0
    %608 = vmatprep.subr.mxu0 0.0
    %609 = vmatpush1.msra.mxu0 0.0
    %610 = vmatprep.subr.mxu0 0.0
    %611 = vmatpush1.msra.mxu0 0.0
    %612 = vmatprep.subr.mxu0 0.0
    %613 = vmatpush1.msra.mxu0 0.0
    %614 = vmatprep.mubr.f32.mxu0 0.0
    %615 = vmatmul.mubr.f32.gmra.mrb[0].mxu0 %v547
    %v616 = vpop.f32.mrb[0].mxu0
    %v617 = vadd.f32 0.0, %v616
    %v618 = vpop.f32.mrb[0].mxu0
    %619 = vdwg.mxu0
    %620 = vmatprep.subr.mxu0 0.0
    %621 = vmatpush1.msra.mxu0 %v102
    %622 = vmatprep.subr.mxu0 0.0
    %623 = vmatpush1.msra.mxu0 %v103
    %624 = vmatprep.subr.mxu0 0.0
    %625 = vmatpush1.msra.mxu0 %v104
    %626 = vmatprep.subr.mxu0 0.0
    %627 = vmatpush1.msra.mxu0 %v105
    %628 = vmatprep.subr.mxu0 0.0
    %629 = vmatpush1.msra.mxu0 %v106
    %630 = vmatprep.subr.mxu0 0.0
    %631 = vmatpush1.msra.mxu0 %v107
    %632 = vmatprep.subr.mxu0 0.0
    %633 = vmatpush1.msra.mxu0 %v108
    %634 = vmatprep.subr.mxu0 0.0
    %635 = vmatpush1.msra.mxu0 %v109
    %636 = vmatprep.subr.mxu0 0.0
    %637 = vmatpush1.msra.mxu0 %v110
    %638 = vmatprep.subr.mxu0 0.0
    %639 = vmatpush1.msra.mxu0 %v111
    %640 = vmatprep.subr.mxu0 0.0
    %641 = vmatpush1.msra.mxu0 %v112
    %642 = vmatprep.subr.mxu0 0.0
    %643 = vmatpush1.msra.mxu0 %v113
    %644 = vmatprep.subr.mxu0 0.0
    %645 = vmatpush1.msra.mxu0 %v114
    %646 = vmatprep.subr.mxu0 0.0
    %647 = vmatpush1.msra.mxu0 %v115
    %648 = vmatprep.subr.mxu0 0.0
    %649 = vmatpush1.msra.mxu0 %v116
    %650 = vmatprep.subr.mxu0 0.0
    %651 = vmatpush1.msra.mxu0 %v117
    %652 = vmatprep.subr.mxu0 0.0
    %653 = vmatpush1.msra.mxu0 0.0
    %654 = vmatprep.subr.mxu0 0.0
    %655 = vmatpush1.msra.mxu0 0.0
    %656 = vmatprep.subr.mxu0 0.0
    %657 = vmatpush1.msra.mxu0 0.0
    %658 = vmatprep.subr.mxu0 0.0
    %659 = vmatpush1.msra.mxu0 0.0
    %660 = vmatprep.subr.mxu0 0.0
    %661 = vmatpush1.msra.mxu0 0.0
    %662 = vmatprep.subr.mxu0 0.0
    %663 = vmatpush1.msra.mxu0 0.0
    %664 = vmatprep.subr.mxu0 0.0
    %665 = vmatpush1.msra.mxu0 0.0
    %666 = vmatprep.subr.mxu0 0.0
    %667 = vmatpush1.msra.mxu0 0.0
    %668 = vmatprep.subr.mxu0 0.0
    %669 = vmatpush1.msra.mxu0 0.0
    %670 = vmatprep.subr.mxu0 0.0
    %671 = vmatpush1.msra.mxu0 0.0
    %672 = vmatprep.subr.mxu0 0.0
    %673 = vmatpush1.msra.mxu0 0.0
    %674 = vmatprep.subr.mxu0 0.0
    %675 = vmatpush1.msra.mxu0 0.0
    %676 = vmatprep.subr.mxu0 0.0
    %677 = vmatpush1.msra.mxu0 0.0
    %678 = vmatprep.subr.mxu0 0.0
    %679 = vmatpush1.msra.mxu0 0.0
    %680 = vmatprep.subr.mxu0 0.0
    %681 = vmatpush1.msra.mxu0 0.0
    %682 = vmatprep.subr.mxu0 0.0
    %683 = vmatpush1.msra.mxu0 0.0
    %684 = vmatprep.mubr.f32.mxu0 0.0
    %685 = vmatmul.mubr.f32.gmra.mrb[0].mxu0 %v479
    %v686 = vpop.f32.mrb[0].mxu0
    %v687 = vadd.f32 %v617, %v686
    %v688 = vpop.f32.mrb[0].mxu0
    %689 = vdwg.mxu0
    %v690 = vadd.f32 %v405, 2.0
    %v691 = vstv %s477
    %vm692 = vcmp.gt.f32.partialorder %v691, %v690
    %vm693 = vcmp.eq.f32.partialorder %v404, 0.0
    %vm694 = vmand %vm692, %vm693
    %v695 = vmul.f32 %v397, 0.9048374
    %v696 = vmul.f32 %v687, 0.095162585
    %v697 = vadd.f32 %v695, %v696
    %v698 = vsel %vm694, %v697, 0.0
    %v699 = vmul.f32 %v399, 0.60653067
    %v700 = vadd.f32 %v699, %v404
    %v701 = vmul.f32 %v402, 0.9672161
    %v702 = vmul.f32 %v700, 0.0327839
    %v703 = vadd.f32 %v701, %v702
    %vm704 = vcmp.gt.f32.partialorder %v698, 0.2
    %v705 = vsel %vm704, 1.0, 0.0
    %v706 = vsel %vm704, %v691, %v405
    %707 = vmatprep.subr.mxu0 0.0
    %708 = vmatpush1.msra.mxu0 %v150
    %709 = vmatprep.subr.mxu0 0.0
    %710 = vmatpush1.msra.mxu0 %v151
    %711 = vmatprep.subr.mxu0 0.0
    %712 = vmatpush1.msra.mxu0 %v152
    %713 = vmatprep.subr.mxu0 0.0
    %714 = vmatpush1.msra.mxu0 %v153
    %715 = vmatprep.subr.mxu0 0.0
    %716 = vmatpush1.msra.mxu0 %v154
    %717 = vmatprep.subr.mxu0 0.0
    %718 = vmatpush1.msra.mxu0 %v155
    %719 = vmatprep.subr.mxu0 0.0
    %720 = vmatpush1.msra.mxu0 %v156
    %721 = vmatprep.subr.mxu0 0.0
    %722 = vmatpush1.msra.mxu0 %v157
    %723 = vmatprep.subr.mxu0 0.0
    %724 = vmatpush1.msra.mxu0 %v158
    %725 = vmatprep.subr.mxu0 0.0
    %726 = vmatpush1.msra.mxu0 %v159
    %727 = vmatprep.subr.mxu0 0.0
    %728 = vmatpush1.msra.mxu0 %v160
    %729 = vmatprep.subr.mxu0 0.0
    %730 = vmatpush1.msra.mxu0 %v161
    %731 = vmatprep.subr.mxu0 0.0
    %732 = vmatpush1.msra.mxu0 %v162
    %733 = vmatprep.subr.mxu0 0.0
    %734 = vmatpush1.msra.mxu0 %v163
    %735 = vmatprep.subr.mxu0 0.0
    %736 = vmatpush1.msra.mxu0 %v164
    %737 = vmatprep.subr.mxu0 0.0
    %738 = vmatpush1.msra.mxu0 %v165
    %739 = vmatprep.subr.mxu0 0.0
    %740 = vmatpush1.msra.mxu0 0.0
    %741 = vmatprep.subr.mxu0 0.0
    %742 = vmatpush1.msra.mxu0 0.0
    %743 = vmatprep.subr.mxu0 0.0
    %744 = vmatpush1.msra.mxu0 0.0
    %745 = vmatprep.subr.mxu0 0.0
    %746 = vmatpush1.msra.mxu0 0.0
    %747 = vmatprep.subr.mxu0 0.0
    %748 = vmatpush1.msra.mxu0 0.0
    %749 = vmatprep.subr.mxu0 0.0
    %750 = vmatpush1.msra.mxu0 0.0
    %751 = vmatprep.subr.mxu0 0.0
    %752 = vmatpush1.msra.mxu0 0.0
    %753 = vmatprep.subr.mxu0 0.0
    %754 = vmatpush1.msra.mxu0 0.0
    %755 = vmatprep.subr.mxu0 0.0
    %756 = vmatpush1.msra.mxu0 0.0
    %757 = vmatprep.subr.mxu0 0.0
    %758 = vmatpush1.msra.mxu0 0.0
    %759 = vmatprep.subr.mxu0 0.0
    %760 = vmatpush1.msra.mxu0 0.0
    %761 = vmatprep.subr.mxu0 0.0
    %762 = vmatpush1.msra.mxu0 0.0
    %763 = vmatprep.subr.mxu0 0.0
    %764 = vmatpush1.msra.mxu0 0.0
    %765 = vmatprep.subr.mxu0 0.0
    %766 = vmatpush1.msra.mxu0 0.0
    %767 = vmatprep.subr.mxu0 0.0
    %768 = vmatpush1.msra.mxu0 0.0
    %769 = vmatprep.subr.mxu0 0.0
    %770 = vmatpush1.msra.mxu0 0.0
    %771 = vmatprep.mubr.f32.mxu0 0.0
    %772 = vmatmul.mubr.f32.gmra.mrb[0].mxu0 %v703
    %v773 = vpop.f32.mrb[0].mxu0
    %v774 = vadd.f32 0.0, %v773
    %v775 = vpop.f32.mrb[0].mxu0
    %776 = vdwg.mxu0
    %s777 = scalar_lea.vmem [#allocation12], 8
    %778 = vst [vmem:[%s777] sm:$0xff] %v774
    %s779 = sadd.f32 %s176, 2.0
    %s780 = scalar_lea.vmem [#allocation3], 16
    %v781 = vld [vmem:[%s780] sm:$0xff]
    %782 = vmatprep.subr.mxu0 0.0
    %783 = vmatpush1.msra.mxu0 %v134
    %784 = vmatprep.subr.mxu0 0.0
    %785 = vmatpush1.msra.mxu0 %v135
    %786 = vmatprep.subr.mxu0 0.0
    %787 = vmatpush1.msra.mxu0 %v136
    %788 = vmatprep.subr.mxu0 0.0
    %789 = vmatpush1.msra.mxu0 %v137
    %790 = vmatprep.subr.mxu0 0.0
    %791 = vmatpush1.msra.mxu0 %v138
    %792 = vmatprep.subr.mxu0 0.0
    %793 = vmatpush1.msra.mxu0 %v139
    %794 = vmatprep.subr.mxu0 0.0
    %795 = vmatpush1.msra.mxu0 %v140
    %796 = vmatprep.subr.mxu0 0.0
    %797 = vmatpush1.msra.mxu0 %v141
    %798 = vmatprep.subr.mxu0 0.0
    %799 = vmatpush1.msra.mxu0 %v142
    %800 = vmatprep.subr.mxu0 0.0
    %801 = vmatpush1.msra.mxu0 %v143
    %802 = vmatprep.subr.mxu0 0.0
    %803 = vmatpush1.msra.mxu0 %v144
    %804 = vmatprep.subr.mxu0 0.0
    %805 = vmatpush1.msra.mxu0 %v145
    %806 = vmatprep.subr.mxu0 0.0
    %807 = vmatpush1.msra.mxu0 %v146
    %808 = vmatprep.subr.mxu0 0.0
    %809 = vmatpush1.msra.mxu0 %v147
    %810 = vmatprep.subr.mxu0 0.0
    %811 = vmatpush1.msra.mxu0 %v148
    %812 = vmatprep.subr.mxu0 0.0
    %813 = vmatpush1.msra.mxu0 %v149
    %814 = vmatprep.subr.mxu0 0.0
    %815 = vmatpush1.msra.mxu0 0.0
    %816 = vmatprep.subr.mxu0 0.0
    %817 = vmatpush1.msra.mxu0 0.0
    %818 = vmatprep.subr.mxu0 0.0
    %819 = vmatpush1.msra.mxu0 0.0
    %820 = vmatprep.subr.mxu0 0.0
    %821 = vmatpush1.msra.mxu0 0.0
    %822 = vmatprep.subr.mxu0 0.0
    %823 = vmatpush1.msra.mxu0 0.0
    %824 = vmatprep.subr.mxu0 0.0
    %825 = vmatpush1.msra.mxu0 0.0
    %826 = vmatprep.subr.mxu0 0.0
    %827 = vmatpush1.msra.mxu0 0.0
    %828 = vmatprep.subr.mxu0 0.0
    %829 = vmatpush1.msra.mxu0 0.0
    %830 = vmatprep.subr.mxu0 0.0
    %831 = vmatpush1.msra.mxu0 0.0
    %832 = vmatprep.subr.mxu0 0.0
    %833 = vmatpush1.msra.mxu0 0.0
    %834 = vmatprep.subr.mxu0 0.0
    %835 = vmatpush1.msra.mxu0 0.0
    %836 = vmatprep.subr.mxu0 0.0
    %837 = vmatpush1.msra.mxu0 0.0
    %838 = vmatprep.subr.mxu0 0.0
    %839 = vmatpush1.msra.mxu0 0.0
    %840 = vmatprep.subr.mxu0 0.0
    %841 = vmatpush1.msra.mxu0 0.0
    %842 = vmatprep.subr.mxu0 0.0
    %843 = vmatpush1.msra.mxu0 0.0
    %844 = vmatprep.subr.mxu0 0.0
    %845 = vmatpush1.msra.mxu0 0.0
    %846 = vmatprep.mubr.f32.mxu0 0.0
    %847 = vmatmul.mubr.f32.gmra.mrb[0].mxu0 %v703
    %v848 = vpop.f32.mrb[0].mxu0
    %v849 = vadd.f32 0.0, %v848
    %v850 = vpop.f32.mrb[0].mxu0
    %851 = vdwg.mxu0
    %852 = vmatprep.subr.mxu0 0.0
    %853 = vmatpush1.msra.mxu0 %v118
    %854 = vmatprep.subr.mxu0 0.0
    %855 = vmatpush1.msra.mxu0 %v119
    %856 = vmatprep.subr.mxu0 0.0
    %857 = vmatpush1.msra.mxu0 %v120
    %858 = vmatprep.subr.mxu0 0.0
    %859 = vmatpush1.msra.mxu0 %v121
    %860 = vmatprep.subr.mxu0 0.0
    %861 = vmatpush1.msra.mxu0 %v122
    %862 = vmatprep.subr.mxu0 0.0
    %863 = vmatpush1.msra.mxu0 %v123
    %864 = vmatprep.subr.mxu0 0.0
    %865 = vmatpush1.msra.mxu0 %v124
    %866 = vmatprep.subr.mxu0 0.0
    %867 = vmatpush1.msra.mxu0 %v125
    %868 = vmatprep.subr.mxu0 0.0
    %869 = vmatpush1.msra.mxu0 %v126
    %870 = vmatprep.subr.mxu0 0.0
    %871 = vmatpush1.msra.mxu0 %v127
    %872 = vmatprep.subr.mxu0 0.0
    %873 = vmatpush1.msra.mxu0 %v128
    %874 = vmatprep.subr.mxu0 0.0
    %875 = vmatpush1.msra.mxu0 %v129
    %876 = vmatprep.subr.mxu0 0.0
    %877 = vmatpush1.msra.mxu0 %v130
    %878 = vmatprep.subr.mxu0 0.0
    %879 = vmatpush1.msra.mxu0 %v131
    %880 = vmatprep.subr.mxu0 0.0
    %881 = vmatpush1.msra.mxu0 %v132
    %882 = vmatprep.subr.mxu0 0.0
    %883 = vmatpush1.msra.mxu0 %v133
    %884 = vmatprep.subr.mxu0 0.0
    %885 = vmatpush1.msra.mxu0 0.0
    %886 = vmatprep.subr.mxu0 0.0
    %887 = vmatpush1.msra.mxu0 0.0
    %888 = vmatprep.subr.mxu0 0.0
    %889 = vmatpush1.msra.mxu0 0.0
    %890 = vmatprep.subr.mxu0 0.0
    %891 = vmatpush1.msra.mxu0 0.0
    %892 = vmatprep.subr.mxu0 0.0
    %893 = vmatpush1.msra.mxu0 0.0
    %894 = vmatprep.subr.mxu0 0.0
    %895 = vmatpush1.msra.mxu0 0.0
    %896 = vmatprep.subr.mxu0 0.0
    %897 = vmatpush1.msra.mxu0 0.0
    %898 = vmatprep.subr.mxu0 0.0
    %899 = vmatpush1.msra.mxu0 0.0
    %900 = vmatprep.subr.mxu0 0.0
    %901 = vmatpush1.msra.mxu0 0.0
    %902 = vmatprep.subr.mxu0 0.0
    %903 = vmatpush1.msra.mxu0 0.0
    %904 = vmatprep.subr.mxu0 0.0
    %905 = vmatpush1.msra.mxu0 0.0
    %906 = vmatprep.subr.mxu0 0.0
    %907 = vmatpush1.msra.mxu0 0.0
    %908 = vmatprep.subr.mxu0 0.0
    %909 = vmatpush1.msra.mxu0 0.0
    %910 = vmatprep.subr.mxu0 0.0
    %911 = vmatpush1.msra.mxu0 0.0
    %912 = vmatprep.subr.mxu0 0.0
    %913 = vmatpush1.msra.mxu0 0.0
    %914 = vmatprep.subr.mxu0 0.0
    %915 = vmatpush1.msra.mxu0 0.0
    %916 = vmatprep.mubr.f32.mxu0 0.0
    %917 = vmatmul.mubr.f32.gmra.mrb[0].mxu0 %v849
    %v918 = vpop.f32.mrb[0].mxu0
    %v919 = vadd.f32 0.0, %v918
    %v920 = vpop.f32.mrb[0].mxu0
    %921 = vdwg.mxu0
    %922 = vmatprep.subr.mxu0 0.0
    %923 = vmatpush1.msra.mxu0 %v102
    %924 = vmatprep.subr.mxu0 0.0
    %925 = vmatpush1.msra.mxu0 %v103
    %926 = vmatprep.subr.mxu0 0.0
    %927 = vmatpush1.msra.mxu0 %v104
    %928 = vmatprep.subr.mxu0 0.0
    %929 = vmatpush1.msra.mxu0 %v105
    %930 = vmatprep.subr.mxu0 0.0
    %931 = vmatpush1.msra.mxu0 %v106
    %932 = vmatprep.subr.mxu0 0.0
    %933 = vmatpush1.msra.mxu0 %v107
    %934 = vmatprep.subr.mxu0 0.0
    %935 = vmatpush1.msra.mxu0 %v108
    %936 = vmatprep.subr.mxu0 0.0
    %937 = vmatpush1.msra.mxu0 %v109
    %938 = vmatprep.subr.mxu0 0.0
    %939 = vmatpush1.msra.mxu0 %v110
    %940 = vmatprep.subr.mxu0 0.0
    %941 = vmatpush1.msra.mxu0 %v111
    %942 = vmatprep.subr.mxu0 0.0
    %943 = vmatpush1.msra.mxu0 %v112
    %944 = vmatprep.subr.mxu0 0.0
    %945 = vmatpush1.msra.mxu0 %v113
    %946 = vmatprep.subr.mxu0 0.0
    %947 = vmatpush1.msra.mxu0 %v114
    %948 = vmatprep.subr.mxu0 0.0
    %949 = vmatpush1.msra.mxu0 %v115
    %950 = vmatprep.subr.mxu0 0.0
    %951 = vmatpush1.msra.mxu0 %v116
    %952 = vmatprep.subr.mxu0 0.0
    %953 = vmatpush1.msra.mxu0 %v117
    %954 = vmatprep.subr.mxu0 0.0
    %955 = vmatpush1.msra.mxu0 0.0
    %956 = vmatprep.subr.mxu0 0.0
    %957 = vmatpush1.msra.mxu0 0.0
    %958 = vmatprep.subr.mxu0 0.0
    %959 = vmatpush1.msra.mxu0 0.0
    %960 = vmatprep.subr.mxu0 0.0
    %961 = vmatpush1.msra.mxu0 0.0
    %962 = vmatprep.subr.mxu0 0.0
    %963 = vmatpush1.msra.mxu0 0.0
    %964 = vmatprep.subr.mxu0 0.0
    %965 = vmatpush1.msra.mxu0 0.0
    %966 = vmatprep.subr.mxu0 0.0
    %967 = vmatpush1.msra.mxu0 0.0
    %968 = vmatprep.subr.mxu0 0.0
    %969 = vmatpush1.msra.mxu0 0.0
    %970 = vmatprep.subr.mxu0 0.0
    %971 = vmatpush1.msra.mxu0 0.0
    %972 = vmatprep.subr.mxu0 0.0
    %973 = vmatpush1.msra.mxu0 0.0
    %974 = vmatprep.subr.mxu0 0.0
    %975 = vmatpush1.msra.mxu0 0.0
    %976 = vmatprep.subr.mxu0 0.0
    %977 = vmatpush1.msra.mxu0 0.0
    %978 = vmatprep.subr.mxu0 0.0
    %979 = vmatpush1.msra.mxu0 0.0
    %980 = vmatprep.subr.mxu0 0.0
    %981 = vmatpush1.msra.mxu0 0.0
    %982 = vmatprep.subr.mxu0 0.0
    %983 = vmatpush1.msra.mxu0 0.0
    %984 = vmatprep.subr.mxu0 0.0
    %985 = vmatpush1.msra.mxu0 0.0
    %986 = vmatprep.mubr.f32.mxu0 0.0
    %987 = vmatmul.mubr.f32.gmra.mrb[0].mxu0 %v781
    %v988 = vpop.f32.mrb[0].mxu0
    %v989 = vadd.f32 %v919, %v988
    %v990 = vpop.f32.mrb[0].mxu0
    %991 = vdwg.mxu0
    %v992 = vadd.f32 %v706, 2.0
    %v993 = vstv %s779
    %vm994 = vcmp.gt.f32.partialorder %v993, %v992
    %vm995 = vcmp.eq.f32.partialorder %v705, 0.0
    %vm996 = vmand %vm994, %vm995
    %v997 = vmul.f32 %v698, 0.9048374
    %v998 = vmul.f32 %v989, 0.095162585
    %v999 = vadd.f32 %v997, %v998
    %v1000 = vsel %vm996, %v999, 0.0
    %v1001 = vmul.f32 %v700, 0.60653067
    %v1002 = vadd.f32 %v1001, %v705
    %v1003 = vmul.f32 %v703, 0.9672161
    %v1004 = vmul.f32 %v1002, 0.0327839
    %v1005 = vadd.f32 %v1003, %v1004
    %vm1006 = vcmp.gt.f32.partialorder %v1000, 0.2
    %v1007 = vsel %vm1006, 1.0, 0.0
    %v1008 = vsel %vm1006, %v993, %v706
    %1009 = vmatprep.subr.mxu0 0.0
    %1010 = vmatpush1.msra.mxu0 %v150
    %1011 = vmatprep.subr.mxu0 0.0
    %1012 = vmatpush1.msra.mxu0 %v151
    %1013 = vmatprep.subr.mxu0 0.0
    %1014 = vmatpush1.msra.mxu0 %v152
    %1015 = vmatprep.subr.mxu0 0.0
    %1016 = vmatpush1.msra.mxu0 %v153
    %1017 = vmatprep.subr.mxu0 0.0
    %1018 = vmatpush1.msra.mxu0 %v154
    %1019 = vmatprep.subr.mxu0 0.0
    %1020 = vmatpush1.msra.mxu0 %v155
    %1021 = vmatprep.subr.mxu0 0.0
    %1022 = vmatpush1.msra.mxu0 %v156
    %1023 = vmatprep.subr.mxu0 0.0
    %1024 = vmatpush1.msra.mxu0 %v157
    %1025 = vmatprep.subr.mxu0 0.0
    %1026 = vmatpush1.msra.mxu0 %v158
    %1027 = vmatprep.subr.mxu0 0.0
    %1028 = vmatpush1.msra.mxu0 %v159
    %1029 = vmatprep.subr.mxu0 0.0
    %1030 = vmatpush1.msra.mxu0 %v160
    %1031 = vmatprep.subr.mxu0 0.0
    %1032 = vmatpush1.msra.mxu0 %v161
    %1033 = vmatprep.subr.mxu0 0.0
    %1034 = vmatpush1.msra.mxu0 %v162
    %1035 = vmatprep.subr.mxu0 0.0
    %1036 = vmatpush1.msra.mxu0 %v163
    %1037 = vmatprep.subr.mxu0 0.0
    %1038 = vmatpush1.msra.mxu0 %v164
    %1039 = vmatprep.subr.mxu0 0.0
    %1040 = vmatpush1.msra.mxu0 %v165
    %1041 = vmatprep.subr.mxu0 0.0
    %1042 = vmatpush1.msra.mxu0 0.0
    %1043 = vmatprep.subr.mxu0 0.0
    %1044 = vmatpush1.msra.mxu0 0.0
    %1045 = vmatprep.subr.mxu0 0.0
    %1046 = vmatpush1.msra.mxu0 0.0
    %1047 = vmatprep.subr.mxu0 0.0
    %1048 = vmatpush1.msra.mxu0 0.0
    %1049 = vmatprep.subr.mxu0 0.0
    %1050 = vmatpush1.msra.mxu0 0.0
    %1051 = vmatprep.subr.mxu0 0.0
    %1052 = vmatpush1.msra.mxu0 0.0
    %1053 = vmatprep.subr.mxu0 0.0
    %1054 = vmatpush1.msra.mxu0 0.0
    %1055 = vmatprep.subr.mxu0 0.0
    %1056 = vmatpush1.msra.mxu0 0.0
    %1057 = vmatprep.subr.mxu0 0.0
    %1058 = vmatpush1.msra.mxu0 0.0
    %1059 = vmatprep.subr.mxu0 0.0
    %1060 = vmatpush1.msra.mxu0 0.0
    %1061 = vmatprep.subr.mxu0 0.0
    %1062 = vmatpush1.msra.mxu0 0.0
    %1063 = vmatprep.subr.mxu0 0.0
    %1064 = vmatpush1.msra.mxu0 0.0
    %1065 = vmatprep.subr.mxu0 0.0
    %1066 = vmatpush1.msra.mxu0 0.0
    %1067 = vmatprep.subr.mxu0 0.0
    %1068 = vmatpush1.msra.mxu0 0.0
    %1069 = vmatprep.subr.mxu0 0.0
    %1070 = vmatpush1.msra.mxu0 0.0
    %1071 = vmatprep.subr.mxu0 0.0
    %1072 = vmatpush1.msra.mxu0 0.0
    %1073 = vmatprep.mubr.f32.mxu0 0.0
    %1074 = vmatmul.mubr.f32.gmra.mrb[0].mxu0 %v1005
    %v1075 = vpop.f32.mrb[0].mxu0
    %v1076 = vadd.f32 0.0, %v1075
    %v1077 = vpop.f32.mrb[0].mxu0
    %1078 = vdwg.mxu0
    %s1079 = scalar_lea.vmem [#allocation12], 16
    %1080 = vst [vmem:[%s1079] sm:$0xff] %v1076
    %s1081 = sadd.f32 %s176, 3.0
    %s1082 = scalar_lea.vmem [#allocation3], 24
    %v1083 = vld [vmem:[%s1082] sm:$0xff]
    %1084 = vmatprep.subr.mxu0 0.0
    %1085 = vmatpush1.msra.mxu0 %v134
    %1086 = vmatprep.subr.mxu0 0.0
    %1087 = vmatpush1.msra.mxu0 %v135
    %1088 = vmatprep.subr.mxu0 0.0
    %1089 = vmatpush1.msra.mxu0 %v136
    %1090 = vmatprep.subr.mxu0 0.0
    %1091 = vmatpush1.msra.mxu0 %v137
    %1092 = vmatprep.subr.mxu0 0.0
    %1093 = vmatpush1.msra.mxu0 %v138
    %1094 = vmatprep.subr.mxu0 0.0
    %1095 = vmatpush1.msra.mxu0 %v139
    %1096 = vmatprep.subr.mxu0 0.0
    %1097 = vmatpush1.msra.mxu0 %v140
    %1098 = vmatprep.subr.mxu0 0.0
    %1099 = vmatpush1.msra.mxu0 %v141
    %1100 = vmatprep.subr.mxu0 0.0
    %1101 = vmatpush1.msra.mxu0 %v142
    %1102 = vmatprep.subr.mxu0 0.0
    %1103 = vmatpush1.msra.mxu0 %v143
    %1104 = vmatprep.subr.mxu0 0.0
    %1105 = vmatpush1.msra.mxu0 %v144
    %1106 = vmatprep.subr.mxu0 0.0
    %1107 = vmatpush1.msra.mxu0 %v145
    %1108 = vmatprep.subr.mxu0 0.0
    %1109 = vmatpush1.msra.mxu0 %v146
    %1110 = vmatprep.subr.mxu0 0.0
    %1111 = vmatpush1.msra.mxu0 %v147
    %1112 = vmatprep.subr.mxu0 0.0
    %1113 = vmatpush1.msra.mxu0 %v148
    %1114 = vmatprep.subr.mxu0 0.0
    %1115 = vmatpush1.msra.mxu0 %v149
    %1116 = vmatprep.subr.mxu0 0.0
    %1117 = vmatpush1.msra.mxu0 0.0
    %1118 = vmatprep.subr.mxu0 0.0
    %1119 = vmatpush1.msra.mxu0 0.0
    %1120 = vmatprep.subr.mxu0 0.0
    %1121 = vmatpush1.msra.mxu0 0.0
    %1122 = vmatprep.subr.mxu0 0.0
    %1123 = vmatpush1.msra.mxu0 0.0
    %1124 = vmatprep.subr.mxu0 0.0
    %1125 = vmatpush1.msra.mxu0 0.0
    %1126 = vmatprep.subr.mxu0 0.0
    %1127 = vmatpush1.msra.mxu0 0.0
    %1128 = vmatprep.subr.mxu0 0.0
    %1129 = vmatpush1.msra.mxu0 0.0
    %1130 = vmatprep.subr.mxu0 0.0
    %1131 = vmatpush1.msra.mxu0 0.0
    %1132 = vmatprep.subr.mxu0 0.0
    %1133 = vmatpush1.msra.mxu0 0.0
    %1134 = vmatprep.subr.mxu0 0.0
    %1135 = vmatpush1.msra.mxu0 0.0
    %1136 = vmatprep.subr.mxu0 0.0
    %1137 = vmatpush1.msra.mxu0 0.0
    %1138 = vmatprep.subr.mxu0 0.0
    %1139 = vmatpush1.msra.mxu0 0.0
    %1140 = vmatprep.subr.mxu0 0.0
    %1141 = vmatpush1.msra.mxu0 0.0
    %1142 = vmatprep.subr.mxu0 0.0
    %1143 = vmatpush1.msra.mxu0 0.0
    %1144 = vmatprep.subr.mxu0 0.0
    %1145 = vmatpush1.msra.mxu0 0.0
    %1146 = vmatprep.subr.mxu0 0.0
    %1147 = vmatpush1.msra.mxu0 0.0
    %1148 = vmatprep.mubr.f32.mxu0 0.0
    %1149 = vmatmul.mubr.f32.gmra.mrb[0].mxu0 %v1005
    %v1150 = vpop.f32.mrb[0].mxu0
    %v1151 = vadd.f32 0.0, %v1150
    %v1152 = vpop.f32.mrb[0].mxu0
    %1153 = vdwg.mxu0
    %1154 = vmatprep.subr.mxu0 0.0
    %1155 = vmatpush1.msra.mxu0 %v118
    %1156 = vmatprep.subr.mxu0 0.0
    %1157 = vmatpush1.msra.mxu0 %v119
    %1158 = vmatprep.subr.mxu0 0.0
    %1159 = vmatpush1.msra.mxu0 %v120
    %1160 = vmatprep.subr.mxu0 0.0
    %1161 = vmatpush1.msra.mxu0 %v121
    %1162 = vmatprep.subr.mxu0 0.0
    %1163 = vmatpush1.msra.mxu0 %v122
    %1164 = vmatprep.subr.mxu0 0.0
    %1165 = vmatpush1.msra.mxu0 %v123
    %1166 = vmatprep.subr.mxu0 0.0
    %1167 = vmatpush1.msra.mxu0 %v124
    %1168 = vmatprep.subr.mxu0 0.0
    %1169 = vmatpush1.msra.mxu0 %v125
    %1170 = vmatprep.subr.mxu0 0.0
    %1171 = vmatpush1.msra.mxu0 %v126
    %1172 = vmatprep.subr.mxu0 0.0
    %1173 = vmatpush1.msra.mxu0 %v127
    %1174 = vmatprep.subr.mxu0 0.0
    %1175 = vmatpush1.msra.mxu0 %v128
    %1176 = vmatprep.subr.mxu0 0.0
    %1177 = vmatpush1.msra.mxu0 %v129
    %1178 = vmatprep.subr.mxu0 0.0
    %1179 = vmatpush1.msra.mxu0 %v130
    %1180 = vmatprep.subr.mxu0 0.0
    %1181 = vmatpush1.msra.mxu0 %v131
    %1182 = vmatprep.subr.mxu0 0.0
    %1183 = vmatpush1.msra.mxu0 %v132
    %1184 = vmatprep.subr.mxu0 0.0
    %1185 = vmatpush1.msra.mxu0 %v133
    %1186 = vmatprep.subr.mxu0 0.0
    %1187 = vmatpush1.msra.mxu0 0.0
    %1188 = vmatprep.subr.mxu0 0.0
    %1189 = vmatpush1.msra.mxu0 0.0
    %1190 = vmatprep.subr.mxu0 0.0
    %1191 = vmatpush1.msra.mxu0 0.0
    %1192 = vmatprep.subr.mxu0 0.0
    %1193 = vmatpush1.msra.mxu0 0.0
    %1194 = vmatprep.subr.mxu0 0.0
    %1195 = vmatpush1.msra.mxu0 0.0
    %1196 = vmatprep.subr.mxu0 0.0
    %1197 = vmatpush1.msra.mxu0 0.0
    %1198 = vmatprep.subr.mxu0 0.0
    %1199 = vmatpush1.msra.mxu0 0.0
    %1200 = vmatprep.subr.mxu0 0.0
    %1201 = vmatpush1.msra.mxu0 0.0
    %1202 = vmatprep.subr.mxu0 0.0
    %1203 = vmatpush1.msra.mxu0 0.0
    %1204 = vmatprep.subr.mxu0 0.0
    %1205 = vmatpush1.msra.mxu0 0.0
    %1206 = vmatprep.subr.mxu0 0.0
    %1207 = vmatpush1.msra.mxu0 0.0
    %1208 = vmatprep.subr.mxu0 0.0
    %1209 = vmatpush1.msra.mxu0 0.0
    %1210 = vmatprep.subr.mxu0 0.0
    %1211 = vmatpush1.msra.mxu0 0.0
    %1212 = vmatprep.subr.mxu0 0.0
    %1213 = vmatpush1.msra.mxu0 0.0
    %1214 = vmatprep.subr.mxu0 0.0
    %1215 = vmatpush1.msra.mxu0 0.0
    %1216 = vmatprep.subr.mxu0 0.0
    %1217 = vmatpush1.msra.mxu0 0.0
    %1218 = vmatprep.mubr.f32.mxu0 0.0
    %1219 = vmatmul.mubr.f32.gmra.mrb[0].mxu0 %v1151
    %v1220 = vpop.f32.mrb[0].mxu0
    %v1221 = vadd.f32 0.0, %v1220
    %v1222 = vpop.f32.mrb[0].mxu0
    %1223 = vdwg.mxu0
    %1224 = vmatprep.subr.mxu0 0.0
    %1225 = vmatpush1.msra.mxu0 %v102
    %1226 = vmatprep.subr.mxu0 0.0
    %1227 = vmatpush1.msra.mxu0 %v103
    %1228 = vmatprep.subr.mxu0 0.0
    %1229 = vmatpush1.msra.mxu0 %v104
    %1230 = vmatprep.subr.mxu0 0.0
    %1231 = vmatpush1.msra.mxu0 %v105
    %1232 = vmatprep.subr.mxu0 0.0
    %1233 = vmatpush1.msra.mxu0 %v106
    %1234 = vmatprep.subr.mxu0 0.0
    %1235 = vmatpush1.msra.mxu0 %v107
    %1236 = vmatprep.subr.mxu0 0.0
    %1237 = vmatpush1.msra.mxu0 %v108
    %1238 = vmatprep.subr.mxu0 0.0
    %1239 = vmatpush1.msra.mxu0 %v109
    %1240 = vmatprep.subr.mxu0 0.0
    %1241 = vmatpush1.msra.mxu0 %v110
    %1242 = vmatprep.subr.mxu0 0.0
    %1243 = vmatpush1.msra.mxu0 %v111
    %1244 = vmatprep.subr.mxu0 0.0
    %1245 = vmatpush1.msra.mxu0 %v112
    %1246 = vmatprep.subr.mxu0 0.0
    %1247 = vmatpush1.msra.mxu0 %v113
    %1248 = vmatprep.subr.mxu0 0.0
    %1249 = vmatpush1.msra.mxu0 %v114
    %1250 = vmatprep.subr.mxu0 0.0
    %1251 = vmatpush1.msra.mxu0 %v115
    %1252 = vmatprep.subr.mxu0 0.0
    %1253 = vmatpush1.msra.mxu0 %v116
    %1254 = vmatprep.subr.mxu0 0.0
    %1255 = vmatpush1.msra.mxu0 %v117
    %1256 = vmatprep.subr.mxu0 0.0
    %1257 = vmatpush1.msra.mxu0 0.0
    %1258 = vmatprep.subr.mxu0 0.0
    %1259 = vmatpush1.msra.mxu0 0.0
    %1260 = vmatprep.subr.mxu0 0.0
    %1261 = vmatpush1.msra.mxu0 0.0
    %1262 = vmatprep.subr.mxu0 0.0
    %1263 = vmatpush1.msra.mxu0 0.0
    %1264 = vmatprep.subr.mxu0 0.0
    %1265 = vmatpush1.msra.mxu0 0.0
    %1266 = vmatprep.subr.mxu0 0.0
    %1267 = vmatpush1.msra.mxu0 0.0
    %1268 = vmatprep.subr.mxu0 0.0
    %1269 = vmatpush1.msra.mxu0 0.0
    %1270 = vmatprep.subr.mxu0 0.0
    %1271 = vmatpush1.msra.mxu0 0.0
    %1272 = vmatprep.subr.mxu0 0.0
    %1273 = vmatpush1.msra.mxu0 0.0
    %1274 = vmatprep.subr.mxu0 0.0
    %1275 = vmatpush1.msra.mxu0 0.0
    %1276 = vmatprep.subr.mxu0 0.0
    %1277 = vmatpush1.msra.mxu0 0.0
    %1278 = vmatprep.subr.mxu0 0.0
    %1279 = vmatpush1.msra.mxu0 0.0
    %1280 = vmatprep.subr.mxu0 0.0
    %1281 = vmatpush1.msra.mxu0 0.0
    %1282 = vmatprep.subr.mxu0 0.0
    %1283 = vmatpush1.msra.mxu0 0.0
    %1284 = vmatprep.subr.mxu0 0.0
    %1285 = vmatpush1.msra.mxu0 0.0
    %1286 = vmatprep.subr.mxu0 0.0
    %1287 = vmatpush1.msra.mxu0 0.0
    %1288 = vmatprep.mubr.f32.mxu0 0.0
    %1289 = vmatmul.mubr.f32.gmra.mrb[0].mxu0 %v1083
    %v1290 = vpop.f32.mrb[0].mxu0
    %v1291 = vadd.f32 %v1221, %v1290
    %v1292 = vpop.f32.mrb[0].mxu0
    %1293 = vdwg.mxu0
    %v1294 = vadd.f32 %v1008, 2.0
    %v1295 = vstv %s1081
    %vm1296 = vcmp.gt.f32.partialorder %v1295, %v1294
    %vm1297 = vcmp.eq.f32.partialorder %v1007, 0.0
    %vm1298 = vmand %vm1296, %vm1297
    %v1299 = vmul.f32 %v1000, 0.9048374
    %v1300 = vmul.f32 %v1291, 0.095162585
    %v1301 = vadd.f32 %v1299, %v1300
    %v1302 = vsel %vm1298, %v1301, 0.0
    %v1303 = vmul.f32 %v1002, 0.60653067
    %v1304 = vadd.f32 %v1303, %v1007
    %v1305 = vmul.f32 %v1005, 0.9672161
    %v1306 = vmul.f32 %v1304, 0.0327839
    %v1307 = vadd.f32 %v1305, %v1306
    %vm1308 = vcmp.gt.f32.partialorder %v1302, 0.2
    %v1309 = vsel %vm1308, 1.0, 0.0
    %v1310 = vsel %vm1308, %v1295, %v1008
    %1311 = vmatprep.subr.mxu0 0.0
    %1312 = vmatpush1.msra.mxu0 %v150
    %1313 = vmatprep.subr.mxu0 0.0
    %1314 = vmatpush1.msra.mxu0 %v151
    %1315 = vmatprep.subr.mxu0 0.0
    %1316 = vmatpush1.msra.mxu0 %v152
    %1317 = vmatprep.subr.mxu0 0.0
    %1318 = vmatpush1.msra.mxu0 %v153
    %1319 = vmatprep.subr.mxu0 0.0
    %1320 = vmatpush1.msra.mxu0 %v154
    %1321 = vmatprep.subr.mxu0 0.0
    %1322 = vmatpush1.msra.mxu0 %v155
    %1323 = vmatprep.subr.mxu0 0.0
    %1324 = vmatpush1.msra.mxu0 %v156
    %1325 = vmatprep.subr.mxu0 0.0
    %1326 = vmatpush1.msra.mxu0 %v157
    %1327 = vmatprep.subr.mxu0 0.0
    %1328 = vmatpush1.msra.mxu0 %v158
    %1329 = vmatprep.subr.mxu0 0.0
    %1330 = vmatpush1.msra.mxu0 %v159
    %1331 = vmatprep.subr.mxu0 0.0
    %1332 = vmatpush1.msra.mxu0 %v160
    %1333 = vmatprep.subr.mxu0 0.0
    %1334 = vmatpush1.msra.mxu0 %v161
    %1335 = vmatprep.subr.mxu0 0.0
    %1336 = vmatpush1.msra.mxu0 %v162
    %1337 = vmatprep.subr.mxu0 0.0
    %1338 = vmatpush1.msra.mxu0 %v163
    %1339 = vmatprep.subr.mxu0 0.0
    %1340 = vmatpush1.msra.mxu0 %v164
    %1341 = vmatprep.subr.mxu0 0.0
    %1342 = vmatpush1.msra.mxu0 %v165
    %1343 = vmatprep.subr.mxu0 0.0
    %1344 = vmatpush1.msra.mxu0 0.0
    %1345 = vmatprep.subr.mxu0 0.0
    %1346 = vmatpush1.msra.mxu0 0.0
    %1347 = vmatprep.subr.mxu0 0.0
    %1348 = vmatpush1.msra.mxu0 0.0
    %1349 = vmatprep.subr.mxu0 0.0
    %1350 = vmatpush1.msra.mxu0 0.0
    %1351 = vmatprep.subr.mxu0 0.0
    %1352 = vmatpush1.msra.mxu0 0.0
    %1353 = vmatprep.subr.mxu0 0.0
    %1354 = vmatpush1.msra.mxu0 0.0
    %1355 = vmatprep.subr.mxu0 0.0
    %1356 = vmatpush1.msra.mxu0 0.0
    %1357 = vmatprep.subr.mxu0 0.0
    %1358 = vmatpush1.msra.mxu0 0.0
    %1359 = vmatprep.subr.mxu0 0.0
    %1360 = vmatpush1.msra.mxu0 0.0
    %1361 = vmatprep.subr.mxu0 0.0
    %1362 = vmatpush1.msra.mxu0 0.0
    %1363 = vmatprep.subr.mxu0 0.0
    %1364 = vmatpush1.msra.mxu0 0.0
    %1365 = vmatprep.subr.mxu0 0.0
    %1366 = vmatpush1.msra.mxu0 0.0
    %1367 = vmatprep.subr.mxu0 0.0
    %1368 = vmatpush1.msra.mxu0 0.0
    %1369 = vmatprep.subr.mxu0 0.0
    %1370 = vmatpush1.msra.mxu0 0.0
    %1371 = vmatprep.subr.mxu0 0.0
    %1372 = vmatpush1.msra.mxu0 0.0
    %1373 = vmatprep.subr.mxu0 0.0
    %1374 = vmatpush1.msra.mxu0 0.0
    %1375 = vmatprep.mubr.f32.mxu0 0.0
    %1376 = vmatmul.mubr.f32.gmra.mrb[0].mxu0 %v1307
    %v1377 = vpop.f32.mrb[0].mxu0
    %v1378 = vadd.f32 0.0, %v1377
    %v1379 = vpop.f32.mrb[0].mxu0
    %1380 = vdwg.mxu0
    %s1381 = scalar_lea.vmem [#allocation12], 24
    %1382 = vst [vmem:[%s1381] sm:$0xff] %v1378
    %s1383 = sadd.f32 %s176, 4.0
    %s1384 = scalar_lea.vmem [#allocation3], 32
    %v1385 = vld [vmem:[%s1384] sm:$0xff]
    %1386 = vmatprep.subr.mxu0 0.0
    %1387 = vmatpush1.msra.mxu0 %v134
    %1388 = vmatprep.subr.mxu0 0.0
    %1389 = vmatpush1.msra.mxu0 %v135
    %1390 = vmatprep.subr.mxu0 0.0
    %1391 = vmatpush1.msra.mxu0 %v136
    %1392 = vmatprep.subr.mxu0 0.0
    %1393 = vmatpush1.msra.mxu0 %v137
    %1394 = vmatprep.subr.mxu0 0.0
    %1395 = vmatpush1.msra.mxu0 %v138
    %1396 = vmatprep.subr.mxu0 0.0
    %1397 = vmatpush1.msra.mxu0 %v139
    %1398 = vmatprep.subr.mxu0 0.0
    %1399 = vmatpush1.msra.mxu0 %v140
    %1400 = vmatprep.subr.mxu0 0.0
    %1401 = vmatpush1.msra.mxu0 %v141
    %1402 = vmatprep.subr.mxu0 0.0
    %1403 = vmatpush1.msra.mxu0 %v142
    %1404 = vmatprep.subr.mxu0 0.0
    %1405 = vmatpush1.msra.mxu0 %v143
    %1406 = vmatprep.subr.mxu0 0.0
    %1407 = vmatpush1.msra.mxu0 %v144
    %1408 = vmatprep.subr.mxu0 0.0
    %1409 = vmatpush1.msra.mxu0 %v145
    %1410 = vmatprep.subr.mxu0 0.0
    %1411 = vmatpush1.msra.mxu0 %v146
    %1412 = vmatprep.subr.mxu0 0.0
    %1413 = vmatpush1.msra.mxu0 %v147
    %1414 = vmatprep.subr.mxu0 0.0
    %1415 = vmatpush1.msra.mxu0 %v148
    %1416 = vmatprep.subr.mxu0 0.0
    %1417 = vmatpush1.msra.mxu0 %v149
    %1418 = vmatprep.subr.mxu0 0.0
    %1419 = vmatpush1.msra.mxu0 0.0
    %1420 = vmatprep.subr.mxu0 0.0
    %1421 = vmatpush1.msra.mxu0 0.0
    %1422 = vmatprep.subr.mxu0 0.0
    %1423 = vmatpush1.msra.mxu0 0.0
    %1424 = vmatprep.subr.mxu0 0.0
    %1425 = vmatpush1.msra.mxu0 0.0
    %1426 = vmatprep.subr.mxu0 0.0
    %1427 = vmatpush1.msra.mxu0 0.0
    %1428 = vmatprep.subr.mxu0 0.0
    %1429 = vmatpush1.msra.mxu0 0.0
    %1430 = vmatprep.subr.mxu0 0.0
    %1431 = vmatpush1.msra.mxu0 0.0
    %1432 = vmatprep.subr.mxu0 0.0
    %1433 = vmatpush1.msra.mxu0 0.0
    %1434 = vmatprep.subr.mxu0 0.0
    %1435 = vmatpush1.msra.mxu0 0.0
    %1436 = vmatprep.subr.mxu0 0.0
    %1437 = vmatpush1.msra.mxu0 0.0
    %1438 = vmatprep.subr.mxu0 0.0
    %1439 = vmatpush1.msra.mxu0 0.0
    %1440 = vmatprep.subr.mxu0 0.0
    %1441 = vmatpush1.msra.mxu0 0.0
    %1442 = vmatprep.subr.mxu0 0.0
    %1443 = vmatpush1.msra.mxu0 0.0
    %1444 = vmatprep.subr.mxu0 0.0
    %1445 = vmatpush1.msra.mxu0 0.0
    %1446 = vmatprep.subr.mxu0 0.0
    %1447 = vmatpush1.msra.mxu0 0.0
    %1448 = vmatprep.subr.mxu0 0.0
    %1449 = vmatpush1.msra.mxu0 0.0
    %1450 = vmatprep.mubr.f32.mxu0 0.0
    %1451 = vmatmul.mubr.f32.gmra.mrb[0].mxu0 %v1307
    %v1452 = vpop.f32.mrb[0].mxu0
    %v1453 = vadd.f32 0.0, %v1452
    %v1454 = vpop.f32.mrb[0].mxu0
    %1455 = vdwg.mxu0
    %1456 = vmatprep.subr.mxu0 0.0
    %1457 = vmatpush1.msra.mxu0 %v118
    %1458 = vmatprep.subr.mxu0 0.0
    %1459 = vmatpush1.msra.mxu0 %v119
    %1460 = vmatprep.subr.mxu0 0.0
    %1461 = vmatpush1.msra.mxu0 %v120
    %1462 = vmatprep.subr.mxu0 0.0
    %1463 = vmatpush1.msra.mxu0 %v121
    %1464 = vmatprep.subr.mxu0 0.0
    %1465 = vmatpush1.msra.mxu0 %v122
    %1466 = vmatprep.subr.mxu0 0.0
    %1467 = vmatpush1.msra.mxu0 %v123
    %1468 = vmatprep.subr.mxu0 0.0
    %1469 = vmatpush1.msra.mxu0 %v124
    %1470 = vmatprep.subr.mxu0 0.0
    %1471 = vmatpush1.msra.mxu0 %v125
    %1472 = vmatprep.subr.mxu0 0.0
    %1473 = vmatpush1.msra.mxu0 %v126
    %1474 = vmatprep.subr.mxu0 0.0
    %1475 = vmatpush1.msra.mxu0 %v127
    %1476 = vmatprep.subr.mxu0 0.0
    %1477 = vmatpush1.msra.mxu0 %v128
    %1478 = vmatprep.subr.mxu0 0.0
    %1479 = vmatpush1.msra.mxu0 %v129
    %1480 = vmatprep.subr.mxu0 0.0
    %1481 = vmatpush1.msra.mxu0 %v130
    %1482 = vmatprep.subr.mxu0 0.0
    %1483 = vmatpush1.msra.mxu0 %v131
    %1484 = vmatprep.subr.mxu0 0.0
    %1485 = vmatpush1.msra.mxu0 %v132
    %1486 = vmatprep.subr.mxu0 0.0
    %1487 = vmatpush1.msra.mxu0 %v133
    %1488 = vmatprep.subr.mxu0 0.0
    %1489 = vmatpush1.msra.mxu0 0.0
    %1490 = vmatprep.subr.mxu0 0.0
    %1491 = vmatpush1.msra.mxu0 0.0
    %1492 = vmatprep.subr.mxu0 0.0
    %1493 = vmatpush1.msra.mxu0 0.0
    %1494 = vmatprep.subr.mxu0 0.0
    %1495 = vmatpush1.msra.mxu0 0.0
    %1496 = vmatprep.subr.mxu0 0.0
    %1497 = vmatpush1.msra.mxu0 0.0
    %1498 = vmatprep.subr.mxu0 0.0
    %1499 = vmatpush1.msra.mxu0 0.0
    %1500 = vmatprep.subr.mxu0 0.0
    %1501 = vmatpush1.msra.mxu0 0.0
    %1502 = vmatprep.subr.mxu0 0.0
    %1503 = vmatpush1.msra.mxu0 0.0
    %1504 = vmatprep.subr.mxu0 0.0
    %1505 = vmatpush1.msra.mxu0 0.0
    %1506 = vmatprep.subr.mxu0 0.0
    %1507 = vmatpush1.msra.mxu0 0.0
    %1508 = vmatprep.subr.mxu0 0.0
    %1509 = vmatpush1.msra.mxu0 0.0
    %1510 = vmatprep.subr.mxu0 0.0
    %1511 = vmatpush1.msra.mxu0 0.0
    %1512 = vmatprep.subr.mxu0 0.0
    %1513 = vmatpush1.msra.mxu0 0.0
    %1514 = vmatprep.subr.mxu0 0.0
    %1515 = vmatpush1.msra.mxu0 0.0
    %1516 = vmatprep.subr.mxu0 0.0
    %1517 = vmatpush1.msra.mxu0 0.0
    %1518 = vmatprep.subr.mxu0 0.0
    %1519 = vmatpush1.msra.mxu0 0.0
    %1520 = vmatprep.mubr.f32.mxu0 0.0
    %1521 = vmatmul.mubr.f32.gmra.mrb[0].mxu0 %v1453
    %v1522 = vpop.f32.mrb[0].mxu0
    %v1523 = vadd.f32 0.0, %v1522
    %v1524 = vpop.f32.mrb[0].mxu0
    %1525 = vdwg.mxu0
    %1526 = vmatprep.subr.mxu0 0.0
    %1527 = vmatpush1.msra.mxu0 %v102
    %1528 = vmatprep.subr.mxu0 0.0
    %1529 = vmatpush1.msra.mxu0 %v103
    %1530 = vmatprep.subr.mxu0 0.0
    %1531 = vmatpush1.msra.mxu0 %v104
    %1532 = vmatprep.subr.mxu0 0.0
    %1533 = vmatpush1.msra.mxu0 %v105
    %1534 = vmatprep.subr.mxu0 0.0
    %1535 = vmatpush1.msra.mxu0 %v106
    %1536 = vmatprep.subr.mxu0 0.0
    %1537 = vmatpush1.msra.mxu0 %v107
    %1538 = vmatprep.subr.mxu0 0.0
    %1539 = vmatpush1.msra.mxu0 %v108
    %1540 = vmatprep.subr.mxu0 0.0
    %1541 = vmatpush1.msra.mxu0 %v109
    %1542 = vmatprep.subr.mxu0 0.0
    %1543 = vmatpush1.msra.mxu0 %v110
    %1544 = vmatprep.subr.mxu0 0.0
    %1545 = vmatpush1.msra.mxu0 %v111
    %1546 = vmatprep.subr.mxu0 0.0
    %1547 = vmatpush1.msra.mxu0 %v112
    %1548 = vmatprep.subr.mxu0 0.0
    %1549 = vmatpush1.msra.mxu0 %v113
    %1550 = vmatprep.subr.mxu0 0.0
    %1551 = vmatpush1.msra.mxu0 %v114
    %1552 = vmatprep.subr.mxu0 0.0
    %1553 = vmatpush1.msra.mxu0 %v115
    %1554 = vmatprep.subr.mxu0 0.0
    %1555 = vmatpush1.msra.mxu0 %v116
    %1556 = vmatprep.subr.mxu0 0.0
    %1557 = vmatpush1.msra.mxu0 %v117
    %1558 = vmatprep.subr.mxu0 0.0
    %1559 = vmatpush1.msra.mxu0 0.0
    %1560 = vmatprep.subr.mxu0 0.0
    %1561 = vmatpush1.msra.mxu0 0.0
    %1562 = vmatprep.subr.mxu0 0.0
    %1563 = vmatpush1.msra.mxu0 0.0
    %1564 = vmatprep.subr.mxu0 0.0
    %1565 = vmatpush1.msra.mxu0 0.0
    %1566 = vmatprep.subr.mxu0 0.0
    %1567 = vmatpush1.msra.mxu0 0.0
    %1568 = vmatprep.subr.mxu0 0.0
    %1569 = vmatpush1.msra.mxu0 0.0
    %1570 = vmatprep.subr.mxu0 0.0
    %1571 = vmatpush1.msra.mxu0 0.0
    %1572 = vmatprep.subr.mxu0 0.0
    %1573 = vmatpush1.msra.mxu0 0.0
    %1574 = vmatprep.subr.mxu0 0.0
    %1575 = vmatpush1.msra.mxu0 0.0
    %1576 = vmatprep.subr.mxu0 0.0
    %1577 = vmatpush1.msra.mxu0 0.0
    %1578 = vmatprep.subr.mxu0 0.0
    %1579 = vmatpush1.msra.mxu0 0.0
    %1580 = vmatprep.subr.mxu0 0.0
    %1581 = vmatpush1.msra.mxu0 0.0
    %1582 = vmatprep.subr.mxu0 0.0
    %1583 = vmatpush1.msra.mxu0 0.0
    %1584 = vmatprep.subr.mxu0 0.0
    %1585 = vmatpush1.msra.mxu0 0.0
    %1586 = vmatprep.subr.mxu0 0.0
    %1587 = vmatpush1.msra.mxu0 0.0
    %1588 = vmatprep.subr.mxu0 0.0
    %1589 = vmatpush1.msra.mxu0 0.0
    %1590 = vmatprep.mubr.f32.mxu0 0.0
    %1591 = vmatmul.mubr.f32.gmra.mrb[0].mxu0 %v1385
    %v1592 = vpop.f32.mrb[0].mxu0
    %v1593 = vadd.f32 %v1523, %v1592
    %v1594 = vpop.f32.mrb[0].mxu0
    %1595 = vdwg.mxu0
    %v1596 = vadd.f32 %v1310, 2.0
    %v1597 = vstv %s1383
    %vm1598 = vcmp.gt.f32.partialorder %v1597, %v1596
    %vm1599 = vcmp.eq.f32.partialorder %v1309, 0.0
    %vm1600 = vmand %vm1598, %vm1599
    %v1601 = vmul.f32 %v1302, 0.9048374
    %v1602 = vmul.f32 %v1593, 0.095162585
    %v1603 = vadd.f32 %v1601, %v1602
    %v1604 = vsel %vm1600, %v1603, 0.0
    %v1605 = vmul.f32 %v1304, 0.60653067
    %v1606 = vadd.f32 %v1605, %v1309
    %v1607 = vmul.f32 %v1307, 0.9672161
    %v1608 = vmul.f32 %v1606, 0.0327839
    %v1609 = vadd.f32 %v1607, %v1608
    %vm1610 = vcmp.gt.f32.partialorder %v1604, 0.2
    %v1611 = vsel %vm1610, 1.0, 0.0
    %v1612 = vsel %vm1610, %v1597, %v1310
    %1613 = vmatprep.subr.mxu0 0.0
    %1614 = vmatpush1.msra.mxu0 %v150
    %1615 = vmatprep.subr.mxu0 0.0
    %1616 = vmatpush1.msra.mxu0 %v151
    %1617 = vmatprep.subr.mxu0 0.0
    %1618 = vmatpush1.msra.mxu0 %v152
    %1619 = vmatprep.subr.mxu0 0.0
    %1620 = vmatpush1.msra.mxu0 %v153
    %1621 = vmatprep.subr.mxu0 0.0
    %1622 = vmatpush1.msra.mxu0 %v154
    %1623 = vmatprep.subr.mxu0 0.0
    %1624 = vmatpush1.msra.mxu0 %v155
    %1625 = vmatprep.subr.mxu0 0.0
    %1626 = vmatpush1.msra.mxu0 %v156
    %1627 = vmatprep.subr.mxu0 0.0
    %1628 = vmatpush1.msra.mxu0 %v157
    %1629 = vmatprep.subr.mxu0 0.0
    %1630 = vmatpush1.msra.mxu0 %v158
    %1631 = vmatprep.subr.mxu0 0.0
    %1632 = vmatpush1.msra.mxu0 %v159
    %1633 = vmatprep.subr.mxu0 0.0
    %1634 = vmatpush1.msra.mxu0 %v160
    %1635 = vmatprep.subr.mxu0 0.0
    %1636 = vmatpush1.msra.mxu0 %v161
    %1637 = vmatprep.subr.mxu0 0.0
    %1638 = vmatpush1.msra.mxu0 %v162
    %1639 = vmatprep.subr.mxu0 0.0
    %1640 = vmatpush1.msra.mxu0 %v163
    %1641 = vmatprep.subr.mxu0 0.0
    %1642 = vmatpush1.msra.mxu0 %v164
    %1643 = vmatprep.subr.mxu0 0.0
    %1644 = vmatpush1.msra.mxu0 %v165
    %1645 = vmatprep.subr.mxu0 0.0
    %1646 = vmatpush1.msra.mxu0 0.0
    %1647 = vmatprep.subr.mxu0 0.0
    %1648 = vmatpush1.msra.mxu0 0.0
    %1649 = vmatprep.subr.mxu0 0.0
    %1650 = vmatpush1.msra.mxu0 0.0
    %1651 = vmatprep.subr.mxu0 0.0
    %1652 = vmatpush1.msra.mxu0 0.0
    %1653 = vmatprep.subr.mxu0 0.0
    %1654 = vmatpush1.msra.mxu0 0.0
    %1655 = vmatprep.subr.mxu0 0.0
    %1656 = vmatpush1.msra.mxu0 0.0
    %1657 = vmatprep.subr.mxu0 0.0
    %1658 = vmatpush1.msra.mxu0 0.0
    %1659 = vmatprep.subr.mxu0 0.0
    %1660 = vmatpush1.msra.mxu0 0.0
    %1661 = vmatprep.subr.mxu0 0.0
    %1662 = vmatpush1.msra.mxu0 0.0
    %1663 = vmatprep.subr.mxu0 0.0
    %1664 = vmatpush1.msra.mxu0 0.0
    %1665 = vmatprep.subr.mxu0 0.0
    %1666 = vmatpush1.msra.mxu0 0.0
    %1667 = vmatprep.subr.mxu0 0.0
    %1668 = vmatpush1.msra.mxu0 0.0
    %1669 = vmatprep.subr.mxu0 0.0
    %1670 = vmatpush1.msra.mxu0 0.0
    %1671 = vmatprep.subr.mxu0 0.0
    %1672 = vmatpush1.msra.mxu0 0.0
    %1673 = vmatprep.subr.mxu0 0.0
    %1674 = vmatpush1.msra.mxu0 0.0
    %1675 = vmatprep.subr.mxu0 0.0
    %1676 = vmatpush1.msra.mxu0 0.0
    %1677 = vmatprep.mubr.f32.mxu0 0.0
    %1678 = vmatmul.mubr.f32.gmra.mrb[0].mxu0 %v1609
    %v1679 = vpop.f32.mrb[0].mxu0
    %v1680 = vadd.f32 0.0, %v1679
    %v1681 = vpop.f32.mrb[0].mxu0
    %1682 = vdwg.mxu0
    %s1683 = scalar_lea.vmem [#allocation12], 32
    %1684 = vst [vmem:[%s1683] sm:$0xff] %v1680
    %s1685 = sadd.f32 %s176, 5.0
    %s1686 = scalar_lea.vmem [#allocation3], 40
    %v1687 = vld [vmem:[%s1686] sm:$0xff]
    %1688 = vmatprep.subr.mxu0 0.0
    %1689 = vmatpush1.msra.mxu0 %v134
    %1690 = vmatprep.subr.mxu0 0.0
    %1691 = vmatpush1.msra.mxu0 %v135
    %1692 = vmatprep.subr.mxu0 0.0
    %1693 = vmatpush1.msra.mxu0 %v136
    %1694 = vmatprep.subr.mxu0 0.0
    %1695 = vmatpush1.msra.mxu0 %v137
    %1696 = vmatprep.subr.mxu0 0.0
    %1697 = vmatpush1.msra.mxu0 %v138
    %1698 = vmatprep.subr.mxu0 0.0
    %1699 = vmatpush1.msra.mxu0 %v139
    %1700 = vmatprep.subr.mxu0 0.0
    %1701 = vmatpush1.msra.mxu0 %v140
    %1702 = vmatprep.subr.mxu0 0.0
    %1703 = vmatpush1.msra.mxu0 %v141
    %1704 = vmatprep.subr.mxu0 0.0
    %1705 = vmatpush1.msra.mxu0 %v142
    %1706 = vmatprep.subr.mxu0 0.0
    %1707 = vmatpush1.msra.mxu0 %v143
    %1708 = vmatprep.subr.mxu0 0.0
    %1709 = vmatpush1.msra.mxu0 %v144
    %1710 = vmatprep.subr.mxu0 0.0
    %1711 = vmatpush1.msra.mxu0 %v145
    %1712 = vmatprep.subr.mxu0 0.0
    %1713 = vmatpush1.msra.mxu0 %v146
    %1714 = vmatprep.subr.mxu0 0.0
    %1715 = vmatpush1.msra.mxu0 %v147
    %1716 = vmatprep.subr.mxu0 0.0
    %1717 = vmatpush1.msra.mxu0 %v148
    %1718 = vmatprep.subr.mxu0 0.0
    %1719 = vmatpush1.msra.mxu0 %v149
    %1720 = vmatprep.subr.mxu0 0.0
    %1721 = vmatpush1.msra.mxu0 0.0
    %1722 = vmatprep.subr.mxu0 0.0
    %1723 = vmatpush1.msra.mxu0 0.0
    %1724 = vmatprep.subr.mxu0 0.0
    %1725 = vmatpush1.msra.mxu0 0.0
    %1726 = vmatprep.subr.mxu0 0.0
    %1727 = vmatpush1.msra.mxu0 0.0
    %1728 = vmatprep.subr.mxu0 0.0
    %1729 = vmatpush1.msra.mxu0 0.0
    %1730 = vmatprep.subr.mxu0 0.0
    %1731 = vmatpush1.msra.mxu0 0.0
    %1732 = vmatprep.subr.mxu0 0.0
    %1733 = vmatpush1.msra.mxu0 0.0
    %1734 = vmatprep.subr.mxu0 0.0
    %1735 = vmatpush1.msra.mxu0 0.0
    %1736 = vmatprep.subr.mxu0 0.0
    %1737 = vmatpush1.msra.mxu0 0.0
    %1738 = vmatprep.subr.mxu0 0.0
    %1739 = vmatpush1.msra.mxu0 0.0
    %1740 = vmatprep.subr.mxu0 0.0
    %1741 = vmatpush1.msra.mxu0 0.0
    %1742 = vmatprep.subr.mxu0 0.0
    %1743 = vmatpush1.msra.mxu0 0.0
    %1744 = vmatprep.subr.mxu0 0.0
    %1745 = vmatpush1.msra.mxu0 0.0
    %1746 = vmatprep.subr.mxu0 0.0
    %1747 = vmatpush1.msra.mxu0 0.0
    %1748 = vmatprep.subr.mxu0 0.0
    %1749 = vmatpush1.msra.mxu0 0.0
    %1750 = vmatprep.subr.mxu0 0.0
    %1751 = vmatpush1.msra.mxu0 0.0
    %1752 = vmatprep.mubr.f32.mxu0 0.0
    %1753 = vmatmul.mubr.f32.gmra.mrb[0].mxu0 %v1609
    %v1754 = vpop.f32.mrb[0].mxu0
    %v1755 = vadd.f32 0.0, %v1754
    %v1756 = vpop.f32.mrb[0].mxu0
    %1757 = vdwg.mxu0
    %1758 = vmatprep.subr.mxu0 0.0
    %1759 = vmatpush1.msra.mxu0 %v118
    %1760 = vmatprep.subr.mxu0 0.0
    %1761 = vmatpush1.msra.mxu0 %v119
    %1762 = vmatprep.subr.mxu0 0.0
    %1763 = vmatpush1.msra.mxu0 %v120
    %1764 = vmatprep.subr.mxu0 0.0
    %1765 = vmatpush1.msra.mxu0 %v121
    %1766 = vmatprep.subr.mxu0 0.0
    %1767 = vmatpush1.msra.mxu0 %v122
    %1768 = vmatprep.subr.mxu0 0.0
    %1769 = vmatpush1.msra.mxu0 %v123
    %1770 = vmatprep.subr.mxu0 0.0
    %1771 = vmatpush1.msra.mxu0 %v124
    %1772 = vmatprep.subr.mxu0 0.0
    %1773 = vmatpush1.msra.mxu0 %v125
    %1774 = vmatprep.subr.mxu0 0.0
    %1775 = vmatpush1.msra.mxu0 %v126
    %1776 = vmatprep.subr.mxu0 0.0
    %1777 = vmatpush1.msra.mxu0 %v127
    %1778 = vmatprep.subr.mxu0 0.0
    %1779 = vmatpush1.msra.mxu0 %v128
    %1780 = vmatprep.subr.mxu0 0.0
    %1781 = vmatpush1.msra.mxu0 %v129
    %1782 = vmatprep.subr.mxu0 0.0
    %1783 = vmatpush1.msra.mxu0 %v130
    %1784 = vmatprep.subr.mxu0 0.0
    %1785 = vmatpush1.msra.mxu0 %v131
    %1786 = vmatprep.subr.mxu0 0.0
    %1787 = vmatpush1.msra.mxu0 %v132
    %1788 = vmatprep.subr.mxu0 0.0
    %1789 = vmatpush1.msra.mxu0 %v133
    %1790 = vmatprep.subr.mxu0 0.0
    %1791 = vmatpush1.msra.mxu0 0.0
    %1792 = vmatprep.subr.mxu0 0.0
    %1793 = vmatpush1.msra.mxu0 0.0
    %1794 = vmatprep.subr.mxu0 0.0
    %1795 = vmatpush1.msra.mxu0 0.0
    %1796 = vmatprep.subr.mxu0 0.0
    %1797 = vmatpush1.msra.mxu0 0.0
    %1798 = vmatprep.subr.mxu0 0.0
    %1799 = vmatpush1.msra.mxu0 0.0
    %1800 = vmatprep.subr.mxu0 0.0
    %1801 = vmatpush1.msra.mxu0 0.0
    %1802 = vmatprep.subr.mxu0 0.0
    %1803 = vmatpush1.msra.mxu0 0.0
    %1804 = vmatprep.subr.mxu0 0.0
    %1805 = vmatpush1.msra.mxu0 0.0
    %1806 = vmatprep.subr.mxu0 0.0
    %1807 = vmatpush1.msra.mxu0 0.0
    %1808 = vmatprep.subr.mxu0 0.0
    %1809 = vmatpush1.msra.mxu0 0.0
    %1810 = vmatprep.subr.mxu0 0.0
    %1811 = vmatpush1.msra.mxu0 0.0
    %1812 = vmatprep.subr.mxu0 0.0
    %1813 = vmatpush1.msra.mxu0 0.0
    %1814 = vmatprep.subr.mxu0 0.0
    %1815 = vmatpush1.msra.mxu0 0.0
    %1816 = vmatprep.subr.mxu0 0.0
    %1817 = vmatpush1.msra.mxu0 0.0
    %1818 = vmatprep.subr.mxu0 0.0
    %1819 = vmatpush1.msra.mxu0 0.0
    %1820 = vmatprep.subr.mxu0 0.0
    %1821 = vmatpush1.msra.mxu0 0.0
    %1822 = vmatprep.mubr.f32.mxu0 0.0
    %1823 = vmatmul.mubr.f32.gmra.mrb[0].mxu0 %v1755
    %v1824 = vpop.f32.mrb[0].mxu0
    %v1825 = vadd.f32 0.0, %v1824
    %v1826 = vpop.f32.mrb[0].mxu0
    %1827 = vdwg.mxu0
    %1828 = vmatprep.subr.mxu0 0.0
    %1829 = vmatpush1.msra.mxu0 %v102
    %1830 = vmatprep.subr.mxu0 0.0
    %1831 = vmatpush1.msra.mxu0 %v103
    %1832 = vmatprep.subr.mxu0 0.0
    %1833 = vmatpush1.msra.mxu0 %v104
    %1834 = vmatprep.subr.mxu0 0.0
    %1835 = vmatpush1.msra.mxu0 %v105
    %1836 = vmatprep.subr.mxu0 0.0
    %1837 = vmatpush1.msra.mxu0 %v106
    %1838 = vmatprep.subr.mxu0 0.0
    %1839 = vmatpush1.msra.mxu0 %v107
    %1840 = vmatprep.subr.mxu0 0.0
    %1841 = vmatpush1.msra.mxu0 %v108
    %1842 = vmatprep.subr.mxu0 0.0
    %1843 = vmatpush1.msra.mxu0 %v109
    %1844 = vmatprep.subr.mxu0 0.0
    %1845 = vmatpush1.msra.mxu0 %v110
    %1846 = vmatprep.subr.mxu0 0.0
    %1847 = vmatpush1.msra.mxu0 %v111
    %1848 = vmatprep.subr.mxu0 0.0
    %1849 = vmatpush1.msra.mxu0 %v112
    %1850 = vmatprep.subr.mxu0 0.0
    %1851 = vmatpush1.msra.mxu0 %v113
    %1852 = vmatprep.subr.mxu0 0.0
    %1853 = vmatpush1.msra.mxu0 %v114
    %1854 = vmatprep.subr.mxu0 0.0
    %1855 = vmatpush1.msra.mxu0 %v115
    %1856 = vmatprep.subr.mxu0 0.0
    %1857 = vmatpush1.msra.mxu0 %v116
    %1858 = vmatprep.subr.mxu0 0.0
    %1859 = vmatpush1.msra.mxu0 %v117
    %1860 = vmatprep.subr.mxu0 0.0
    %1861 = vmatpush1.msra.mxu0 0.0
    %1862 = vmatprep.subr.mxu0 0.0
    %1863 = vmatpush1.msra.mxu0 0.0
    %1864 = vmatprep.subr.mxu0 0.0
    %1865 = vmatpush1.msra.mxu0 0.0
    %1866 = vmatprep.subr.mxu0 0.0
    %1867 = vmatpush1.msra.mxu0 0.0
    %1868 = vmatprep.subr.mxu0 0.0
    %1869 = vmatpush1.msra.mxu0 0.0
    %1870 = vmatprep.subr.mxu0 0.0
    %1871 = vmatpush1.msra.mxu0 0.0
    %1872 = vmatprep.subr.mxu0 0.0
    %1873 = vmatpush1.msra.mxu0 0.0
    %1874 = vmatprep.subr.mxu0 0.0
    %1875 = vmatpush1.msra.mxu0 0.0
    %1876 = vmatprep.subr.mxu0 0.0
    %1877 = vmatpush1.msra.mxu0 0.0
    %1878 = vmatprep.subr.mxu0 0.0
    %1879 = vmatpush1.msra.mxu0 0.0
    %1880 = vmatprep.subr.mxu0 0.0
    %1881 = vmatpush1.msra.mxu0 0.0
    %1882 = vmatprep.subr.mxu0 0.0
    %1883 = vmatpush1.msra.mxu0 0.0
    %1884 = vmatprep.subr.mxu0 0.0
    %1885 = vmatpush1.msra.mxu0 0.0
    %1886 = vmatprep.subr.mxu0 0.0
    %1887 = vmatpush1.msra.mxu0 0.0
    %1888 = vmatprep.subr.mxu0 0.0
    %1889 = vmatpush1.msra.mxu0 0.0
    %1890 = vmatprep.subr.mxu0 0.0
    %1891 = vmatpush1.msra.mxu0 0.0
    %1892 = vmatprep.mubr.f32.mxu0 0.0
    %1893 = vmatmul.mubr.f32.gmra.mrb[0].mxu0 %v1687
    %v1894 = vpop.f32.mrb[0].mxu0
    %v1895 = vadd.f32 %v1825, %v1894
    %v1896 = vpop.f32.mrb[0].mxu0
    %1897 = vdwg.mxu0
    %v1898 = vadd.f32 %v1612, 2.0
    %v1899 = vstv %s1685
    %vm1900 = vcmp.gt.f32.partialorder %v1899, %v1898
    %vm1901 = vcmp.eq.f32.partialorder %v1611, 0.0
    %vm1902 = vmand %vm1900, %vm1901
    %v1903 = vmul.f32 %v1604, 0.9048374
    %v1904 = vmul.f32 %v1895, 0.095162585
    %v1905 = vadd.f32 %v1903, %v1904
    %v1906 = vsel %vm1902, %v1905, 0.0
    %v1907 = vmul.f32 %v1606, 0.60653067
    %v1908 = vadd.f32 %v1907, %v1611
    %v1909 = vmul.f32 %v1609, 0.9672161
    %v1910 = vmul.f32 %v1908, 0.0327839
    %v1911 = vadd.f32 %v1909, %v1910
    %vm1912 = vcmp.gt.f32.partialorder %v1906, 0.2
    %v1913 = vsel %vm1912, 1.0, 0.0
    %v1914 = vsel %vm1912, %v1899, %v1612
    %1915 = vmatprep.subr.mxu0 0.0
    %1916 = vmatpush1.msra.mxu0 %v150
    %1917 = vmatprep.subr.mxu0 0.0
    %1918 = vmatpush1.msra.mxu0 %v151
    %1919 = vmatprep.subr.mxu0 0.0
    %1920 = vmatpush1.msra.mxu0 %v152
    %1921 = vmatprep.subr.mxu0 0.0
    %1922 = vmatpush1.msra.mxu0 %v153
    %1923 = vmatprep.subr.mxu0 0.0
    %1924 = vmatpush1.msra.mxu0 %v154
    %1925 = vmatprep.subr.mxu0 0.0
    %1926 = vmatpush1.msra.mxu0 %v155
    %1927 = vmatprep.subr.mxu0 0.0
    %1928 = vmatpush1.msra.mxu0 %v156
    %1929 = vmatprep.subr.mxu0 0.0
    %1930 = vmatpush1.msra.mxu0 %v157
    %1931 = vmatprep.subr.mxu0 0.0
    %1932 = vmatpush1.msra.mxu0 %v158
    %1933 = vmatprep.subr.mxu0 0.0
    %1934 = vmatpush1.msra.mxu0 %v159
    %1935 = vmatprep.subr.mxu0 0.0
    %1936 = vmatpush1.msra.mxu0 %v160
    %1937 = vmatprep.subr.mxu0 0.0
    %1938 = vmatpush1.msra.mxu0 %v161
    %1939 = vmatprep.subr.mxu0 0.0
    %1940 = vmatpush1.msra.mxu0 %v162
    %1941 = vmatprep.subr.mxu0 0.0
    %1942 = vmatpush1.msra.mxu0 %v163
    %1943 = vmatprep.subr.mxu0 0.0
    %1944 = vmatpush1.msra.mxu0 %v164
    %1945 = vmatprep.subr.mxu0 0.0
    %1946 = vmatpush1.msra.mxu0 %v165
    %1947 = vmatprep.subr.mxu0 0.0
    %1948 = vmatpush1.msra.mxu0 0.0
    %1949 = vmatprep.subr.mxu0 0.0
    %1950 = vmatpush1.msra.mxu0 0.0
    %1951 = vmatprep.subr.mxu0 0.0
    %1952 = vmatpush1.msra.mxu0 0.0
    %1953 = vmatprep.subr.mxu0 0.0
    %1954 = vmatpush1.msra.mxu0 0.0
    %1955 = vmatprep.subr.mxu0 0.0
    %1956 = vmatpush1.msra.mxu0 0.0
    %1957 = vmatprep.subr.mxu0 0.0
    %1958 = vmatpush1.msra.mxu0 0.0
    %1959 = vmatprep.subr.mxu0 0.0
    %1960 = vmatpush1.msra.mxu0 0.0
    %1961 = vmatprep.subr.mxu0 0.0
    %1962 = vmatpush1.msra.mxu0 0.0
    %1963 = vmatprep.subr.mxu0 0.0
    %1964 = vmatpush1.msra.mxu0 0.0
    %1965 = vmatprep.subr.mxu0 0.0
    %1966 = vmatpush1.msra.mxu0 0.0
    %1967 = vmatprep.subr.mxu0 0.0
    %1968 = vmatpush1.msra.mxu0 0.0
    %1969 = vmatprep.subr.mxu0 0.0
    %1970 = vmatpush1.msra.mxu0 0.0
    %1971 = vmatprep.subr.mxu0 0.0
    %1972 = vmatpush1.msra.mxu0 0.0
    %1973 = vmatprep.subr.mxu0 0.0
    %1974 = vmatpush1.msra.mxu0 0.0
    %1975 = vmatprep.subr.mxu0 0.0
    %1976 = vmatpush1.msra.mxu0 0.0
    %1977 = vmatprep.subr.mxu0 0.0
    %1978 = vmatpush1.msra.mxu0 0.0
    %1979 = vmatprep.mubr.f32.mxu0 0.0
    %1980 = vmatmul.mubr.f32.gmra.mrb[0].mxu0 %v1911
    %v1981 = vpop.f32.mrb[0].mxu0
    %v1982 = vadd.f32 0.0, %v1981
    %v1983 = vpop.f32.mrb[0].mxu0
    %1984 = vdwg.mxu0
    %s1985 = scalar_lea.vmem [#allocation12], 40
    %1986 = vst [vmem:[%s1985] sm:$0xff] %v1982
    %s1987 = sadd.f32 %s176, 6.0
    %s1988 = scalar_lea.vmem [#allocation3], 48
    %v1989 = vld [vmem:[%s1988] sm:$0xff]
    %1990 = vmatprep.subr.mxu0 0.0
    %1991 = vmatpush1.msra.mxu0 %v134
    %1992 = vmatprep.subr.mxu0 0.0
    %1993 = vmatpush1.msra.mxu0 %v135
    %1994 = vmatprep.subr.mxu0 0.0
    %1995 = vmatpush1.msra.mxu0 %v136
    %1996 = vmatprep.subr.mxu0 0.0
    %1997 = vmatpush1.msra.mxu0 %v137
    %1998 = vmatprep.subr.mxu0 0.0
    %1999 = vmatpush1.msra.mxu0 %v138
    %2000 = vmatprep.subr.mxu0 0.0
    %2001 = vmatpush1.msra.mxu0 %v139
    %2002 = vmatprep.subr.mxu0 0.0
    %2003 = vmatpush1.msra.mxu0 %v140
    %2004 = vmatprep.subr.mxu0 0.0
    %2005 = vmatpush1.msra.mxu0 %v141
    %2006 = vmatprep.subr.mxu0 0.0
    %2007 = vmatpush1.msra.mxu0 %v142
    %2008 = vmatprep.subr.mxu0 0.0
    %2009 = vmatpush1.msra.mxu0 %v143
    %2010 = vmatprep.subr.mxu0 0.0
    %2011 = vmatpush1.msra.mxu0 %v144
    %2012 = vmatprep.subr.mxu0 0.0
    %2013 = vmatpush1.msra.mxu0 %v145
    %2014 = vmatprep.subr.mxu0 0.0
    %2015 = vmatpush1.msra.mxu0 %v146
    %2016 = vmatprep.subr.mxu0 0.0
    %2017 = vmatpush1.msra.mxu0 %v147
    %2018 = vmatprep.subr.mxu0 0.0
    %2019 = vmatpush1.msra.mxu0 %v148
    %2020 = vmatprep.subr.mxu0 0.0
    %2021 = vmatpush1.msra.mxu0 %v149
    %2022 = vmatprep.subr.mxu0 0.0
    %2023 = vmatpush1.msra.mxu0 0.0
    %2024 = vmatprep.subr.mxu0 0.0
    %2025 = vmatpush1.msra.mxu0 0.0
    %2026 = vmatprep.subr.mxu0 0.0
    %2027 = vmatpush1.msra.mxu0 0.0
    %2028 = vmatprep.subr.mxu0 0.0
    %2029 = vmatpush1.msra.mxu0 0.0
    %2030 = vmatprep.subr.mxu0 0.0
    %2031 = vmatpush1.msra.mxu0 0.0
    %2032 = vmatprep.subr.mxu0 0.0
    %2033 = vmatpush1.msra.mxu0 0.0
    %2034 = vmatprep.subr.mxu0 0.0
    %2035 = vmatpush1.msra.mxu0 0.0
    %2036 = vmatprep.subr.mxu0 0.0
    %2037 = vmatpush1.msra.mxu0 0.0
    %2038 = vmatprep.subr.mxu0 0.0
    %2039 = vmatpush1.msra.mxu0 0.0
    %2040 = vmatprep.subr.mxu0 0.0
    %2041 = vmatpush1.msra.mxu0 0.0
    %2042 = vmatprep.subr.mxu0 0.0
    %2043 = vmatpush1.msra.mxu0 0.0
    %2044 = vmatprep.subr.mxu0 0.0
    %2045 = vmatpush1.msra.mxu0 0.0
    %2046 = vmatprep.subr.mxu0 0.0
    %2047 = vmatpush1.msra.mxu0 0.0
    %2048 = vmatprep.subr.mxu0 0.0
    %2049 = vmatpush1.msra.mxu0 0.0
    %2050 = vmatprep.subr.mxu0 0.0
    %2051 = vmatpush1.msra.mxu0 0.0
    %2052 = vmatprep.subr.mxu0 0.0
    %2053 = vmatpush1.msra.mxu0 0.0
    %2054 = vmatprep.mubr.f32.mxu0 0.0
    %2055 = vmatmul.mubr.f32.gmra.mrb[0].mxu0 %v1911
    %v2056 = vpop.f32.mrb[0].mxu0
    %v2057 = vadd.f32 0.0, %v2056
    %v2058 = vpop.f32.mrb[0].mxu0
    %2059 = vdwg.mxu0
    %2060 = vmatprep.subr.mxu0 0.0
    %2061 = vmatpush1.msra.mxu0 %v118
    %2062 = vmatprep.subr.mxu0 0.0
    %2063 = vmatpush1.msra.mxu0 %v119
    %2064 = vmatprep.subr.mxu0 0.0
    %2065 = vmatpush1.msra.mxu0 %v120
    %2066 = vmatprep.subr.mxu0 0.0
    %2067 = vmatpush1.msra.mxu0 %v121
    %2068 = vmatprep.subr.mxu0 0.0
    %2069 = vmatpush1.msra.mxu0 %v122
    %2070 = vmatprep.subr.mxu0 0.0
    %2071 = vmatpush1.msra.mxu0 %v123
    %2072 = vmatprep.subr.mxu0 0.0
    %2073 = vmatpush1.msra.mxu0 %v124
    %2074 = vmatprep.subr.mxu0 0.0
    %2075 = vmatpush1.msra.mxu0 %v125
    %2076 = vmatprep.subr.mxu0 0.0
    %2077 = vmatpush1.msra.mxu0 %v126
    %2078 = vmatprep.subr.mxu0 0.0
    %2079 = vmatpush1.msra.mxu0 %v127
    %2080 = vmatprep.subr.mxu0 0.0
    %2081 = vmatpush1.msra.mxu0 %v128
    %2082 = vmatprep.subr.mxu0 0.0
    %2083 = vmatpush1.msra.mxu0 %v129
    %2084 = vmatprep.subr.mxu0 0.0
    %2085 = vmatpush1.msra.mxu0 %v130
    %2086 = vmatprep.subr.mxu0 0.0
    %2087 = vmatpush1.msra.mxu0 %v131
    %2088 = vmatprep.subr.mxu0 0.0
    %2089 = vmatpush1.msra.mxu0 %v132
    %2090 = vmatprep.subr.mxu0 0.0
    %2091 = vmatpush1.msra.mxu0 %v133
    %2092 = vmatprep.subr.mxu0 0.0
    %2093 = vmatpush1.msra.mxu0 0.0
    %2094 = vmatprep.subr.mxu0 0.0
    %2095 = vmatpush1.msra.mxu0 0.0
    %2096 = vmatprep.subr.mxu0 0.0
    %2097 = vmatpush1.msra.mxu0 0.0
    %2098 = vmatprep.subr.mxu0 0.0
    %2099 = vmatpush1.msra.mxu0 0.0
    %2100 = vmatprep.subr.mxu0 0.0
    %2101 = vmatpush1.msra.mxu0 0.0
    %2102 = vmatprep.subr.mxu0 0.0
    %2103 = vmatpush1.msra.mxu0 0.0
    %2104 = vmatprep.subr.mxu0 0.0
    %2105 = vmatpush1.msra.mxu0 0.0
    %2106 = vmatprep.subr.mxu0 0.0
    %2107 = vmatpush1.msra.mxu0 0.0
    %2108 = vmatprep.subr.mxu0 0.0
    %2109 = vmatpush1.msra.mxu0 0.0
    %2110 = vmatprep.subr.mxu0 0.0
    %2111 = vmatpush1.msra.mxu0 0.0
    %2112 = vmatprep.subr.mxu0 0.0
    %2113 = vmatpush1.msra.mxu0 0.0
    %2114 = vmatprep.subr.mxu0 0.0
    %2115 = vmatpush1.msra.mxu0 0.0
    %2116 = vmatprep.subr.mxu0 0.0
    %2117 = vmatpush1.msra.mxu0 0.0
    %2118 = vmatprep.subr.mxu0 0.0
    %2119 = vmatpush1.msra.mxu0 0.0
    %2120 = vmatprep.subr.mxu0 0.0
    %2121 = vmatpush1.msra.mxu0 0.0
    %2122 = vmatprep.subr.mxu0 0.0
    %2123 = vmatpush1.msra.mxu0 0.0
    %2124 = vmatprep.mubr.f32.mxu0 0.0
    %2125 = vmatmul.mubr.f32.gmra.mrb[0].mxu0 %v2057
    %v2126 = vpop.f32.mrb[0].mxu0
    %v2127 = vadd.f32 0.0, %v2126
    %v2128 = vpop.f32.mrb[0].mxu0
    %2129 = vdwg.mxu0
    %2130 = vmatprep.subr.mxu0 0.0
    %2131 = vmatpush1.msra.mxu0 %v102
    %2132 = vmatprep.subr.mxu0 0.0
    %2133 = vmatpush1.msra.mxu0 %v103
    %2134 = vmatprep.subr.mxu0 0.0
    %2135 = vmatpush1.msra.mxu0 %v104
    %2136 = vmatprep.subr.mxu0 0.0
    %2137 = vmatpush1.msra.mxu0 %v105
    %2138 = vmatprep.subr.mxu0 0.0
    %2139 = vmatpush1.msra.mxu0 %v106
    %2140 = vmatprep.subr.mxu0 0.0
    %2141 = vmatpush1.msra.mxu0 %v107
    %2142 = vmatprep.subr.mxu0 0.0
    %2143 = vmatpush1.msra.mxu0 %v108
    %2144 = vmatprep.subr.mxu0 0.0
    %2145 = vmatpush1.msra.mxu0 %v109
    %2146 = vmatprep.subr.mxu0 0.0
    %2147 = vmatpush1.msra.mxu0 %v110
    %2148 = vmatprep.subr.mxu0 0.0
    %2149 = vmatpush1.msra.mxu0 %v111
    %2150 = vmatprep.subr.mxu0 0.0
    %2151 = vmatpush1.msra.mxu0 %v112
    %2152 = vmatprep.subr.mxu0 0.0
    %2153 = vmatpush1.msra.mxu0 %v113
    %2154 = vmatprep.subr.mxu0 0.0
    %2155 = vmatpush1.msra.mxu0 %v114
    %2156 = vmatprep.subr.mxu0 0.0
    %2157 = vmatpush1.msra.mxu0 %v115
    %2158 = vmatprep.subr.mxu0 0.0
    %2159 = vmatpush1.msra.mxu0 %v116
    %2160 = vmatprep.subr.mxu0 0.0
    %2161 = vmatpush1.msra.mxu0 %v117
    %2162 = vmatprep.subr.mxu0 0.0
    %2163 = vmatpush1.msra.mxu0 0.0
    %2164 = vmatprep.subr.mxu0 0.0
    %2165 = vmatpush1.msra.mxu0 0.0
    %2166 = vmatprep.subr.mxu0 0.0
    %2167 = vmatpush1.msra.mxu0 0.0
    %2168 = vmatprep.subr.mxu0 0.0
    %2169 = vmatpush1.msra.mxu0 0.0
    %2170 = vmatprep.subr.mxu0 0.0
    %2171 = vmatpush1.msra.mxu0 0.0
    %2172 = vmatprep.subr.mxu0 0.0
    %2173 = vmatpush1.msra.mxu0 0.0
    %2174 = vmatprep.subr.mxu0 0.0
    %2175 = vmatpush1.msra.mxu0 0.0
    %2176 = vmatprep.subr.mxu0 0.0
    %2177 = vmatpush1.msra.mxu0 0.0
    %2178 = vmatprep.subr.mxu0 0.0
    %2179 = vmatpush1.msra.mxu0 0.0
    %2180 = vmatprep.subr.mxu0 0.0
    %2181 = vmatpush1.msra.mxu0 0.0
    %2182 = vmatprep.subr.mxu0 0.0
    %2183 = vmatpush1.msra.mxu0 0.0
    %2184 = vmatprep.subr.mxu0 0.0
    %2185 = vmatpush1.msra.mxu0 0.0
    %2186 = vmatprep.subr.mxu0 0.0
    %2187 = vmatpush1.msra.mxu0 0.0
    %2188 = vmatprep.subr.mxu0 0.0
    %2189 = vmatpush1.msra.mxu0 0.0
    %2190 = vmatprep.subr.mxu0 0.0
    %2191 = vmatpush1.msra.mxu0 0.0
    %2192 = vmatprep.subr.mxu0 0.0
    %2193 = vmatpush1.msra.mxu0 0.0
    %2194 = vmatprep.mubr.f32.mxu0 0.0
    %2195 = vmatmul.mubr.f32.gmra.mrb[0].mxu0 %v1989
    %v2196 = vpop.f32.mrb[0].mxu0
    %v2197 = vadd.f32 %v2127, %v2196
    %v2198 = vpop.f32.mrb[0].mxu0
    %2199 = vdwg.mxu0
    %v2200 = vadd.f32 %v1914, 2.0
    %v2201 = vstv %s1987
    %vm2202 = vcmp.gt.f32.partialorder %v2201, %v2200
    %vm2203 = vcmp.eq.f32.partialorder %v1913, 0.0
    %vm2204 = vmand %vm2202, %vm2203
    %v2205 = vmul.f32 %v1906, 0.9048374
    %v2206 = vmul.f32 %v2197, 0.095162585
    %v2207 = vadd.f32 %v2205, %v2206
    %v2208 = vsel %vm2204, %v2207, 0.0
    %v2209 = vmul.f32 %v1908, 0.60653067
    %v2210 = vadd.f32 %v2209, %v1913
    %v2211 = vmul.f32 %v1911, 0.9672161
    %v2212 = vmul.f32 %v2210, 0.0327839
    %v2213 = vadd.f32 %v2211, %v2212
    %vm2214 = vcmp.gt.f32.partialorder %v2208, 0.2
    %v2215 = vsel %vm2214, 1.0, 0.0
    %v2216 = vsel %vm2214, %v2201, %v1914
    %2217 = vmatprep.subr.mxu0 0.0
    %2218 = vmatpush1.msra.mxu0 %v150
    %2219 = vmatprep.subr.mxu0 0.0
    %2220 = vmatpush1.msra.mxu0 %v151
    %2221 = vmatprep.subr.mxu0 0.0
    %2222 = vmatpush1.msra.mxu0 %v152
    %2223 = vmatprep.subr.mxu0 0.0
    %2224 = vmatpush1.msra.mxu0 %v153
    %2225 = vmatprep.subr.mxu0 0.0
    %2226 = vmatpush1.msra.mxu0 %v154
    %2227 = vmatprep.subr.mxu0 0.0
    %2228 = vmatpush1.msra.mxu0 %v155
    %2229 = vmatprep.subr.mxu0 0.0
    %2230 = vmatpush1.msra.mxu0 %v156
    %2231 = vmatprep.subr.mxu0 0.0
    %2232 = vmatpush1.msra.mxu0 %v157
    %2233 = vmatprep.subr.mxu0 0.0
    %2234 = vmatpush1.msra.mxu0 %v158
    %2235 = vmatprep.subr.mxu0 0.0
    %2236 = vmatpush1.msra.mxu0 %v159
    %2237 = vmatprep.subr.mxu0 0.0
    %2238 = vmatpush1.msra.mxu0 %v160
    %2239 = vmatprep.subr.mxu0 0.0
    %2240 = vmatpush1.msra.mxu0 %v161
    %2241 = vmatprep.subr.mxu0 0.0
    %2242 = vmatpush1.msra.mxu0 %v162
    %2243 = vmatprep.subr.mxu0 0.0
    %2244 = vmatpush1.msra.mxu0 %v163
    %2245 = vmatprep.subr.mxu0 0.0
    %2246 = vmatpush1.msra.mxu0 %v164
    %2247 = vmatprep.subr.mxu0 0.0
    %2248 = vmatpush1.msra.mxu0 %v165
    %2249 = vmatprep.subr.mxu0 0.0
    %2250 = vmatpush1.msra.mxu0 0.0
    %2251 = vmatprep.subr.mxu0 0.0
    %2252 = vmatpush1.msra.mxu0 0.0
    %2253 = vmatprep.subr.mxu0 0.0
    %2254 = vmatpush1.msra.mxu0 0.0
    %2255 = vmatprep.subr.mxu0 0.0
    %2256 = vmatpush1.msra.mxu0 0.0
    %2257 = vmatprep.subr.mxu0 0.0
    %2258 = vmatpush1.msra.mxu0 0.0
    %2259 = vmatprep.subr.mxu0 0.0
    %2260 = vmatpush1.msra.mxu0 0.0
    %2261 = vmatprep.subr.mxu0 0.0
    %2262 = vmatpush1.msra.mxu0 0.0
    %2263 = vmatprep.subr.mxu0 0.0
    %2264 = vmatpush1.msra.mxu0 0.0
    %2265 = vmatprep.subr.mxu0 0.0
    %2266 = vmatpush1.msra.mxu0 0.0
    %2267 = vmatprep.subr.mxu0 0.0
    %2268 = vmatpush1.msra.mxu0 0.0
    %2269 = vmatprep.subr.mxu0 0.0
    %2270 = vmatpush1.msra.mxu0 0.0
    %2271 = vmatprep.subr.mxu0 0.0
    %2272 = vmatpush1.msra.mxu0 0.0
    %2273 = vmatprep.subr.mxu0 0.0
    %2274 = vmatpush1.msra.mxu0 0.0
    %2275 = vmatprep.subr.mxu0 0.0
    %2276 = vmatpush1.msra.mxu0 0.0
    %2277 = vmatprep.subr.mxu0 0.0
    %2278 = vmatpush1.msra.mxu0 0.0
    %2279 = vmatprep.subr.mxu0 0.0
    %2280 = vmatpush1.msra.mxu0 0.0
    %2281 = vmatprep.mubr.f32.mxu0 0.0
    %2282 = vmatmul.mubr.f32.gmra.mrb[0].mxu0 %v2213
    %v2283 = vpop.f32.mrb[0].mxu0
    %v2284 = vadd.f32 0.0, %v2283
    %v2285 = vpop.f32.mrb[0].mxu0
    %2286 = vdwg.mxu0
    %s2287 = scalar_lea.vmem [#allocation12], 48
    %2288 = vst [vmem:[%s2287] sm:$0xff] %v2284
    %s2289 = sadd.f32 %s176, 7.0
    %s2290 = scalar_lea.vmem [#allocation3], 56
    %v2291 = vld [vmem:[%s2290] sm:$0xff]
    %2292 = vmatprep.subr.mxu0 0.0
    %2293 = vmatpush1.msra.mxu0 %v134
    %2294 = vmatprep.subr.mxu0 0.0
    %2295 = vmatpush1.msra.mxu0 %v135
    %2296 = vmatprep.subr.mxu0 0.0
    %2297 = vmatpush1.msra.mxu0 %v136
    %2298 = vmatprep.subr.mxu0 0.0
    %2299 = vmatpush1.msra.mxu0 %v137
    %2300 = vmatprep.subr.mxu0 0.0
    %2301 = vmatpush1.msra.mxu0 %v138
    %2302 = vmatprep.subr.mxu0 0.0
    %2303 = vmatpush1.msra.mxu0 %v139
    %2304 = vmatprep.subr.mxu0 0.0
    %2305 = vmatpush1.msra.mxu0 %v140
    %2306 = vmatprep.subr.mxu0 0.0
    %2307 = vmatpush1.msra.mxu0 %v141
    %2308 = vmatprep.subr.mxu0 0.0
    %2309 = vmatpush1.msra.mxu0 %v142
    %2310 = vmatprep.subr.mxu0 0.0
    %2311 = vmatpush1.msra.mxu0 %v143
    %2312 = vmatprep.subr.mxu0 0.0
    %2313 = vmatpush1.msra.mxu0 %v144
    %2314 = vmatprep.subr.mxu0 0.0
    %2315 = vmatpush1.msra.mxu0 %v145
    %2316 = vmatprep.subr.mxu0 0.0
    %2317 = vmatpush1.msra.mxu0 %v146
    %2318 = vmatprep.subr.mxu0 0.0
    %2319 = vmatpush1.msra.mxu0 %v147
    %2320 = vmatprep.subr.mxu0 0.0
    %2321 = vmatpush1.msra.mxu0 %v148
    %2322 = vmatprep.subr.mxu0 0.0
    %2323 = vmatpush1.msra.mxu0 %v149
    %2324 = vmatprep.subr.mxu0 0.0
    %2325 = vmatpush1.msra.mxu0 0.0
    %2326 = vmatprep.subr.mxu0 0.0
    %2327 = vmatpush1.msra.mxu0 0.0
    %2328 = vmatprep.subr.mxu0 0.0
    %2329 = vmatpush1.msra.mxu0 0.0
    %2330 = vmatprep.subr.mxu0 0.0
    %2331 = vmatpush1.msra.mxu0 0.0
    %2332 = vmatprep.subr.mxu0 0.0
    %2333 = vmatpush1.msra.mxu0 0.0
    %2334 = vmatprep.subr.mxu0 0.0
    %2335 = vmatpush1.msra.mxu0 0.0
    %2336 = vmatprep.subr.mxu0 0.0
    %2337 = vmatpush1.msra.mxu0 0.0
    %2338 = vmatprep.subr.mxu0 0.0
    %2339 = vmatpush1.msra.mxu0 0.0
    %2340 = vmatprep.subr.mxu0 0.0
    %2341 = vmatpush1.msra.mxu0 0.0
    %2342 = vmatprep.subr.mxu0 0.0
    %2343 = vmatpush1.msra.mxu0 0.0
    %2344 = vmatprep.subr.mxu0 0.0
    %2345 = vmatpush1.msra.mxu0 0.0
    %2346 = vmatprep.subr.mxu0 0.0
    %2347 = vmatpush1.msra.mxu0 0.0
    %2348 = vmatprep.subr.mxu0 0.0
    %2349 = vmatpush1.msra.mxu0 0.0
    %2350 = vmatprep.subr.mxu0 0.0
    %2351 = vmatpush1.msra.mxu0 0.0
    %2352 = vmatprep.subr.mxu0 0.0
    %2353 = vmatpush1.msra.mxu0 0.0
    %2354 = vmatprep.subr.mxu0 0.0
    %2355 = vmatpush1.msra.mxu0 0.0
    %2356 = vmatprep.mubr.f32.mxu0 0.0
    %2357 = vmatmul.mubr.f32.gmra.mrb[0].mxu0 %v2213
    %v2358 = vpop.f32.mrb[0].mxu0
    %v2359 = vadd.f32 0.0, %v2358
    %v2360 = vpop.f32.mrb[0].mxu0
    %2361 = vdwg.mxu0
    %2362 = vmatprep.subr.mxu0 0.0
    %2363 = vmatpush1.msra.mxu0 %v118
    %2364 = vmatprep.subr.mxu0 0.0
    %2365 = vmatpush1.msra.mxu0 %v119
    %2366 = vmatprep.subr.mxu0 0.0
    %2367 = vmatpush1.msra.mxu0 %v120
    %2368 = vmatprep.subr.mxu0 0.0
    %2369 = vmatpush1.msra.mxu0 %v121
    %2370 = vmatprep.subr.mxu0 0.0
    %2371 = vmatpush1.msra.mxu0 %v122
    %2372 = vmatprep.subr.mxu0 0.0
    %2373 = vmatpush1.msra.mxu0 %v123
    %2374 = vmatprep.subr.mxu0 0.0
    %2375 = vmatpush1.msra.mxu0 %v124
    %2376 = vmatprep.subr.mxu0 0.0
    %2377 = vmatpush1.msra.mxu0 %v125
    %2378 = vmatprep.subr.mxu0 0.0
    %2379 = vmatpush1.msra.mxu0 %v126
    %2380 = vmatprep.subr.mxu0 0.0
    %2381 = vmatpush1.msra.mxu0 %v127
    %2382 = vmatprep.subr.mxu0 0.0
    %2383 = vmatpush1.msra.mxu0 %v128
    %2384 = vmatprep.subr.mxu0 0.0
    %2385 = vmatpush1.msra.mxu0 %v129
    %2386 = vmatprep.subr.mxu0 0.0
    %2387 = vmatpush1.msra.mxu0 %v130
    %2388 = vmatprep.subr.mxu0 0.0
    %2389 = vmatpush1.msra.mxu0 %v131
    %2390 = vmatprep.subr.mxu0 0.0
    %2391 = vmatpush1.msra.mxu0 %v132
    %2392 = vmatprep.subr.mxu0 0.0
    %2393 = vmatpush1.msra.mxu0 %v133
    %2394 = vmatprep.subr.mxu0 0.0
    %2395 = vmatpush1.msra.mxu0 0.0
    %2396 = vmatprep.subr.mxu0 0.0
    %2397 = vmatpush1.msra.mxu0 0.0
    %2398 = vmatprep.subr.mxu0 0.0
    %2399 = vmatpush1.msra.mxu0 0.0
    %2400 = vmatprep.subr.mxu0 0.0
    %2401 = vmatpush1.msra.mxu0 0.0
    %2402 = vmatprep.subr.mxu0 0.0
    %2403 = vmatpush1.msra.mxu0 0.0
    %2404 = vmatprep.subr.mxu0 0.0
    %2405 = vmatpush1.msra.mxu0 0.0
    %2406 = vmatprep.subr.mxu0 0.0
    %2407 = vmatpush1.msra.mxu0 0.0
    %2408 = vmatprep.subr.mxu0 0.0
    %2409 = vmatpush1.msra.mxu0 0.0
    %2410 = vmatprep.subr.mxu0 0.0
    %2411 = vmatpush1.msra.mxu0 0.0
    %2412 = vmatprep.subr.mxu0 0.0
    %2413 = vmatpush1.msra.mxu0 0.0
    %2414 = vmatprep.subr.mxu0 0.0
    %2415 = vmatpush1.msra.mxu0 0.0
    %2416 = vmatprep.subr.mxu0 0.0
    %2417 = vmatpush1.msra.mxu0 0.0
    %2418 = vmatprep.subr.mxu0 0.0
    %2419 = vmatpush1.msra.mxu0 0.0
    %2420 = vmatprep.subr.mxu0 0.0
    %2421 = vmatpush1.msra.mxu0 0.0
    %2422 = vmatprep.subr.mxu0 0.0
    %2423 = vmatpush1.msra.mxu0 0.0
    %2424 = vmatprep.subr.mxu0 0.0
    %2425 = vmatpush1.msra.mxu0 0.0
    %2426 = vmatprep.mubr.f32.mxu0 0.0
    %2427 = vmatmul.mubr.f32.gmra.mrb[0].mxu0 %v2359
    %v2428 = vpop.f32.mrb[0].mxu0
    %v2429 = vadd.f32 0.0, %v2428
    %v2430 = vpop.f32.mrb[0].mxu0
    %2431 = vdwg.mxu0
    %2432 = vmatprep.subr.mxu0 0.0
    %2433 = vmatpush1.msra.mxu0 %v102
    %2434 = vmatprep.subr.mxu0 0.0
    %2435 = vmatpush1.msra.mxu0 %v103
    %2436 = vmatprep.subr.mxu0 0.0
    %2437 = vmatpush1.msra.mxu0 %v104
    %2438 = vmatprep.subr.mxu0 0.0
    %2439 = vmatpush1.msra.mxu0 %v105
    %2440 = vmatprep.subr.mxu0 0.0
    %2441 = vmatpush1.msra.mxu0 %v106
    %2442 = vmatprep.subr.mxu0 0.0
    %2443 = vmatpush1.msra.mxu0 %v107
    %2444 = vmatprep.subr.mxu0 0.0
    %2445 = vmatpush1.msra.mxu0 %v108
    %2446 = vmatprep.subr.mxu0 0.0
    %2447 = vmatpush1.msra.mxu0 %v109
    %2448 = vmatprep.subr.mxu0 0.0
    %2449 = vmatpush1.msra.mxu0 %v110
    %2450 = vmatprep.subr.mxu0 0.0
    %2451 = vmatpush1.msra.mxu0 %v111
    %2452 = vmatprep.subr.mxu0 0.0
    %2453 = vmatpush1.msra.mxu0 %v112
    %2454 = vmatprep.subr.mxu0 0.0
    %2455 = vmatpush1.msra.mxu0 %v113
    %2456 = vmatprep.subr.mxu0 0.0
    %2457 = vmatpush1.msra.mxu0 %v114
    %2458 = vmatprep.subr.mxu0 0.0
    %2459 = vmatpush1.msra.mxu0 %v115
    %2460 = vmatprep.subr.mxu0 0.0
    %2461 = vmatpush1.msra.mxu0 %v116
    %2462 = vmatprep.subr.mxu0 0.0
    %2463 = vmatpush1.msra.mxu0 %v117
    %2464 = vmatprep.subr.mxu0 0.0
    %2465 = vmatpush1.msra.mxu0 0.0
    %2466 = vmatprep.subr.mxu0 0.0
    %2467 = vmatpush1.msra.mxu0 0.0
    %2468 = vmatprep.subr.mxu0 0.0
    %2469 = vmatpush1.msra.mxu0 0.0
    %2470 = vmatprep.subr.mxu0 0.0
    %2471 = vmatpush1.msra.mxu0 0.0
    %2472 = vmatprep.subr.mxu0 0.0
    %2473 = vmatpush1.msra.mxu0 0.0
    %2474 = vmatprep.subr.mxu0 0.0
    %2475 = vmatpush1.msra.mxu0 0.0
    %2476 = vmatprep.subr.mxu0 0.0
    %2477 = vmatpush1.msra.mxu0 0.0
    %2478 = vmatprep.subr.mxu0 0.0
    %2479 = vmatpush1.msra.mxu0 0.0
    %2480 = vmatprep.subr.mxu0 0.0
    %2481 = vmatpush1.msra.mxu0 0.0
    %2482 = vmatprep.subr.mxu0 0.0
    %2483 = vmatpush1.msra.mxu0 0.0
    %2484 = vmatprep.subr.mxu0 0.0
    %2485 = vmatpush1.msra.mxu0 0.0
    %2486 = vmatprep.subr.mxu0 0.0
    %2487 = vmatpush1.msra.mxu0 0.0
    %2488 = vmatprep.subr.mxu0 0.0
    %2489 = vmatpush1.msra.mxu0 0.0
    %2490 = vmatprep.subr.mxu0 0.0
    %2491 = vmatpush1.msra.mxu0 0.0
    %2492 = vmatprep.subr.mxu0 0.0
    %2493 = vmatpush1.msra.mxu0 0.0
    %2494 = vmatprep.subr.mxu0 0.0
    %2495 = vmatpush1.msra.mxu0 0.0
    %2496 = vmatprep.mubr.f32.mxu0 0.0
    %2497 = vmatmul.mubr.f32.gmra.mrb[0].mxu0 %v2291
    %v2498 = vpop.f32.mrb[0].mxu0
    %v2499 = vadd.f32 %v2429, %v2498
    %v2500 = vpop.f32.mrb[0].mxu0
    %2501 = vdwg.mxu0
    %v2502 = vadd.f32 %v2216, 2.0
    %v2503 = vstv %s2289
    %vm2504 = vcmp.gt.f32.partialorder %v2503, %v2502
    %vm2505 = vcmp.eq.f32.partialorder %v2215, 0.0
    %vm2506 = vmand %vm2504, %vm2505
    %v2507 = vmul.f32 %v2208, 0.9048374
    %v2508 = vmul.f32 %v2499, 0.095162585
    %v2509 = vadd.f32 %v2507, %v2508
    %v2510 = vsel %vm2506, %v2509, 0.0
    %v2511 = vmul.f32 %v2210, 0.60653067
    %v2512 = vadd.f32 %v2511, %v2215
    %v2513 = vmul.f32 %v2213, 0.9672161
    %v2514 = vmul.f32 %v2512, 0.0327839
    %v2515 = vadd.f32 %v2513, %v2514
    %vm2516 = vcmp.gt.f32.partialorder %v2510, 0.2
    %v2517 = vsel %vm2516, 1.0, 0.0
    %v2518 = vsel %vm2516, %v2503, %v2216
    %2519 = vmatprep.subr.mxu0 0.0
    %2520 = vmatpush1.msra.mxu0 %v150
    %2521 = vmatprep.subr.mxu0 0.0
    %2522 = vmatpush1.msra.mxu0 %v151
    %2523 = vmatprep.subr.mxu0 0.0
    %2524 = vmatpush1.msra.mxu0 %v152
    %2525 = vmatprep.subr.mxu0 0.0
    %2526 = vmatpush1.msra.mxu0 %v153
    %2527 = vmatprep.subr.mxu0 0.0
    %2528 = vmatpush1.msra.mxu0 %v154
    %2529 = vmatprep.subr.mxu0 0.0
    %2530 = vmatpush1.msra.mxu0 %v155
    %2531 = vmatprep.subr.mxu0 0.0
    %2532 = vmatpush1.msra.mxu0 %v156
    %2533 = vmatprep.subr.mxu0 0.0
    %2534 = vmatpush1.msra.mxu0 %v157
    %2535 = vmatprep.subr.mxu0 0.0
    %2536 = vmatpush1.msra.mxu0 %v158
    %2537 = vmatprep.subr.mxu0 0.0
    %2538 = vmatpush1.msra.mxu0 %v159
    %2539 = vmatprep.subr.mxu0 0.0
    %2540 = vmatpush1.msra.mxu0 %v160
    %2541 = vmatprep.subr.mxu0 0.0
    %2542 = vmatpush1.msra.mxu0 %v161
    %2543 = vmatprep.subr.mxu0 0.0
    %2544 = vmatpush1.msra.mxu0 %v162
    %2545 = vmatprep.subr.mxu0 0.0
    %2546 = vmatpush1.msra.mxu0 %v163
    %2547 = vmatprep.subr.mxu0 0.0
    %2548 = vmatpush1.msra.mxu0 %v164
    %2549 = vmatprep.subr.mxu0 0.0
    %2550 = vmatpush1.msra.mxu0 %v165
    %2551 = vmatprep.subr.mxu0 0.0
    %2552 = vmatpush1.msra.mxu0 0.0
    %2553 = vmatprep.subr.mxu0 0.0
    %2554 = vmatpush1.msra.mxu0 0.0
    %2555 = vmatprep.subr.mxu0 0.0
    %2556 = vmatpush1.msra.mxu0 0.0
    %2557 = vmatprep.subr.mxu0 0.0
    %2558 = vmatpush1.msra.mxu0 0.0
    %2559 = vmatprep.subr.mxu0 0.0
    %2560 = vmatpush1.msra.mxu0 0.0
    %2561 = vmatprep.subr.mxu0 0.0
    %2562 = vmatpush1.msra.mxu0 0.0
    %2563 = vmatprep.subr.mxu0 0.0
    %2564 = vmatpush1.msra.mxu0 0.0
    %2565 = vmatprep.subr.mxu0 0.0
    %2566 = vmatpush1.msra.mxu0 0.0
    %2567 = vmatprep.subr.mxu0 0.0
    %2568 = vmatpush1.msra.mxu0 0.0
    %2569 = vmatprep.subr.mxu0 0.0
    %2570 = vmatpush1.msra.mxu0 0.0
    %2571 = vmatprep.subr.mxu0 0.0
    %2572 = vmatpush1.msra.mxu0 0.0
    %2573 = vmatprep.subr.mxu0 0.0
    %2574 = vmatpush1.msra.mxu0 0.0
    %2575 = vmatprep.subr.mxu0 0.0
    %2576 = vmatpush1.msra.mxu0 0.0
    %2577 = vmatprep.subr.mxu0 0.0
    %2578 = vmatpush1.msra.mxu0 0.0
    %2579 = vmatprep.subr.mxu0 0.0
    %2580 = vmatpush1.msra.mxu0 0.0
    %2581 = vmatprep.subr.mxu0 0.0
    %2582 = vmatpush1.msra.mxu0 0.0
    %2583 = vmatprep.mubr.f32.mxu0 0.0
    %2584 = vmatmul.mubr.f32.gmra.mrb[0].mxu0 %v2515
    %v2585 = vpop.f32.mrb[0].mxu0
    %v2586 = vadd.f32 0.0, %v2585
    %v2587 = vpop.f32.mrb[0].mxu0
    %2588 = vdwg.mxu0
    %s2589 = scalar_lea.vmem [#allocation12], 56
    %2590 = vst [vmem:[%s2589] sm:$0xff] %v2586
    %2591 = vst [vmem:[#allocation2] sm:$0xff] %v2510
    %2592 = vst [vmem:[%s167] sm:$0xff] %v2517
    %2593 = vst [vmem:[%s169] sm:$0xff] %v2515
    %2594 = vst [vmem:[%s171] sm:$0xff] %v2512
    %2595 = vst [vmem:[%s173] sm:$0xff] %v2518
    // Predicated region
    $region46: #{tpu_custom_call.1} parent=1 // pred_check
      _
    $region47: #{tpu_custom_call.1} parent=1 // pred_check_branch
      %2597 = sbr.rel (0) target = $region49
    $region48: #{tpu_custom_call.1} parent=1 // pred_region
      %s2599 = ssub.s32 1024, 1024
      %2600 = vsyncadd [#allocation5], %s2599
      %s2601 = sshll.u32 [#allocation12], 4
      %s2602 = int_to_ptr.vmem [resolvable:$true] %s2601
      %2607 = dma.vmem_to_hbm [thread:$0]  %s2602, 1024, %s5, [#allocation5], 128, 128, 8
    $region49: #{tpu_custom_call.1} parent=1 // pred_fallthru
      _
    // Predicated region
    $region50: #{tpu_custom_call.1} parent=1 // pred_check
      _
    $region51: #{tpu_custom_call.1} parent=1 // pred_check_branch
      %2609 = sbr.rel (0) target = $region53
    $region52: #{tpu_custom_call.1} parent=1 // pred_region
      %2610 = dma.done [#allocation5], 1024
    $region53: #{tpu_custom_call.1} parent=1 // pred_fallthru
      _
    %2611 = vsyncpa [#allocation4], 1
    %2612 = vsyncpa [#allocation7], 1
    %2613 = vsyncpa [#allocation10], 1
    %2614 = vsyncpa [#allocation5], 1

</llo_original>
